<compile_context>
chip_gen: v7x
topology: tpu7x:2x2x1
jax: 0.10.0
libtpu: 0.0.40
codegen_flags: <defaults>
</compile_context>

<pallas_src>
import numpy as np
import jax
import jax.numpy as jnp
from jax.experimental import pallas as pl
from jax.experimental.pallas import tpu as pltpu


# ------------------------------ Pallas kernel ------------------------------

def _iou_fit_kernel(x_ref,
                    w1, b1, wa1, ba1, wc1, bc1,
                    c2, wa2, ba2, wc2, bc2,
                    c3, wa3, ba3, wc3, bc3,
                    c4t, c5t, c6t, w7t, sb,
                    o_ref):
    bf16 = jnp.bfloat16

    def layer(a_bf16, w_ref, bias):
        # bf16 operands, f32 MXU accumulation; bias + ReLU in f32; the value fed
        # to the next layer is stored as bf16 (halves spill/VMEM traffic).
        acc = jnp.dot(a_bf16, w_ref[...], preferred_element_type=jnp.float32)
        return jnp.maximum(acc + bias, 0.0).astype(bf16)

    h = x_ref[...].astype(bf16)                 # (tb, F)
    h = layer(h, w1, b1[...])                   # conv1 (1x1)        (tb, 512)
    h = layer(h, wa1, ba1[...])                 # bottle1.conv1      (tb, 128)
    h = layer(h, wc1, bc1[...])                 # bottle1.conv3      (tb, 512)
    h = layer(h, c2, sb[0])                     # conv2 k5 s2 p2     (tb, 256)
    h = layer(h, wa2, ba2[...])                 # bottle2.conv1      (tb, 64)
    h = layer(h, wc2, bc2[...])                 # bottle2.conv3      (tb, 256)
    h = layer(h, c3, sb[1])                     # conv3 k5 s2 p2     (tb, 128)
    h = layer(h, wa3, ba3[...])                 # bottle3.conv1      (tb, 32)
    h = layer(h, wc3, bc3[...])                 # bottle3.conv3      (tb, 128)

    # Tail in transposed layout: batch rows move to lanes so the final result is
    # a lane-dense (1, tb) row (no 128x output write amplification) and the tail
    # weights stay at their true (unpadded) sizes.
    # conv4: contract c4t (64,128) with h (tb,128) over the 128-feature axis.
    g = jax.lax.dot_general(c4t[...], h, (((1,), (1,)), ((), ())),
                            preferred_element_type=jnp.float32)      # (64, tb)
    g = jnp.maximum(g + sb[2], 0.0).astype(bf16)
    g = jnp.maximum(jnp.dot(c5t[...], g, preferred_element_type=jnp.float32)
                    + sb[3], 0.0).astype(bf16)                       # (32, tb)
    g = jnp.maximum(jnp.dot(c6t[...], g, preferred_element_type=jnp.float32)
                    + sb[4], 0.0).astype(bf16)                       # (16, tb)
    o_ref[...] = (jnp.dot(w7t[...], g, preferred_element_type=jnp.float32)
                  + sb[5])                                           # (1, tb)


_KERNEL_PARAM_ORDER = ["w1", "b1", "wa1", "ba1", "wc1", "bc1",
                       "c2", "wa2", "ba2", "wc2", "bc2",
                       "c3", "wa3", "ba3", "wc3", "bc3",
                       "c4t", "c5t", "c6t", "w7t"]

_MM_KEYS = ("w1", "wa1", "wc1", "c2", "wa2", "wc2", "c3", "wa3", "wc3",
            "c4t", "c5t", "c6t", "w7t")


def _pick_tb(n):
    """Biggest tile that still gives >=4 grid steps (2 steps/TC on v7x)."""
    for tb in (512, 256, 128):
        if pl.cdiv(n, tb) >= 4:
            return tb
    return 128


def iou_fit_forward(pred, gt, kparams, *, tb=None):
    """pred, gt: (N, D) each. Returns (N, 1) float32 matching torch forward."""
    x = jnp.concatenate([pred, gt], axis=-1).astype(jnp.float32)  # cat (+ implicit L=1)
    n, f = x.shape
    if tb is None:
        tb = _pick_tb(n)
    assert tb % 128 == 0
    n_pad = pl.cdiv(n, tb) * tb
    if n_pad != n:
        x = jnp.pad(x, ((0, n_pad - n), (0, 0)))

    weights = [kparams[k] for k in _KERNEL_PARAM_ORDER]
    sb = kparams["sb"]                                            # (8,) f32 scalar biases

    def rep_spec(a):
        # full-array weight block, same block for every grid step (no re-DMA)
        return pl.BlockSpec(a.shape, lambda i: (0,) * a.ndim)

    in_specs = ([pl.BlockSpec((tb, f), lambda i: (i, 0))]
                + [rep_spec(a) for a in weights]
                + [pl.BlockSpec(memory_space=pltpu.MemorySpace.SMEM)])
    # Lane-dense compact output: one (1, tb) f32 row per grid step.
    out_spec = pl.BlockSpec((1, tb), lambda i: (0, i))

    macs = sum(int(kparams[k].shape[0]) * int(kparams[k].shape[1]) for k in _MM_KEYS)
    param_bytes = sum(int(kparams[k].size) * kparams[k].dtype.itemsize
                      for k in _KERNEL_PARAM_ORDER) + int(sb.size) * 4
    cost = pl.CostEstimate(flops=2 * n_pad * macs, transcendentals=0,
                           bytes_accessed=param_bytes + n_pad * (f * 4 + 4))

    out = pl.pallas_call(
        _iou_fit_kernel,
        out_shape=jax.ShapeDtypeStruct((1, n_pad), jnp.float32),
        grid=(n_pad // tb,),
        in_specs=in_specs,
        out_specs=out_spec,
        compiler_params=pltpu.CompilerParams(dimension_semantics=("parallel",)),
        cost_estimate=cost,
    )(x, *weights, sb)

    return out[0, :n][:, None]


# ---------------- parameter construction (plain-JAX glue) ----------------

def _uniform(key, shape, fan_in):
    k = 1.0 / np.sqrt(fan_in)
    return jax.random.uniform(key, shape, jnp.float32, minval=-k, maxval=k)


def _conv5s2_matrix(taps, length):
    """Dense (length, length//2) matrix equivalent to Conv1d(1,1,k=5,s=2,p=2)."""
    taps = np.asarray(taps, dtype=np.float32)
    l_out = (length + 2 * 2 - 5) // 2 + 1
    mat = np.zeros((length, l_out), dtype=np.float32)
    for j in range(l_out):
        for t in range(5):
            idx = 2 * j + t - 2
            if 0 <= idx < length:
                mat[idx, j] = taps[t]
    return jnp.asarray(mat)


def init_params(in_features, key):
    """Logical (unpadded, f32) parameters mirroring the torch module."""
    keys = iter(jax.random.split(key, 40))
    u = lambda shape, fan_in: _uniform(next(keys), shape, fan_in)
    p = {}
    p["w1"], p["b1"] = u((in_features, 512), in_features), u((512,), in_features)
    p["wa1"], p["ba1"] = u((512, 128), 512), u((128,), 512)
    p["wc1"], p["bc1"] = u((128, 512), 128), u((512,), 128)
    p["taps2"], p["b2"] = u((5,), 5), u((), 5)
    p["taps3"], p["b3"] = u((5,), 5), u((), 5)
    p["taps4"], p["b4"] = u((5,), 5), u((), 5)
    p["taps5"], p["b5"] = u((5,), 5), u((), 5)
    p["taps6"], p["b6"] = u((5,), 5), u((), 5)
    p["wa2"], p["ba2"] = u((256, 64), 256), u((64,), 256)
    p["wc2"], p["bc2"] = u((64, 256), 64), u((256,), 64)
    p["wa3"], p["ba3"] = u((128, 32), 128), u((32,), 128)
    p["wc3"], p["bc3"] = u((32, 128), 32), u((128,), 32)
    p["w7"], p["b7"] = u((16, 1), 16), u((), 16)
    return p


def prepare_kernel_params(p):
    """Kernel-side params: conv-as-matrix fold, bf16 weights, transposed tail.

    No zero-padding anywhere anymore: bottleneck mid layers run at their true
    64/32 widths, and the tail (conv4..conv7) weights are stored transposed for
    the lane-dense (batch-in-lanes) tail layout.
    """
    bf16 = jnp.bfloat16
    kp = {}
    kp["w1"] = p["w1"].astype(bf16)                                   # (F, 512)
    kp["b1"] = p["b1"].reshape(1, -1)                                 # (1, 512) f32
    kp["wa1"] = p["wa1"].astype(bf16)                                 # (512, 128)
    kp["ba1"] = p["ba1"].reshape(1, -1)
    kp["wc1"] = p["wc1"].astype(bf16)                                 # (128, 512)
    kp["bc1"] = p["bc1"].reshape(1, -1)
    kp["c2"] = _conv5s2_matrix(p["taps2"], 512).astype(bf16)          # (512, 256)
    kp["wa2"] = p["wa2"].astype(bf16)                                 # (256, 64)
    kp["ba2"] = p["ba2"].reshape(1, -1)                               # (1, 64)
    kp["wc2"] = p["wc2"].astype(bf16)                                 # (64, 256)
    kp["bc2"] = p["bc2"].reshape(1, -1)                               # (1, 256)
    kp["c3"] = _conv5s2_matrix(p["taps3"], 256).astype(bf16)          # (256, 128)
    kp["wa3"] = p["wa3"].astype(bf16)                                 # (128, 32)
    kp["ba3"] = p["ba3"].reshape(1, -1)                               # (1, 32)
    kp["wc3"] = p["wc3"].astype(bf16)                                 # (32, 128)
    kp["bc3"] = p["bc3"].reshape(1, -1)                               # (1, 128)
    # transposed tail weights (batch-in-lanes layout from conv4 onward)
    kp["c4t"] = _conv5s2_matrix(p["taps4"], 128).T.astype(bf16)       # (64, 128)
    kp["c5t"] = _conv5s2_matrix(p["taps5"], 64).T.astype(bf16)        # (32, 64)
    kp["c6t"] = _conv5s2_matrix(p["taps6"], 32).T.astype(bf16)        # (16, 32)
    kp["w7t"] = p["w7"].T.astype(bf16)                                # (1, 16)
    kp["sb"] = jnp.stack([p["b2"], p["b3"], p["b4"], p["b5"], p["b6"], p["b7"],
                          jnp.float32(0.0), jnp.float32(0.0)]).astype(jnp.float32)  # (8,) SMEM
    return kp


# ---------------- pure-JAX reference for verification ----------------

def ref_forward(pred, gt, p, *, matmul_dtype=jnp.float32):
    x = jnp.concatenate([pred, gt], axis=-1).astype(jnp.float32)
    relu = lambda v: jnp.maximum(v, 0.0)

    def mm(a, w):
        return jnp.dot(a.astype(matmul_dtype), w.astype(matmul_dtype),
                       preferred_element_type=jnp.float32)

    c2 = _conv5s2_matrix(p["taps2"], 512)
    c3 = _conv5s2_matrix(p["taps3"], 256)
    c4 = _conv5s2_matrix(p["taps4"], 128)
    c5 = _conv5s2_matrix(p["taps5"], 64)
    c6 = _conv5s2_matrix(p["taps6"], 32)

    h = relu(mm(x, p["w1"]) + p["b1"])
    h = relu(mm(h, p["wa1"]) + p["ba1"])
    h = relu(mm(h, p["wc1"]) + p["bc1"])
    h = relu(mm(h, c2) + p["b2"])
    h = relu(mm(h, p["wa2"]) + p["ba2"])
    h = relu(mm(h, p["wc2"]) + p["bc2"])
    h = relu(mm(h, c3) + p["b3"])
    h = relu(mm(h, p["wa3"]) + p["ba3"])
    h = relu(mm(h, p["wc3"]) + p["bc3"])
    h = relu(mm(h, c4) + p["b4"])
    h = relu(mm(h, c5) + p["b5"])
    h = relu(mm(h, c6) + p["b6"])
    return mm(h, p["w7"]) + p["b7"]


if __name__ == "__main__":
    key = jax.random.PRNGKey(0)
    k_pred, k_gt, k_w = jax.random.split(key, 3)

    n, box_dim = 500, 5                  # pred/gt: (N, 5) rotated boxes
    in_features = 2 * box_dim            # cat([pred, gt], dim=-1) -> 10 features

    pred = jax.random.normal(k_pred, (n, box_dim), jnp.float32)
    gt = jax.random.normal(k_gt, (n, box_dim), jnp.float32)

    params = init_params(in_features, k_w)
    kparams = prepare_kernel_params(params)

    out = iou_fit_forward(pred, gt, kparams)   # tb auto -> 128 here (grid=4)
    out = jax.block_until_ready(out)
    assert out.shape == (n, 1) and out.dtype == jnp.float32

    # bf16-matmul-matching reference (tight check of kernel math).
    ref_bf16 = ref_forward(pred, gt, params, matmul_dtype=jnp.bfloat16)
    np.testing.assert_allclose(np.asarray(out), np.asarray(ref_bf16), rtol=1e-2, atol=1e-2)

    # f32 reference (loose check: bf16 operand rounding vs full-precision torch math).
    ref_f32 = ref_forward(pred, gt, params, matmul_dtype=jnp.float32)
    np.testing.assert_allclose(np.asarray(out), np.asarray(ref_f32), rtol=5e-2, atol=5e-2)

    # TODO(synk): IOUfitModule.loss() (obb_overlaps rotated-IoU + sqrt(MSE)) is not
    # part of forward() and depends on an external rotated-IoU op; not implemented.
    print("KERNEL_OK")
</pallas_src>

<mosaic_0001>
module attributes {stable_mosaic.version = 11 : i64} {
  func.func @_iou_fit_kernel(%arg0: i32, %arg1: memref<128x10xf32, #tpu.memory_space<vmem>>, %arg2: memref<10x512xbf16, #tpu.memory_space<vmem>>, %arg3: memref<1x512xf32, #tpu.memory_space<vmem>>, %arg4: memref<512x128xbf16, #tpu.memory_space<vmem>>, %arg5: memref<1x128xf32, #tpu.memory_space<vmem>>, %arg6: memref<128x512xbf16, #tpu.memory_space<vmem>>, %arg7: memref<1x512xf32, #tpu.memory_space<vmem>>, %arg8: memref<512x256xbf16, #tpu.memory_space<vmem>>, %arg9: memref<256x64xbf16, #tpu.memory_space<vmem>>, %arg10: memref<1x64xf32, #tpu.memory_space<vmem>>, %arg11: memref<64x256xbf16, #tpu.memory_space<vmem>>, %arg12: memref<1x256xf32, #tpu.memory_space<vmem>>, %arg13: memref<256x128xbf16, #tpu.memory_space<vmem>>, %arg14: memref<128x32xbf16, #tpu.memory_space<vmem>>, %arg15: memref<1x32xf32, #tpu.memory_space<vmem>>, %arg16: memref<32x128xbf16, #tpu.memory_space<vmem>>, %arg17: memref<1x128xf32, #tpu.memory_space<vmem>>, %arg18: memref<64x128xbf16, #tpu.memory_space<vmem>>, %arg19: memref<32x64xbf16, #tpu.memory_space<vmem>>, %arg20: memref<16x32xbf16, #tpu.memory_space<vmem>>, %arg21: memref<1x16xbf16, #tpu.memory_space<vmem>>, %arg22: memref<8xf32, #tpu.memory_space<smem>>, %arg23: memref<1x128xf32, #tpu.memory_space<vmem>>) attributes {dimension_semantics = [#tpu.dimension_semantics<parallel>], iteration_bounds = array<i64: 4>, scalar_prefetch = 0 : i64, scratch_operands = 0 : i64, tpu.core_type = #tpu.core_type<tc>, window_params = [{transform_indices = @transform_0, window_bounds = array<i64: 128, 10>}, {pipeline_mode = #tpu.pipeline_mode<synchronous>, transform_indices = @transform_1, window_bounds = array<i64: 10, 512>}, {pipeline_mode = #tpu.pipeline_mode<synchronous>, transform_indices = @transform_2, window_bounds = array<i64: 1, 512>}, {pipeline_mode = #tpu.pipeline_mode<synchronous>, transform_indices = @transform_3, window_bounds = array<i64: 512, 128>}, {pipeline_mode = #tpu.pipeline_mode<synchronous>, transform_indices = @transform_4, window_bounds = array<i64: 1, 128>}, {pipeline_mode = #tpu.pipeline_mode<synchronous>, transform_indices = @transform_5, window_bounds = array<i64: 128, 512>}, {pipeline_mode = #tpu.pipeline_mode<synchronous>, transform_indices = @transform_6, window_bounds = array<i64: 1, 512>}, {pipeline_mode = #tpu.pipeline_mode<synchronous>, transform_indices = @transform_7, window_bounds = array<i64: 512, 256>}, {pipeline_mode = #tpu.pipeline_mode<synchronous>, transform_indices = @transform_8, window_bounds = array<i64: 256, 64>}, {pipeline_mode = #tpu.pipeline_mode<synchronous>, transform_indices = @transform_9, window_bounds = array<i64: 1, 64>}, {pipeline_mode = #tpu.pipeline_mode<synchronous>, transform_indices = @transform_10, window_bounds = array<i64: 64, 256>}, {pipeline_mode = #tpu.pipeline_mode<synchronous>, transform_indices = @transform_11, window_bounds = array<i64: 1, 256>}, {pipeline_mode = #tpu.pipeline_mode<synchronous>, transform_indices = @transform_12, window_bounds = array<i64: 256, 128>}, {pipeline_mode = #tpu.pipeline_mode<synchronous>, transform_indices = @transform_13, window_bounds = array<i64: 128, 32>}, {pipeline_mode = #tpu.pipeline_mode<synchronous>, transform_indices = @transform_14, window_bounds = array<i64: 1, 32>}, {pipeline_mode = #tpu.pipeline_mode<synchronous>, transform_indices = @transform_15, window_bounds = array<i64: 32, 128>}, {pipeline_mode = #tpu.pipeline_mode<synchronous>, transform_indices = @transform_16, window_bounds = array<i64: 1, 128>}, {pipeline_mode = #tpu.pipeline_mode<synchronous>, transform_indices = @transform_17, window_bounds = array<i64: 64, 128>}, {pipeline_mode = #tpu.pipeline_mode<synchronous>, transform_indices = @transform_18, window_bounds = array<i64: 32, 64>}, {pipeline_mode = #tpu.pipeline_mode<synchronous>, transform_indices = @transform_19, window_bounds = array<i64: 16, 32>}, {pipeline_mode = #tpu.pipeline_mode<synchronous>, transform_indices = @transform_20, window_bounds = array<i64: 1, 16>}, {transform_indices = @transform_21, window_bounds = array<i64: 8>}, {transform_indices = @transform_22, window_bounds = array<i64: 1, 128>}]} {
    %c0 = arith.constant 0 : index
    %c0_0 = arith.constant 0 : index
    %0 = vector.load %arg1[%c0, %c0_0] : memref<128x10xf32, #tpu.memory_space<vmem>>, vector<128x10xf32>
    %1 = arith.truncf %0 : vector<128x10xf32> to vector<128x10xbf16>
    %c0_1 = arith.constant 0 : index
    %c0_2 = arith.constant 0 : index
    %2 = vector.load %arg3[%c0_1, %c0_2] : memref<1x512xf32, #tpu.memory_space<vmem>>, vector<1x512xf32>
    %c0_3 = arith.constant 0 : index
    %c0_4 = arith.constant 0 : index
    %3 = vector.load %arg2[%c0_3, %c0_4] : memref<10x512xbf16, #tpu.memory_space<vmem>>, vector<10x512xbf16>
    %cst = arith.constant dense<0.000000e+00> : vector<128x512xf32>
    %4 = tpu.matmul %1, %3, %cst {dimension_numbers = #tpu.dot_dimension_numbers<[1], [0], [0], [1], [0, 0, 1, 1], [], []>} : vector<128x10xbf16>, vector<10x512xbf16>, vector<128x512xf32> -> vector<128x512xf32>
    %5 = vector.broadcast %2 : vector<1x512xf32> to vector<128x512xf32>
    %6 = arith.addf %4, %5 : vector<128x512xf32>
    %cst_5 = arith.constant 0.000000e+00 : f32
    %7 = vector.broadcast %cst_5 : f32 to vector<128x512xf32>
    %8 = arith.maximumf %6, %7 : vector<128x512xf32>
    %9 = arith.truncf %8 : vector<128x512xf32> to vector<128x512xbf16>
    %c0_6 = arith.constant 0 : index
    %c0_7 = arith.constant 0 : index
    %10 = vector.load %arg5[%c0_6, %c0_7] : memref<1x128xf32, #tpu.memory_space<vmem>>, vector<1x128xf32>
    %c0_8 = arith.constant 0 : index
    %c0_9 = arith.constant 0 : index
    %11 = vector.load %arg4[%c0_8, %c0_9] : memref<512x128xbf16, #tpu.memory_space<vmem>>, vector<512x128xbf16>
    %cst_10 = arith.constant dense<0.000000e+00> : vector<128x128xf32>
    %12 = tpu.matmul %9, %11, %cst_10 {dimension_numbers = #tpu.dot_dimension_numbers<[1], [0], [0], [1], [0, 0, 1, 1], [], []>} : vector<128x512xbf16>, vector<512x128xbf16>, vector<128x128xf32> -> vector<128x128xf32>
    %13 = vector.broadcast %10 : vector<1x128xf32> to vector<128x128xf32>
    %14 = arith.addf %12, %13 : vector<128x128xf32>
    %cst_11 = arith.constant 0.000000e+00 : f32
    %15 = vector.broadcast %cst_11 : f32 to vector<128x128xf32>
    %16 = arith.maximumf %14, %15 : vector<128x128xf32>
    %17 = arith.truncf %16 : vector<128x128xf32> to vector<128x128xbf16>
    %c0_12 = arith.constant 0 : index
    %c0_13 = arith.constant 0 : index
    %18 = vector.load %arg7[%c0_12, %c0_13] : memref<1x512xf32, #tpu.memory_space<vmem>>, vector<1x512xf32>
    %c0_14 = arith.constant 0 : index
    %c0_15 = arith.constant 0 : index
    %19 = vector.load %arg6[%c0_14, %c0_15] : memref<128x512xbf16, #tpu.memory_space<vmem>>, vector<128x512xbf16>
    %cst_16 = arith.constant dense<0.000000e+00> : vector<128x512xf32>
    %20 = tpu.matmul %17, %19, %cst_16 {dimension_numbers = #tpu.dot_dimension_numbers<[1], [0], [0], [1], [0, 0, 1, 1], [], []>} : vector<128x128xbf16>, vector<128x512xbf16>, vector<128x512xf32> -> vector<128x512xf32>
    %21 = vector.broadcast %18 : vector<1x512xf32> to vector<128x512xf32>
    %22 = arith.addf %20, %21 : vector<128x512xf32>
    %cst_17 = arith.constant 0.000000e+00 : f32
    %23 = vector.broadcast %cst_17 : f32 to vector<128x512xf32>
    %24 = arith.maximumf %22, %23 : vector<128x512xf32>
    %25 = arith.truncf %24 : vector<128x512xf32> to vector<128x512xbf16>
    %c0_18 = arith.constant 0 : index
    %26 = memref.load %arg22[%c0_18] : memref<8xf32, #tpu.memory_space<smem>>
    %c0_19 = arith.constant 0 : index
    %c0_20 = arith.constant 0 : index
    %27 = vector.load %arg8[%c0_19, %c0_20] : memref<512x256xbf16, #tpu.memory_space<vmem>>, vector<512x256xbf16>
    %cst_21 = arith.constant dense<0.000000e+00> : vector<128x256xf32>
    %28 = tpu.matmul %25, %27, %cst_21 {dimension_numbers = #tpu.dot_dimension_numbers<[1], [0], [0], [1], [0, 0, 1, 1], [], []>} : vector<128x512xbf16>, vector<512x256xbf16>, vector<128x256xf32> -> vector<128x256xf32>
    %29 = vector.broadcast %26 : f32 to vector<128x256xf32>
    %30 = arith.addf %28, %29 : vector<128x256xf32>
    %cst_22 = arith.constant 0.000000e+00 : f32
    %31 = vector.broadcast %cst_22 : f32 to vector<128x256xf32>
    %32 = arith.maximumf %30, %31 : vector<128x256xf32>
    %33 = arith.truncf %32 : vector<128x256xf32> to vector<128x256xbf16>
    %c0_23 = arith.constant 0 : index
    %c0_24 = arith.constant 0 : index
    %34 = vector.load %arg10[%c0_23, %c0_24] : memref<1x64xf32, #tpu.memory_space<vmem>>, vector<1x64xf32>
    %c0_25 = arith.constant 0 : index
    %c0_26 = arith.constant 0 : index
    %35 = vector.load %arg9[%c0_25, %c0_26] : memref<256x64xbf16, #tpu.memory_space<vmem>>, vector<256x64xbf16>
    %cst_27 = arith.constant dense<0.000000e+00> : vector<128x64xf32>
    %36 = tpu.matmul %33, %35, %cst_27 {dimension_numbers = #tpu.dot_dimension_numbers<[1], [0], [0], [1], [0, 0, 1, 1], [], []>} : vector<128x256xbf16>, vector<256x64xbf16>, vector<128x64xf32> -> vector<128x64xf32>
    %37 = vector.broadcast %34 : vector<1x64xf32> to vector<128x64xf32>
    %38 = arith.addf %36, %37 : vector<128x64xf32>
    %cst_28 = arith.constant 0.000000e+00 : f32
    %39 = vector.broadcast %cst_28 : f32 to vector<128x64xf32>
    %40 = arith.maximumf %38, %39 : vector<128x64xf32>
    %41 = arith.truncf %40 : vector<128x64xf32> to vector<128x64xbf16>
    %c0_29 = arith.constant 0 : index
    %c0_30 = arith.constant 0 : index
    %42 = vector.load %arg12[%c0_29, %c0_30] : memref<1x256xf32, #tpu.memory_space<vmem>>, vector<1x256xf32>
    %c0_31 = arith.constant 0 : index
    %c0_32 = arith.constant 0 : index
    %43 = vector.load %arg11[%c0_31, %c0_32] : memref<64x256xbf16, #tpu.memory_space<vmem>>, vector<64x256xbf16>
    %cst_33 = arith.constant dense<0.000000e+00> : vector<128x256xf32>
    %44 = tpu.matmul %41, %43, %cst_33 {dimension_numbers = #tpu.dot_dimension_numbers<[1], [0], [0], [1], [0, 0, 1, 1], [], []>} : vector<128x64xbf16>, vector<64x256xbf16>, vector<128x256xf32> -> vector<128x256xf32>
    %45 = vector.broadcast %42 : vector<1x256xf32> to vector<128x256xf32>
    %46 = arith.addf %44, %45 : vector<128x256xf32>
    %cst_34 = arith.constant 0.000000e+00 : f32
    %47 = vector.broadcast %cst_34 : f32 to vector<128x256xf32>
    %48 = arith.maximumf %46, %47 : vector<128x256xf32>
    %49 = arith.truncf %48 : vector<128x256xf32> to vector<128x256xbf16>
    %c1 = arith.constant 1 : index
    %50 = memref.load %arg22[%c1] : memref<8xf32, #tpu.memory_space<smem>>
    %c0_35 = arith.constant 0 : index
    %c0_36 = arith.constant 0 : index
    %51 = vector.load %arg13[%c0_35, %c0_36] : memref<256x128xbf16, #tpu.memory_space<vmem>>, vector<256x128xbf16>
    %cst_37 = arith.constant dense<0.000000e+00> : vector<128x128xf32>
    %52 = tpu.matmul %49, %51, %cst_37 {dimension_numbers = #tpu.dot_dimension_numbers<[1], [0], [0], [1], [0, 0, 1, 1], [], []>} : vector<128x256xbf16>, vector<256x128xbf16>, vector<128x128xf32> -> vector<128x128xf32>
    %53 = vector.broadcast %50 : f32 to vector<128x128xf32>
    %54 = arith.addf %52, %53 : vector<128x128xf32>
    %cst_38 = arith.constant 0.000000e+00 : f32
    %55 = vector.broadcast %cst_38 : f32 to vector<128x128xf32>
    %56 = arith.maximumf %54, %55 : vector<128x128xf32>
    %57 = arith.truncf %56 : vector<128x128xf32> to vector<128x128xbf16>
    %c0_39 = arith.constant 0 : index
    %c0_40 = arith.constant 0 : index
    %58 = vector.load %arg15[%c0_39, %c0_40] : memref<1x32xf32, #tpu.memory_space<vmem>>, vector<1x32xf32>
    %c0_41 = arith.constant 0 : index
    %c0_42 = arith.constant 0 : index
    %59 = vector.load %arg14[%c0_41, %c0_42] : memref<128x32xbf16, #tpu.memory_space<vmem>>, vector<128x32xbf16>
    %cst_43 = arith.constant dense<0.000000e+00> : vector<128x32xf32>
    %60 = tpu.matmul %57, %59, %cst_43 {dimension_numbers = #tpu.dot_dimension_numbers<[1], [0], [0], [1], [0, 0, 1, 1], [], []>} : vector<128x128xbf16>, vector<128x32xbf16>, vector<128x32xf32> -> vector<128x32xf32>
    %61 = vector.broadcast %58 : vector<1x32xf32> to vector<128x32xf32>
    %62 = arith.addf %60, %61 : vector<128x32xf32>
    %cst_44 = arith.constant 0.000000e+00 : f32
    %63 = vector.broadcast %cst_44 : f32 to vector<128x32xf32>
    %64 = arith.maximumf %62, %63 : vector<128x32xf32>
    %65 = arith.truncf %64 : vector<128x32xf32> to vector<128x32xbf16>
    %c0_45 = arith.constant 0 : index
    %c0_46 = arith.constant 0 : index
    %66 = vector.load %arg17[%c0_45, %c0_46] : memref<1x128xf32, #tpu.memory_space<vmem>>, vector<1x128xf32>
    %c0_47 = arith.constant 0 : index
    %c0_48 = arith.constant 0 : index
    %67 = vector.load %arg16[%c0_47, %c0_48] : memref<32x128xbf16, #tpu.memory_space<vmem>>, vector<32x128xbf16>
    %cst_49 = arith.constant dense<0.000000e+00> : vector<128x128xf32>
    %68 = tpu.matmul %65, %67, %cst_49 {dimension_numbers = #tpu.dot_dimension_numbers<[1], [0], [0], [1], [0, 0, 1, 1], [], []>} : vector<128x32xbf16>, vector<32x128xbf16>, vector<128x128xf32> -> vector<128x128xf32>
    %69 = vector.broadcast %66 : vector<1x128xf32> to vector<128x128xf32>
    %70 = arith.addf %68, %69 : vector<128x128xf32>
    %cst_50 = arith.constant 0.000000e+00 : f32
    %71 = vector.broadcast %cst_50 : f32 to vector<128x128xf32>
    %72 = arith.maximumf %70, %71 : vector<128x128xf32>
    %73 = arith.truncf %72 : vector<128x128xf32> to vector<128x128xbf16>
    %c0_51 = arith.constant 0 : index
    %c0_52 = arith.constant 0 : index
    %74 = vector.load %arg18[%c0_51, %c0_52] : memref<64x128xbf16, #tpu.memory_space<vmem>>, vector<64x128xbf16>
    %cst_53 = arith.constant dense<0.000000e+00> : vector<64x128xf32>
    %75 = tpu.matmul %74, %73, %cst_53 {dimension_numbers = #tpu.dot_dimension_numbers<[1], [1], [0], [0], [0, 0, 1, 0], [], []>} : vector<64x128xbf16>, vector<128x128xbf16>, vector<64x128xf32> -> vector<64x128xf32>
    %c2 = arith.constant 2 : index
    %76 = memref.load %arg22[%c2] : memref<8xf32, #tpu.memory_space<smem>>
    %77 = vector.broadcast %76 : f32 to vector<64x128xf32>
    %78 = arith.addf %75, %77 : vector<64x128xf32>
    %cst_54 = arith.constant 0.000000e+00 : f32
    %79 = vector.broadcast %cst_54 : f32 to vector<64x128xf32>
    %80 = arith.maximumf %78, %79 : vector<64x128xf32>
    %81 = arith.truncf %80 : vector<64x128xf32> to vector<64x128xbf16>
    %c0_55 = arith.constant 0 : index
    %c0_56 = arith.constant 0 : index
    %82 = vector.load %arg19[%c0_55, %c0_56] : memref<32x64xbf16, #tpu.memory_space<vmem>>, vector<32x64xbf16>
    %cst_57 = arith.constant dense<0.000000e+00> : vector<32x128xf32>
    %83 = tpu.matmul %82, %81, %cst_57 {dimension_numbers = #tpu.dot_dimension_numbers<[1], [0], [0], [1], [0, 0, 1, 1], [], []>} : vector<32x64xbf16>, vector<64x128xbf16>, vector<32x128xf32> -> vector<32x128xf32>
    %c3 = arith.constant 3 : index
    %84 = memref.load %arg22[%c3] : memref<8xf32, #tpu.memory_space<smem>>
    %85 = vector.broadcast %84 : f32 to vector<32x128xf32>
    %86 = arith.addf %83, %85 : vector<32x128xf32>
    %cst_58 = arith.constant 0.000000e+00 : f32
    %87 = vector.broadcast %cst_58 : f32 to vector<32x128xf32>
    %88 = arith.maximumf %86, %87 : vector<32x128xf32>
    %89 = arith.truncf %88 : vector<32x128xf32> to vector<32x128xbf16>
    %c0_59 = arith.constant 0 : index
    %c0_60 = arith.constant 0 : index
    %90 = vector.load %arg20[%c0_59, %c0_60] : memref<16x32xbf16, #tpu.memory_space<vmem>>, vector<16x32xbf16>
    %cst_61 = arith.constant dense<0.000000e+00> : vector<16x128xf32>
    %91 = tpu.matmul %90, %89, %cst_61 {dimension_numbers = #tpu.dot_dimension_numbers<[1], [0], [0], [1], [0, 0, 1, 1], [], []>} : vector<16x32xbf16>, vector<32x128xbf16>, vector<16x128xf32> -> vector<16x128xf32>
    %c4 = arith.constant 4 : index
    %92 = memref.load %arg22[%c4] : memref<8xf32, #tpu.memory_space<smem>>
    %93 = vector.broadcast %92 : f32 to vector<16x128xf32>
    %94 = arith.addf %91, %93 : vector<16x128xf32>
    %cst_62 = arith.constant 0.000000e+00 : f32
    %95 = vector.broadcast %cst_62 : f32 to vector<16x128xf32>
    %96 = arith.maximumf %94, %95 : vector<16x128xf32>
    %97 = arith.truncf %96 : vector<16x128xf32> to vector<16x128xbf16>
    %c0_63 = arith.constant 0 : index
    %c0_64 = arith.constant 0 : index
    %98 = vector.load %arg21[%c0_63, %c0_64] : memref<1x16xbf16, #tpu.memory_space<vmem>>, vector<1x16xbf16>
    %cst_65 = arith.constant dense<0.000000e+00> : vector<1x128xf32>
    %99 = tpu.matmul %98, %97, %cst_65 {dimension_numbers = #tpu.dot_dimension_numbers<[1], [0], [0], [1], [0, 0, 1, 1], [], []>} : vector<1x16xbf16>, vector<16x128xbf16>, vector<1x128xf32> -> vector<1x128xf32>
    %c5 = arith.constant 5 : index
    %100 = memref.load %arg22[%c5] : memref<8xf32, #tpu.memory_space<smem>>
    %101 = vector.broadcast %100 : f32 to vector<1x128xf32>
    %102 = arith.addf %99, %101 : vector<1x128xf32>
    %c0_66 = arith.constant 0 : index
    %c0_67 = arith.constant 0 : index
    %103 = vector.load %arg23[%c0_66, %c0_67] : memref<1x128xf32, #tpu.memory_space<vmem>>, vector<1x128xf32>
    tpu.vector_store %arg23[%c0_66, %c0_67], %102 {strides = array<i32>} : memref<1x128xf32, #tpu.memory_space<vmem>>, vector<1x128xf32>,
    return
  }
  func.func @transform_0(%arg0: i32) -> (i32, i32) {
    %c0_i32 = arith.constant 0 : i32
    %c0_i32_0 = arith.constant 0 : i32
    return %arg0, %c0_i32 : i32, i32
  }
  func.func @transform_1(%arg0: i32) -> (i32, i32) {
    %c0_i32 = arith.constant 0 : i32
    %c0_i32_0 = arith.constant 0 : i32
    %c0_i32_1 = arith.constant 0 : i32
    return %c0_i32, %c0_i32_0 : i32, i32
  }
  func.func @transform_2(%arg0: i32) -> (i32, i32) {
    %c0_i32 = arith.constant 0 : i32
    %c0_i32_0 = arith.constant 0 : i32
    %c0_i32_1 = arith.constant 0 : i32
    return %c0_i32, %c0_i32_0 : i32, i32
  }
  func.func @transform_3(%arg0: i32) -> (i32, i32) {
    %c0_i32 = arith.constant 0 : i32
    %c0_i32_0 = arith.constant 0 : i32
    %c0_i32_1 = arith.constant 0 : i32
    return %c0_i32, %c0_i32_0 : i32, i32
  }
  func.func @transform_4(%arg0: i32) -> (i32, i32) {
    %c0_i32 = arith.constant 0 : i32
    %c0_i32_0 = arith.constant 0 : i32
    %c0_i32_1 = arith.constant 0 : i32
    return %c0_i32, %c0_i32_0 : i32, i32
  }
  func.func @transform_5(%arg0: i32) -> (i32, i32) {
    %c0_i32 = arith.constant 0 : i32
    %c0_i32_0 = arith.constant 0 : i32
    %c0_i32_1 = arith.constant 0 : i32
    return %c0_i32, %c0_i32_0 : i32, i32
  }
  func.func @transform_6(%arg0: i32) -> (i32, i32) {
    %c0_i32 = arith.constant 0 : i32
    %c0_i32_0 = arith.constant 0 : i32
    %c0_i32_1 = arith.constant 0 : i32
    return %c0_i32, %c0_i32_0 : i32, i32
  }
  func.func @transform_7(%arg0: i32) -> (i32, i32) {
    %c0_i32 = arith.constant 0 : i32
    %c0_i32_0 = arith.constant 0 : i32
    %c0_i32_1 = arith.constant 0 : i32
    return %c0_i32, %c0_i32_0 : i32, i32
  }
  func.func @transform_8(%arg0: i32) -> (i32, i32) {
    %c0_i32 = arith.constant 0 : i32
    %c0_i32_0 = arith.constant 0 : i32
    %c0_i32_1 = arith.constant 0 : i32
    return %c0_i32, %c0_i32_0 : i32, i32
  }
  func.func @transform_9(%arg0: i32) -> (i32, i32) {
    %c0_i32 = arith.constant 0 : i32
    %c0_i32_0 = arith.constant 0 : i32
    %c0_i32_1 = arith.constant 0 : i32
    return %c0_i32, %c0_i32_0 : i32, i32
  }
  func.func @transform_10(%arg0: i32) -> (i32, i32) {
    %c0_i32 = arith.constant 0 : i32
    %c0_i32_0 = arith.constant 0 : i32
    %c0_i32_1 = arith.constant 0 : i32
    return %c0_i32, %c0_i32_0 : i32, i32
  }
  func.func @transform_11(%arg0: i32) -> (i32, i32) {
    %c0_i32 = arith.constant 0 : i32
    %c0_i32_0 = arith.constant 0 : i32
    %c0_i32_1 = arith.constant 0 : i32
    return %c0_i32, %c0_i32_0 : i32, i32
  }
  func.func @transform_12(%arg0: i32) -> (i32, i32) {
    %c0_i32 = arith.constant 0 : i32
    %c0_i32_0 = arith.constant 0 : i32
    %c0_i32_1 = arith.constant 0 : i32
    return %c0_i32, %c0_i32_0 : i32, i32
  }
  func.func @transform_13(%arg0: i32) -> (i32, i32) {
    %c0_i32 = arith.constant 0 : i32
    %c0_i32_0 = arith.constant 0 : i32
    %c0_i32_1 = arith.constant 0 : i32
    return %c0_i32, %c0_i32_0 : i32, i32
  }
  func.func @transform_14(%arg0: i32) -> (i32, i32) {
    %c0_i32 = arith.constant 0 : i32
    %c0_i32_0 = arith.constant 0 : i32
    %c0_i32_1 = arith.constant 0 : i32
    return %c0_i32, %c0_i32_0 : i32, i32
  }
  func.func @transform_15(%arg0: i32) -> (i32, i32) {
    %c0_i32 = arith.constant 0 : i32
    %c0_i32_0 = arith.constant 0 : i32
    %c0_i32_1 = arith.constant 0 : i32
    return %c0_i32, %c0_i32_0 : i32, i32
  }
  func.func @transform_16(%arg0: i32) -> (i32, i32) {
    %c0_i32 = arith.constant 0 : i32
    %c0_i32_0 = arith.constant 0 : i32
    %c0_i32_1 = arith.constant 0 : i32
    return %c0_i32, %c0_i32_0 : i32, i32
  }
  func.func @transform_17(%arg0: i32) -> (i32, i32) {
    %c0_i32 = arith.constant 0 : i32
    %c0_i32_0 = arith.constant 0 : i32
    %c0_i32_1 = arith.constant 0 : i32
    return %c0_i32, %c0_i32_0 : i32, i32
  }
  func.func @transform_18(%arg0: i32) -> (i32, i32) {
    %c0_i32 = arith.constant 0 : i32
    %c0_i32_0 = arith.constant 0 : i32
    %c0_i32_1 = arith.constant 0 : i32
    return %c0_i32, %c0_i32_0 : i32, i32
  }
  func.func @transform_19(%arg0: i32) -> (i32, i32) {
    %c0_i32 = arith.constant 0 : i32
    %c0_i32_0 = arith.constant 0 : i32
    %c0_i32_1 = arith.constant 0 : i32
    return %c0_i32, %c0_i32_0 : i32, i32
  }
  func.func @transform_20(%arg0: i32) -> (i32, i32) {
    %c0_i32 = arith.constant 0 : i32
    %c0_i32_0 = arith.constant 0 : i32
    %c0_i32_1 = arith.constant 0 : i32
    return %c0_i32, %c0_i32_0 : i32, i32
  }
  func.func @transform_21(%arg0: i32) -> i32 {
    %c0_i32 = arith.constant 0 : i32
    %c0_i32_0 = arith.constant 0 : i32
    return %c0_i32 : i32
  }
  func.func @transform_22(%arg0: i32) -> (i32, i32) {
    %c0_i32 = arith.constant 0 : i32
    %c0_i32_0 = arith.constant 0 : i32
    return %c0_i32, %arg0 : i32, i32
  }
}

</mosaic_0001>

<llo_original>
// kernel: tpu_custom_call.1
$region0: #{tpu_custom_call.1}
  #allocation0 [shape = 'u32[]', space=smem, size = 0x4, offset = 0x4, fixed_abs, tag = 'smem constant byte address 0x4 - core index']
  #allocation1 [shape = 'u32[144,128]{1,0:T(1,128)}', space=vmem, size = 0x12000, scoped, tag = 'internal scratch']
  %s0 = inlined_call_operand.vmem [shape: f32[512,10], index: 0, kind: input, shape index: {}]
  %s1 = inlined_call_operand.vmem [shape: bf16[10,512], index: 1, kind: input, shape index: {}]
  %s2 = inlined_call_operand.hbm [shape: f32[1,512], index: 2, kind: input, shape index: {}]
  %s3 = inlined_call_operand.hbm [shape: bf16[512,128], index: 3, kind: input, shape index: {}]
  %s4 = inlined_call_operand.hbm [shape: f32[1,128], index: 4, kind: input, shape index: {}]
  %s5 = inlined_call_operand.hbm [shape: bf16[128,512], index: 5, kind: input, shape index: {}]
  %s6 = inlined_call_operand.hbm [shape: f32[1,512], index: 6, kind: input, shape index: {}]
  %s7 = inlined_call_operand.vmem [shape: bf16[512,256], index: 7, kind: input, shape index: {}]
  %s8 = inlined_call_operand.vmem [shape: bf16[256,64], index: 8, kind: input, shape index: {}]
  %s9 = inlined_call_operand.hbm [shape: f32[1,64], index: 9, kind: input, shape index: {}]
  %s10 = inlined_call_operand.vmem [shape: bf16[64,256], index: 10, kind: input, shape index: {}]
  %s11 = inlined_call_operand.vmem [shape: f32[1,256], index: 11, kind: input, shape index: {}]
  %s12 = inlined_call_operand.vmem [shape: bf16[256,128], index: 12, kind: input, shape index: {}]
  %s13 = inlined_call_operand.vmem [shape: bf16[128,32], index: 13, kind: input, shape index: {}]
  %s14 = inlined_call_operand.vmem [shape: f32[1,32], index: 14, kind: input, shape index: {}]
  %s15 = inlined_call_operand.vmem [shape: bf16[32,128], index: 15, kind: input, shape index: {}]
  %s16 = inlined_call_operand.vmem [shape: f32[1,128], index: 16, kind: input, shape index: {}]
  %s17 = inlined_call_operand.hbm [shape: bf16[64,128], index: 17, kind: input, shape index: {}]
  %s18 = inlined_call_operand.vmem [shape: bf16[32,64], index: 18, kind: input, shape index: {}]
  %s19 = inlined_call_operand.hbm [shape: bf16[16,32], index: 19, kind: input, shape index: {}]
  %s20 = inlined_call_operand.hbm [shape: bf16[1,16], index: 20, kind: input, shape index: {}]
  %s21 = inlined_call_operand.vmem [shape: f32[8], index: 21, kind: input, shape index: {}]
  %s22 = inlined_call_operand.hbm [shape: f32[1,512], index: 22, kind: output, shape index: {}]
  %s23 = sld [smem:[#allocation0]]
  $region161: #{tpu_custom_call.1} parent=0
    _
  %s25 = ssub.s32 1, %s23
  %s26 = scalar_select 0, %s25, %s23
  $region1: #{tpu_custom_call.1} parent=0
    #allocation2 [shape = 'u8[2048]{0}', space=vmem, size = 0x800, scoped, tag = 'input window, operand 2, single buffered']
    #allocation3 [shape = 's32[2]{0}', space=sflag, size = 0x8, scoped, tag = 'scoped memory for tpu_custom_call.1']
    #allocation4 [shape = 's32[2]{0}', space=sflag, size = 0x8, scoped, tag = 'scoped memory for tpu_custom_call.1']
    #allocation5 [shape = 's32[2]{0}', space=sflag, size = 0x8, scoped, tag = 'scoped memory for tpu_custom_call.1']
    #allocation6 [shape = 'u8[131072]{0}', space=vmem, size = 0x20000, scoped, tag = 'input window, operand 3, single buffered']
    #allocation7 [shape = 's32[1]{0}', space=sflag, size = 0x4, scoped, tag = 'scoped memory for tpu_custom_call.1']
    #allocation8 [shape = 'u8[512]{0}', space=vmem, size = 0x400, scoped, tag = 'input window, operand 4, single buffered']
    #allocation9 [shape = 'u8[131072]{0}', space=vmem, size = 0x20000, scoped, tag = 'input window, operand 5, single buffered']
    #allocation10 [shape = 's32[1]{0}', space=sflag, size = 0x4, scoped, tag = 'scoped memory for tpu_custom_call.1']
    #allocation11 [shape = 'u8[2048]{0}', space=vmem, size = 0x800, scoped, tag = 'input window, operand 6, single buffered']
    #allocation12 [shape = 'u8[512]{0}', space=vmem, size = 0x400, scoped, tag = 'input window, operand 9, single buffered']
    #allocation13 [shape = 's32[1]{0}', space=sflag, size = 0x4, scoped, tag = 'scoped memory for tpu_custom_call.1']
    #allocation14 [shape = 'u8[16384]{0}', space=vmem, size = 0x4000, scoped, tag = 'input window, operand 17, single buffered']
    #allocation15 [shape = 'u8[4096]{0}', space=vmem, size = 0x1000, scoped, tag = 'input window, operand 19, single buffered']
    #allocation16 [shape = 's32[1]{0}', space=sflag, size = 0x4, scoped, tag = 'scoped memory for tpu_custom_call.1']
    #allocation17 [shape = 'u8[512]{0}', space=vmem, size = 0x400, scoped, tag = 'input window, operand 20, single buffered']
    #allocation18 [shape = 'u8[512]{0}', space=smem, size = 0x200, scoped, tag = 'input window, operand 21, single buffered']
    #allocation19 [shape = 'u8[1024]{0}', space=vmem, size = 0x400, scoped, tag = 'output window, operand 0']
    %27 = vsyncpa [#allocation3], 0
    %28 = vsyncpa [#allocation7], 0
    %29 = vsyncpa [#allocation10], 0
    %30 = vsyncpa [#allocation13], 0
    %31 = vsyncpa [#allocation16], 0
    %32 = vsyncpa [#allocation5], 0
    %33 = vsyncpa [#allocation4], 0
    %s34 = scalar_lea.sflag [#allocation4], 1
    %35 = vsyncpa %s34, 0
    loop: start=0, step=1, limit=6
    $region2: #{tpu_custom_call.1} parent=1 // loop_pre_header
      _
    $region3: #{tpu_custom_call.1} parent=1 // loop_header
      %s37 = sphi 0, %s41
      %p38 = scmp.ge.s32.totalorder %s37, 6
      %s47 = sphi 0, %s49
      %s50 = sphi 0, %s47
      %s51 = sphi 0, %s50
      %s67 = sphi 0, %s51
      %s71 = sphi 0, %s71
      %s73 = sphi 0, %s71
      %s74 = sphi 0, %s73
      %s88 = sphi 0, %s74
      %s92 = sphi 0, %s92
      %s94 = sphi 0, %s92
      %s95 = sphi 0, %s94
      %s109 = sphi 0, %s95
      %s113 = sphi 0, %s113
      %s115 = sphi 0, %s113
      %s116 = sphi 0, %s115
      %s130 = sphi 0, %s116
      %s134 = sphi 0, %s134
      %s136 = sphi 0, %s134
      %s137 = sphi 0, %s136
      %s151 = sphi 0, %s137
      %s155 = sphi 0, %s155
      %s157 = sphi 0, %s155
      %s158 = sphi 0, %s157
      %s172 = sphi 0, %s158
      %s176 = sphi 0, %s176
      %s178 = sphi 0, %s176
      %s179 = sphi 0, %s178
      %s193 = sphi 0, %s179
      %s197 = sphi 0, %s197
      %s199 = sphi 0, %s197
      %s200 = sphi 0, %s199
      %s214 = sphi 0, %s200
      %s218 = sphi 0, %s218
      %s220 = sphi 0, %s218
      %s221 = sphi 0, %s220
      %s235 = sphi 0, %s221
      %s239 = sphi 0, %s239
      %s241 = sphi 0, %s239
      %s242 = sphi 0, %s241
      %s256 = sphi 0, %s242
      %s260 = sphi 0, %s260
      %s262 = sphi 0, %s260
      %s263 = sphi 0, %s262
      %s277 = sphi 0, %s263
      %s281 = sphi 0, %s281
      %s283 = sphi 0, %s281
      %s284 = sphi 0, %s283
      %s298 = sphi 0, %s284
      %s302 = sphi 0, %s302
      %s304 = sphi 0, %s302
      %s305 = sphi 0, %s304
      %s319 = sphi 0, %s305
      %s323 = sphi 0, %s323
      %s325 = sphi 0, %s323
      %s326 = sphi 0, %s325
      %s340 = sphi 0, %s326
      %s344 = sphi 0, %s344
      %s346 = sphi 0, %s344
      %s347 = sphi 0, %s346
      %s361 = sphi 0, %s347
      %s365 = sphi 0, %s365
      %s367 = sphi 0, %s365
      %s368 = sphi 0, %s367
      %s382 = sphi 0, %s368
      %s386 = sphi 0, %s386
      %s388 = sphi 0, %s386
      %s389 = sphi 0, %s388
      %s403 = sphi 0, %s389
      %s407 = sphi 0, %s407
      %s409 = sphi 0, %s407
      %s410 = sphi 0, %s409
      %s424 = sphi 0, %s410
      %s428 = sphi 0, %s428
      %s430 = sphi 0, %s428
      %s431 = sphi 0, %s430
      %s445 = sphi 0, %s431
      %s449 = sphi 0, %s449
      %s451 = sphi 0, %s449
      %s452 = sphi 0, %s451
      %s466 = sphi 0, %s452
      %s470 = sphi 0, %s470
      %s472 = sphi 0, %s470
      %s473 = sphi 0, %s472
      %s487 = sphi 0, %s473
      %s491 = sphi 0, %s491
      %s493 = sphi 0, %s491
      %s494 = sphi 0, %s493
      %s508 = sphi 0, %s494
      %s514 = sphi 0, %s516
      %s517 = sphi 0, %s514
      %s518 = sphi 0, %s517
      %s534 = sphi 0, %s518
    $region4: #{tpu_custom_call.1} parent=1 // loop_header_branch
      %40 = sbr.rel (%p38) target = $region8
    $region5: #{tpu_custom_call.1} parent=1 // loop_body
      %s42 = ssub.s32 %s37, 1
      %s43 = ssub.s32 %s37, 2
      %s44 = sadd.s32 %s37, 1
      %s45 = ssub.s32 %s37, %s44
      %p46 = scmp.eq.s32.totalorder %s45, 0
      %s48 = sadd.s32 %s47, 1
      %s49 = scalar_select %p46, %s47, %s48
      %p52 = pneg %p46
      %p53 = scmp.eq.s32.totalorder %s37, 3
      %p54 = por %p52, %p53
      %p55 = scmp.ne.s32.totalorder %s47, %s50
      %p56 = scmp.eq.s32.totalorder %s37, 0
      %p57 = por %p55, %p56
      %p58 = scmp.ne.s32.totalorder %s47, %s50
      %p59 = scmp.eq.s32.totalorder %s42, 3
      %p60 = por %p58, %p59
      %p61 = scmp.ne.s32.totalorder %s50, %s51
      %p62 = scmp.eq.s32.totalorder %s42, 0
      %p63 = por %p61, %p62
      %p64 = scmp.ne.s32.totalorder %s50, %s51
      %p65 = scmp.eq.s32.totalorder %s43, 3
      %p66 = por %p64, %p65
      %p68 = scmp.ne.s32.totalorder %s51, %s67
      %p69 = scmp.eq.s32.totalorder %s43, 0
      %p70 = por %p68, %p69
      %s72 = sadd.s32 %s71, 1
      %p75 = scmp.eq.s32.totalorder %s37, 3
      %p76 = scmp.ne.s32.totalorder %s71, %s73
      %p77 = scmp.eq.s32.totalorder %s37, 0
      %p78 = por %p76, %p77
      %p79 = scmp.ne.s32.totalorder %s71, %s73
      %p80 = scmp.eq.s32.totalorder %s42, 3
      %p81 = por %p79, %p80
      %p82 = scmp.ne.s32.totalorder %s73, %s74
      %p83 = scmp.eq.s32.totalorder %s42, 0
      %p84 = por %p82, %p83
      %p85 = scmp.ne.s32.totalorder %s73, %s74
      %p86 = scmp.eq.s32.totalorder %s43, 3
      %p87 = por %p85, %p86
      %p89 = scmp.ne.s32.totalorder %s74, %s88
      %p90 = scmp.eq.s32.totalorder %s43, 0
      %p91 = por %p89, %p90
      %s93 = sadd.s32 %s92, 1
      %p96 = scmp.eq.s32.totalorder %s37, 3
      %p97 = scmp.ne.s32.totalorder %s92, %s94
      %p98 = scmp.eq.s32.totalorder %s37, 0
      %p99 = por %p97, %p98
      %p100 = scmp.ne.s32.totalorder %s92, %s94
      %p101 = scmp.eq.s32.totalorder %s42, 3
      %p102 = por %p100, %p101
      %p103 = scmp.ne.s32.totalorder %s94, %s95
      %p104 = scmp.eq.s32.totalorder %s42, 0
      %p105 = por %p103, %p104
      %p106 = scmp.ne.s32.totalorder %s94, %s95
      %p107 = scmp.eq.s32.totalorder %s43, 3
      %p108 = por %p106, %p107
      %p110 = scmp.ne.s32.totalorder %s95, %s109
      %p111 = scmp.eq.s32.totalorder %s43, 0
      %p112 = por %p110, %p111
      %s114 = sadd.s32 %s113, 1
      %p117 = scmp.eq.s32.totalorder %s37, 3
      %p118 = scmp.ne.s32.totalorder %s113, %s115
      %p119 = scmp.eq.s32.totalorder %s37, 0
      %p120 = por %p118, %p119
      %p121 = scmp.ne.s32.totalorder %s113, %s115
      %p122 = scmp.eq.s32.totalorder %s42, 3
      %p123 = por %p121, %p122
      %p124 = scmp.ne.s32.totalorder %s115, %s116
      %p125 = scmp.eq.s32.totalorder %s42, 0
      %p126 = por %p124, %p125
      %p127 = scmp.ne.s32.totalorder %s115, %s116
      %p128 = scmp.eq.s32.totalorder %s43, 3
      %p129 = por %p127, %p128
      %p131 = scmp.ne.s32.totalorder %s116, %s130
      %p132 = scmp.eq.s32.totalorder %s43, 0
      %p133 = por %p131, %p132
      %s135 = sadd.s32 %s134, 1
      %p138 = scmp.eq.s32.totalorder %s37, 3
      %p139 = scmp.ne.s32.totalorder %s134, %s136
      %p140 = scmp.eq.s32.totalorder %s37, 0
      %p141 = por %p139, %p140
      %p142 = scmp.ne.s32.totalorder %s134, %s136
      %p143 = scmp.eq.s32.totalorder %s42, 3
      %p144 = por %p142, %p143
      %p145 = scmp.ne.s32.totalorder %s136, %s137
      %p146 = scmp.eq.s32.totalorder %s42, 0
      %p147 = por %p145, %p146
      %p148 = scmp.ne.s32.totalorder %s136, %s137
      %p149 = scmp.eq.s32.totalorder %s43, 3
      %p150 = por %p148, %p149
      %p152 = scmp.ne.s32.totalorder %s137, %s151
      %p153 = scmp.eq.s32.totalorder %s43, 0
      %p154 = por %p152, %p153
      %s156 = sadd.s32 %s155, 1
      %p159 = scmp.eq.s32.totalorder %s37, 3
      %p160 = scmp.ne.s32.totalorder %s155, %s157
      %p161 = scmp.eq.s32.totalorder %s37, 0
      %p162 = por %p160, %p161
      %p163 = scmp.ne.s32.totalorder %s155, %s157
      %p164 = scmp.eq.s32.totalorder %s42, 3
      %p165 = por %p163, %p164
      %p166 = scmp.ne.s32.totalorder %s157, %s158
      %p167 = scmp.eq.s32.totalorder %s42, 0
      %p168 = por %p166, %p167
      %p169 = scmp.ne.s32.totalorder %s157, %s158
      %p170 = scmp.eq.s32.totalorder %s43, 3
      %p171 = por %p169, %p170
      %p173 = scmp.ne.s32.totalorder %s158, %s172
      %p174 = scmp.eq.s32.totalorder %s43, 0
      %p175 = por %p173, %p174
      %s177 = sadd.s32 %s176, 1
      %p180 = scmp.eq.s32.totalorder %s37, 3
      %p181 = scmp.ne.s32.totalorder %s176, %s178
      %p182 = scmp.eq.s32.totalorder %s37, 0
      %p183 = por %p181, %p182
      %p184 = scmp.ne.s32.totalorder %s176, %s178
      %p185 = scmp.eq.s32.totalorder %s42, 3
      %p186 = por %p184, %p185
      %p187 = scmp.ne.s32.totalorder %s178, %s179
      %p188 = scmp.eq.s32.totalorder %s42, 0
      %p189 = por %p187, %p188
      %p190 = scmp.ne.s32.totalorder %s178, %s179
      %p191 = scmp.eq.s32.totalorder %s43, 3
      %p192 = por %p190, %p191
      %p194 = scmp.ne.s32.totalorder %s179, %s193
      %p195 = scmp.eq.s32.totalorder %s43, 0
      %p196 = por %p194, %p195
      %s198 = sadd.s32 %s197, 1
      %p201 = scmp.eq.s32.totalorder %s37, 3
      %p202 = scmp.ne.s32.totalorder %s197, %s199
      %p203 = scmp.eq.s32.totalorder %s37, 0
      %p204 = por %p202, %p203
      %p205 = scmp.ne.s32.totalorder %s197, %s199
      %p206 = scmp.eq.s32.totalorder %s42, 3
      %p207 = por %p205, %p206
      %p208 = scmp.ne.s32.totalorder %s199, %s200
      %p209 = scmp.eq.s32.totalorder %s42, 0
      %p210 = por %p208, %p209
      %p211 = scmp.ne.s32.totalorder %s199, %s200
      %p212 = scmp.eq.s32.totalorder %s43, 3
      %p213 = por %p211, %p212
      %p215 = scmp.ne.s32.totalorder %s200, %s214
      %p216 = scmp.eq.s32.totalorder %s43, 0
      %p217 = por %p215, %p216
      %s219 = sadd.s32 %s218, 1
      %p222 = scmp.eq.s32.totalorder %s37, 3
      %p223 = scmp.ne.s32.totalorder %s218, %s220
      %p224 = scmp.eq.s32.totalorder %s37, 0
      %p225 = por %p223, %p224
      %p226 = scmp.ne.s32.totalorder %s218, %s220
      %p227 = scmp.eq.s32.totalorder %s42, 3
      %p228 = por %p226, %p227
      %p229 = scmp.ne.s32.totalorder %s220, %s221
      %p230 = scmp.eq.s32.totalorder %s42, 0
      %p231 = por %p229, %p230
      %p232 = scmp.ne.s32.totalorder %s220, %s221
      %p233 = scmp.eq.s32.totalorder %s43, 3
      %p234 = por %p232, %p233
      %p236 = scmp.ne.s32.totalorder %s221, %s235
      %p237 = scmp.eq.s32.totalorder %s43, 0
      %p238 = por %p236, %p237
      %s240 = sadd.s32 %s239, 1
      %p243 = scmp.eq.s32.totalorder %s37, 3
      %p244 = scmp.ne.s32.totalorder %s239, %s241
      %p245 = scmp.eq.s32.totalorder %s37, 0
      %p246 = por %p244, %p245
      %p247 = scmp.ne.s32.totalorder %s239, %s241
      %p248 = scmp.eq.s32.totalorder %s42, 3
      %p249 = por %p247, %p248
      %p250 = scmp.ne.s32.totalorder %s241, %s242
      %p251 = scmp.eq.s32.totalorder %s42, 0
      %p252 = por %p250, %p251
      %p253 = scmp.ne.s32.totalorder %s241, %s242
      %p254 = scmp.eq.s32.totalorder %s43, 3
      %p255 = por %p253, %p254
      %p257 = scmp.ne.s32.totalorder %s242, %s256
      %p258 = scmp.eq.s32.totalorder %s43, 0
      %p259 = por %p257, %p258
      %s261 = sadd.s32 %s260, 1
      %p264 = scmp.eq.s32.totalorder %s37, 3
      %p265 = scmp.ne.s32.totalorder %s260, %s262
      %p266 = scmp.eq.s32.totalorder %s37, 0
      %p267 = por %p265, %p266
      %p268 = scmp.ne.s32.totalorder %s260, %s262
      %p269 = scmp.eq.s32.totalorder %s42, 3
      %p270 = por %p268, %p269
      %p271 = scmp.ne.s32.totalorder %s262, %s263
      %p272 = scmp.eq.s32.totalorder %s42, 0
      %p273 = por %p271, %p272
      %p274 = scmp.ne.s32.totalorder %s262, %s263
      %p275 = scmp.eq.s32.totalorder %s43, 3
      %p276 = por %p274, %p275
      %p278 = scmp.ne.s32.totalorder %s263, %s277
      %p279 = scmp.eq.s32.totalorder %s43, 0
      %p280 = por %p278, %p279
      %s282 = sadd.s32 %s281, 1
      %p285 = scmp.eq.s32.totalorder %s37, 3
      %p286 = scmp.ne.s32.totalorder %s281, %s283
      %p287 = scmp.eq.s32.totalorder %s37, 0
      %p288 = por %p286, %p287
      %p289 = scmp.ne.s32.totalorder %s281, %s283
      %p290 = scmp.eq.s32.totalorder %s42, 3
      %p291 = por %p289, %p290
      %p292 = scmp.ne.s32.totalorder %s283, %s284
      %p293 = scmp.eq.s32.totalorder %s42, 0
      %p294 = por %p292, %p293
      %p295 = scmp.ne.s32.totalorder %s283, %s284
      %p296 = scmp.eq.s32.totalorder %s43, 3
      %p297 = por %p295, %p296
      %p299 = scmp.ne.s32.totalorder %s284, %s298
      %p300 = scmp.eq.s32.totalorder %s43, 0
      %p301 = por %p299, %p300
      %s303 = sadd.s32 %s302, 1
      %p306 = scmp.eq.s32.totalorder %s37, 3
      %p307 = scmp.ne.s32.totalorder %s302, %s304
      %p308 = scmp.eq.s32.totalorder %s37, 0
      %p309 = por %p307, %p308
      %p310 = scmp.ne.s32.totalorder %s302, %s304
      %p311 = scmp.eq.s32.totalorder %s42, 3
      %p312 = por %p310, %p311
      %p313 = scmp.ne.s32.totalorder %s304, %s305
      %p314 = scmp.eq.s32.totalorder %s42, 0
      %p315 = por %p313, %p314
      %p316 = scmp.ne.s32.totalorder %s304, %s305
      %p317 = scmp.eq.s32.totalorder %s43, 3
      %p318 = por %p316, %p317
      %p320 = scmp.ne.s32.totalorder %s305, %s319
      %p321 = scmp.eq.s32.totalorder %s43, 0
      %p322 = por %p320, %p321
      %s324 = sadd.s32 %s323, 1
      %p327 = scmp.eq.s32.totalorder %s37, 3
      %p328 = scmp.ne.s32.totalorder %s323, %s325
      %p329 = scmp.eq.s32.totalorder %s37, 0
      %p330 = por %p328, %p329
      %p331 = scmp.ne.s32.totalorder %s323, %s325
      %p332 = scmp.eq.s32.totalorder %s42, 3
      %p333 = por %p331, %p332
      %p334 = scmp.ne.s32.totalorder %s325, %s326
      %p335 = scmp.eq.s32.totalorder %s42, 0
      %p336 = por %p334, %p335
      %p337 = scmp.ne.s32.totalorder %s325, %s326
      %p338 = scmp.eq.s32.totalorder %s43, 3
      %p339 = por %p337, %p338
      %p341 = scmp.ne.s32.totalorder %s326, %s340
      %p342 = scmp.eq.s32.totalorder %s43, 0
      %p343 = por %p341, %p342
      %s345 = sadd.s32 %s344, 1
      %p348 = scmp.eq.s32.totalorder %s37, 3
      %p349 = scmp.ne.s32.totalorder %s344, %s346
      %p350 = scmp.eq.s32.totalorder %s37, 0
      %p351 = por %p349, %p350
      %p352 = scmp.ne.s32.totalorder %s344, %s346
      %p353 = scmp.eq.s32.totalorder %s42, 3
      %p354 = por %p352, %p353
      %p355 = scmp.ne.s32.totalorder %s346, %s347
      %p356 = scmp.eq.s32.totalorder %s42, 0
      %p357 = por %p355, %p356
      %p358 = scmp.ne.s32.totalorder %s346, %s347
      %p359 = scmp.eq.s32.totalorder %s43, 3
      %p360 = por %p358, %p359
      %p362 = scmp.ne.s32.totalorder %s347, %s361
      %p363 = scmp.eq.s32.totalorder %s43, 0
      %p364 = por %p362, %p363
      %s366 = sadd.s32 %s365, 1
      %p369 = scmp.eq.s32.totalorder %s37, 3
      %p370 = scmp.ne.s32.totalorder %s365, %s367
      %p371 = scmp.eq.s32.totalorder %s37, 0
      %p372 = por %p370, %p371
      %p373 = scmp.ne.s32.totalorder %s365, %s367
      %p374 = scmp.eq.s32.totalorder %s42, 3
      %p375 = por %p373, %p374
      %p376 = scmp.ne.s32.totalorder %s367, %s368
      %p377 = scmp.eq.s32.totalorder %s42, 0
      %p378 = por %p376, %p377
      %p379 = scmp.ne.s32.totalorder %s367, %s368
      %p380 = scmp.eq.s32.totalorder %s43, 3
      %p381 = por %p379, %p380
      %p383 = scmp.ne.s32.totalorder %s368, %s382
      %p384 = scmp.eq.s32.totalorder %s43, 0
      %p385 = por %p383, %p384
      %s387 = sadd.s32 %s386, 1
      %p390 = scmp.eq.s32.totalorder %s37, 3
      %p391 = scmp.ne.s32.totalorder %s386, %s388
      %p392 = scmp.eq.s32.totalorder %s37, 0
      %p393 = por %p391, %p392
      %p394 = scmp.ne.s32.totalorder %s386, %s388
      %p395 = scmp.eq.s32.totalorder %s42, 3
      %p396 = por %p394, %p395
      %p397 = scmp.ne.s32.totalorder %s388, %s389
      %p398 = scmp.eq.s32.totalorder %s42, 0
      %p399 = por %p397, %p398
      %p400 = scmp.ne.s32.totalorder %s388, %s389
      %p401 = scmp.eq.s32.totalorder %s43, 3
      %p402 = por %p400, %p401
      %p404 = scmp.ne.s32.totalorder %s389, %s403
      %p405 = scmp.eq.s32.totalorder %s43, 0
      %p406 = por %p404, %p405
      %s408 = sadd.s32 %s407, 1
      %p411 = scmp.eq.s32.totalorder %s37, 3
      %p412 = scmp.ne.s32.totalorder %s407, %s409
      %p413 = scmp.eq.s32.totalorder %s37, 0
      %p414 = por %p412, %p413
      %p415 = scmp.ne.s32.totalorder %s407, %s409
      %p416 = scmp.eq.s32.totalorder %s42, 3
      %p417 = por %p415, %p416
      %p418 = scmp.ne.s32.totalorder %s409, %s410
      %p419 = scmp.eq.s32.totalorder %s42, 0
      %p420 = por %p418, %p419
      %p421 = scmp.ne.s32.totalorder %s409, %s410
      %p422 = scmp.eq.s32.totalorder %s43, 3
      %p423 = por %p421, %p422
      %p425 = scmp.ne.s32.totalorder %s410, %s424
      %p426 = scmp.eq.s32.totalorder %s43, 0
      %p427 = por %p425, %p426
      %s429 = sadd.s32 %s428, 1
      %p432 = scmp.eq.s32.totalorder %s37, 3
      %p433 = scmp.ne.s32.totalorder %s428, %s430
      %p434 = scmp.eq.s32.totalorder %s37, 0
      %p435 = por %p433, %p434
      %p436 = scmp.ne.s32.totalorder %s428, %s430
      %p437 = scmp.eq.s32.totalorder %s42, 3
      %p438 = por %p436, %p437
      %p439 = scmp.ne.s32.totalorder %s430, %s431
      %p440 = scmp.eq.s32.totalorder %s42, 0
      %p441 = por %p439, %p440
      %p442 = scmp.ne.s32.totalorder %s430, %s431
      %p443 = scmp.eq.s32.totalorder %s43, 3
      %p444 = por %p442, %p443
      %p446 = scmp.ne.s32.totalorder %s431, %s445
      %p447 = scmp.eq.s32.totalorder %s43, 0
      %p448 = por %p446, %p447
      %s450 = sadd.s32 %s449, 1
      %p453 = scmp.eq.s32.totalorder %s37, 3
      %p454 = scmp.ne.s32.totalorder %s449, %s451
      %p455 = scmp.eq.s32.totalorder %s37, 0
      %p456 = por %p454, %p455
      %p457 = scmp.ne.s32.totalorder %s449, %s451
      %p458 = scmp.eq.s32.totalorder %s42, 3
      %p459 = por %p457, %p458
      %p460 = scmp.ne.s32.totalorder %s451, %s452
      %p461 = scmp.eq.s32.totalorder %s42, 0
      %p462 = por %p460, %p461
      %p463 = scmp.ne.s32.totalorder %s451, %s452
      %p464 = scmp.eq.s32.totalorder %s43, 3
      %p465 = por %p463, %p464
      %p467 = scmp.ne.s32.totalorder %s452, %s466
      %p468 = scmp.eq.s32.totalorder %s43, 0
      %p469 = por %p467, %p468
      %s471 = sadd.s32 %s470, 1
      %p474 = scmp.eq.s32.totalorder %s37, 3
      %p475 = scmp.ne.s32.totalorder %s470, %s472
      %p476 = scmp.eq.s32.totalorder %s37, 0
      %p477 = por %p475, %p476
      %p478 = scmp.ne.s32.totalorder %s470, %s472
      %p479 = scmp.eq.s32.totalorder %s42, 3
      %p480 = por %p478, %p479
      %p481 = scmp.ne.s32.totalorder %s472, %s473
      %p482 = scmp.eq.s32.totalorder %s42, 0
      %p483 = por %p481, %p482
      %p484 = scmp.ne.s32.totalorder %s472, %s473
      %p485 = scmp.eq.s32.totalorder %s43, 3
      %p486 = por %p484, %p485
      %p488 = scmp.ne.s32.totalorder %s473, %s487
      %p489 = scmp.eq.s32.totalorder %s43, 0
      %p490 = por %p488, %p489
      %s492 = sadd.s32 %s491, 1
      %p495 = scmp.eq.s32.totalorder %s37, 3
      %p496 = scmp.ne.s32.totalorder %s491, %s493
      %p497 = scmp.eq.s32.totalorder %s37, 0
      %p498 = por %p496, %p497
      %p499 = scmp.ne.s32.totalorder %s491, %s493
      %p500 = scmp.eq.s32.totalorder %s42, 3
      %p501 = por %p499, %p500
      %p502 = scmp.ne.s32.totalorder %s493, %s494
      %p503 = scmp.eq.s32.totalorder %s42, 0
      %p504 = por %p502, %p503
      %p505 = scmp.ne.s32.totalorder %s493, %s494
      %p506 = scmp.eq.s32.totalorder %s43, 3
      %p507 = por %p505, %p506
      %p509 = scmp.ne.s32.totalorder %s494, %s508
      %p510 = scmp.eq.s32.totalorder %s43, 0
      %p511 = por %p509, %p510
      %s512 = ssub.s32 %s37, %s44
      %p513 = scmp.eq.s32.totalorder %s512, 0
      %s515 = sadd.s32 %s514, 1
      %s516 = scalar_select %p513, %s514, %s515
      %p519 = pneg %p513
      %p520 = scmp.eq.s32.totalorder %s37, 3
      %p521 = por %p519, %p520
      %p522 = scmp.ne.s32.totalorder %s514, %s517
      %p523 = scmp.eq.s32.totalorder %s37, 0
      %p524 = por %p522, %p523
      %p525 = scmp.ne.s32.totalorder %s514, %s517
      %p526 = scmp.eq.s32.totalorder %s42, 3
      %p527 = por %p525, %p526
      %p528 = scmp.ne.s32.totalorder %s517, %s518
      %p529 = scmp.eq.s32.totalorder %s42, 0
      %p530 = por %p528, %p529
      %p531 = scmp.ne.s32.totalorder %s517, %s518
      %p532 = scmp.eq.s32.totalorder %s43, 3
      %p533 = por %p531, %p532
      %p535 = scmp.ne.s32.totalorder %s518, %s534
      %p536 = scmp.eq.s32.totalorder %s43, 0
      %p537 = por %p535, %p536
      %p538 = scmp.le.s32.totalorder 1, %s37
      %p539 = scmp.lt.s32.totalorder %s37, 5
      %p540 = pnand %p538, %p539
      %p541 = pneg %p540
      // Predicated region
      $region9: #{tpu_custom_call.1} parent=5 // pred_check
        _
      $region10: #{tpu_custom_call.1} parent=5 // pred_check_branch
        %543 = sbr.rel (%p540) target = $region12
      $region11: #{tpu_custom_call.1} parent=5 // pred_region
        %s544 = ssub.s32 %s37, 1
        // Predicated region
        $region13: #{tpu_custom_call.1} parent=11 // pred_check
          %p545 = pneg %p84
        $region14: #{tpu_custom_call.1} parent=11 // pred_check_branch
          %547 = sbr.rel (%p545) target = $region16
        $region15: #{tpu_custom_call.1} parent=11 // pred_region
          _
        $region16: #{tpu_custom_call.1} parent=11 // pred_fallthru
          _
        // Predicated region
        $region17: #{tpu_custom_call.1} parent=11 // pred_check
          %p548 = pneg %p105
        $region18: #{tpu_custom_call.1} parent=11 // pred_check_branch
          %550 = sbr.rel (%p548) target = $region20
        $region19: #{tpu_custom_call.1} parent=11 // pred_region
          %s552 = ssub.s32 64, 64
          %553 = vsyncadd [#allocation3], %s552
          %s555 = sshll.u32 [#allocation2], 4
          %s556 = int_to_ptr.vmem [resolvable:$true] %s555
          %558 = dma.hbm_to_vmem [thread:$0]  %s2, 64, %s556, [#allocation3]
        $region20: #{tpu_custom_call.1} parent=11 // pred_fallthru
          _
        // Predicated region
        $region21: #{tpu_custom_call.1} parent=11 // pred_check
          %p559 = pneg %p126
        $region22: #{tpu_custom_call.1} parent=11 // pred_check_branch
          %561 = sbr.rel (%p559) target = $region24
        $region23: #{tpu_custom_call.1} parent=11 // pred_region
          %s563 = ssub.s32 4096, 4096
          %564 = vsyncadd [#allocation7], %s563
          %s565 = sshll.u32 [#allocation6], 4
          %s566 = int_to_ptr.vmem [resolvable:$true] %s565
          %571 = dma.hbm_to_vmem [thread:$0]  %s3, 4096, %s566, [#allocation7], 64, 64, 4
        $region24: #{tpu_custom_call.1} parent=11 // pred_fallthru
          _
        // Predicated region
        $region25: #{tpu_custom_call.1} parent=11 // pred_check
          %p572 = pneg %p147
        $region26: #{tpu_custom_call.1} parent=11 // pred_check_branch
          %574 = sbr.rel (%p572) target = $region28
        $region27: #{tpu_custom_call.1} parent=11 // pred_region
          %s576 = ssub.s32 16, 16
          %577 = vsyncadd [#allocation7], %s576
          %s579 = sshll.u32 [#allocation8], 4
          %s580 = int_to_ptr.vmem [resolvable:$true] %s579
          %582 = dma.hbm_to_vmem [thread:$0]  %s4, 16, %s580, [#allocation7]
        $region28: #{tpu_custom_call.1} parent=11 // pred_fallthru
          _
        // Predicated region
        $region29: #{tpu_custom_call.1} parent=11 // pred_check
          %p583 = pneg %p168
        $region30: #{tpu_custom_call.1} parent=11 // pred_check_branch
          %585 = sbr.rel (%p583) target = $region32
        $region31: #{tpu_custom_call.1} parent=11 // pred_region
          %s587 = ssub.s32 4096, 4096
          %588 = vsyncadd [#allocation10], %s587
          %s589 = sshll.u32 [#allocation9], 4
          %s590 = int_to_ptr.vmem [resolvable:$true] %s589
          %595 = dma.hbm_to_vmem [thread:$0]  %s5, 4096, %s590, [#allocation10], 256, 256, 16
        $region32: #{tpu_custom_call.1} parent=11 // pred_fallthru
          _
        // Predicated region
        $region33: #{tpu_custom_call.1} parent=11 // pred_check
          %p596 = pneg %p189
        $region34: #{tpu_custom_call.1} parent=11 // pred_check_branch
          %598 = sbr.rel (%p596) target = $region36
        $region35: #{tpu_custom_call.1} parent=11 // pred_region
          %s600 = ssub.s32 64, 64
          %601 = vsyncadd [#allocation10], %s600
          %s603 = sshll.u32 [#allocation11], 4
          %s604 = int_to_ptr.vmem [resolvable:$true] %s603
          %606 = dma.hbm_to_vmem [thread:$0]  %s6, 64, %s604, [#allocation10]
        $region36: #{tpu_custom_call.1} parent=11 // pred_fallthru
          _
        // Predicated region
        $region37: #{tpu_custom_call.1} parent=11 // pred_check
          %p607 = pneg %p210
        $region38: #{tpu_custom_call.1} parent=11 // pred_check_branch
          %609 = sbr.rel (%p607) target = $region40
        $region39: #{tpu_custom_call.1} parent=11 // pred_region
          _
        $region40: #{tpu_custom_call.1} parent=11 // pred_fallthru
          _
        // Predicated region
        $region41: #{tpu_custom_call.1} parent=11 // pred_check
          %p610 = pneg %p231
        $region42: #{tpu_custom_call.1} parent=11 // pred_check_branch
          %612 = sbr.rel (%p610) target = $region44
        $region43: #{tpu_custom_call.1} parent=11 // pred_region
          _
        $region44: #{tpu_custom_call.1} parent=11 // pred_fallthru
          _
        // Predicated region
        $region45: #{tpu_custom_call.1} parent=11 // pred_check
          %p613 = pneg %p252
        $region46: #{tpu_custom_call.1} parent=11 // pred_check_branch
          %615 = sbr.rel (%p613) target = $region48
        $region47: #{tpu_custom_call.1} parent=11 // pred_region
          %s617 = ssub.s32 16, 16
          %618 = vsyncadd [#allocation13], %s617
          %s620 = sshll.u32 [#allocation12], 4
          %s621 = int_to_ptr.vmem [resolvable:$true] %s620
          %623 = dma.hbm_to_vmem [thread:$0]  %s9, 16, %s621, [#allocation13]
        $region48: #{tpu_custom_call.1} parent=11 // pred_fallthru
          _
        // Predicated region
        $region49: #{tpu_custom_call.1} parent=11 // pred_check
          %p624 = pneg %p273
        $region50: #{tpu_custom_call.1} parent=11 // pred_check_branch
          %626 = sbr.rel (%p624) target = $region52
        $region51: #{tpu_custom_call.1} parent=11 // pred_region
          _
        $region52: #{tpu_custom_call.1} parent=11 // pred_fallthru
          _
        // Predicated region
        $region53: #{tpu_custom_call.1} parent=11 // pred_check
          %p627 = pneg %p294
        $region54: #{tpu_custom_call.1} parent=11 // pred_check_branch
          %629 = sbr.rel (%p627) target = $region56
        $region55: #{tpu_custom_call.1} parent=11 // pred_region
          _
        $region56: #{tpu_custom_call.1} parent=11 // pred_fallthru
          _
        // Predicated region
        $region57: #{tpu_custom_call.1} parent=11 // pred_check
          %p630 = pneg %p315
        $region58: #{tpu_custom_call.1} parent=11 // pred_check_branch
          %632 = sbr.rel (%p630) target = $region60
        $region59: #{tpu_custom_call.1} parent=11 // pred_region
          _
        $region60: #{tpu_custom_call.1} parent=11 // pred_fallthru
          _
        // Predicated region
        $region61: #{tpu_custom_call.1} parent=11 // pred_check
          %p633 = pneg %p336
        $region62: #{tpu_custom_call.1} parent=11 // pred_check_branch
          %635 = sbr.rel (%p633) target = $region64
        $region63: #{tpu_custom_call.1} parent=11 // pred_region
          _
        $region64: #{tpu_custom_call.1} parent=11 // pred_fallthru
          _
        // Predicated region
        $region65: #{tpu_custom_call.1} parent=11 // pred_check
          %p636 = pneg %p357
        $region66: #{tpu_custom_call.1} parent=11 // pred_check_branch
          %638 = sbr.rel (%p636) target = $region68
        $region67: #{tpu_custom_call.1} parent=11 // pred_region
          _
        $region68: #{tpu_custom_call.1} parent=11 // pred_fallthru
          _
        // Predicated region
        $region69: #{tpu_custom_call.1} parent=11 // pred_check
          %p639 = pneg %p378
        $region70: #{tpu_custom_call.1} parent=11 // pred_check_branch
          %641 = sbr.rel (%p639) target = $region72
        $region71: #{tpu_custom_call.1} parent=11 // pred_region
          _
        $region72: #{tpu_custom_call.1} parent=11 // pred_fallthru
          _
        // Predicated region
        $region73: #{tpu_custom_call.1} parent=11 // pred_check
          %p642 = pneg %p399
        $region74: #{tpu_custom_call.1} parent=11 // pred_check_branch
          %644 = sbr.rel (%p642) target = $region76
        $region75: #{tpu_custom_call.1} parent=11 // pred_region
          _
        $region76: #{tpu_custom_call.1} parent=11 // pred_fallthru
          _
        // Predicated region
        $region77: #{tpu_custom_call.1} parent=11 // pred_check
          %p645 = pneg %p420
        $region78: #{tpu_custom_call.1} parent=11 // pred_check_branch
          %647 = sbr.rel (%p645) target = $region80
        $region79: #{tpu_custom_call.1} parent=11 // pred_region
          %s649 = ssub.s32 512, 512
          %650 = vsyncadd [#allocation13], %s649
          %s651 = sshll.u32 [#allocation14], 4
          %s652 = int_to_ptr.vmem [resolvable:$true] %s651
          %657 = dma.hbm_to_vmem [thread:$0]  %s17, 512, %s652, [#allocation13], 64, 64, 4
        $region80: #{tpu_custom_call.1} parent=11 // pred_fallthru
          _
        // Predicated region
        $region81: #{tpu_custom_call.1} parent=11 // pred_check
          %p658 = pneg %p441
        $region82: #{tpu_custom_call.1} parent=11 // pred_check_branch
          %660 = sbr.rel (%p658) target = $region84
        $region83: #{tpu_custom_call.1} parent=11 // pred_region
          _
        $region84: #{tpu_custom_call.1} parent=11 // pred_fallthru
          _
        // Predicated region
        $region85: #{tpu_custom_call.1} parent=11 // pred_check
          %p661 = pneg %p462
        $region86: #{tpu_custom_call.1} parent=11 // pred_check_branch
          %663 = sbr.rel (%p661) target = $region88
        $region87: #{tpu_custom_call.1} parent=11 // pred_region
          %s665 = ssub.s32 128, 128
          %666 = vsyncadd [#allocation16], %s665
          %s667 = sshll.u32 [#allocation15], 4
          %s668 = int_to_ptr.vmem [resolvable:$true] %s667
          %673 = dma.hbm_to_vmem [thread:$0]  %s19, 128, %s668, [#allocation16], 64, 64, 4
        $region88: #{tpu_custom_call.1} parent=11 // pred_fallthru
          _
        // Predicated region
        $region89: #{tpu_custom_call.1} parent=11 // pred_check
          %p674 = pneg %p483
        $region90: #{tpu_custom_call.1} parent=11 // pred_check_branch
          %676 = sbr.rel (%p674) target = $region92
        $region91: #{tpu_custom_call.1} parent=11 // pred_region
          %s678 = ssub.s32 16, 16
          %679 = vsyncadd [#allocation16], %s678
          %s681 = sshll.u32 [#allocation17], 4
          %s682 = int_to_ptr.vmem [resolvable:$true] %s681
          %684 = dma.hbm_to_vmem [thread:$0]  %s20, 16, %s682, [#allocation16]
        $region92: #{tpu_custom_call.1} parent=11 // pred_fallthru
          _
        // Predicated region
        $region93: #{tpu_custom_call.1} parent=11 // pred_check
          %p685 = pneg %p504
        $region94: #{tpu_custom_call.1} parent=11 // pred_check_branch
          %687 = sbr.rel (%p685) target = $region96
        $region95: #{tpu_custom_call.1} parent=11 // pred_region
          %s689 = ssub.s32 16, 16
          %690 = vsyncadd [#allocation5], %s689
          %s692 = sshll.u32 %s21, 4
          %s693 = int_to_ptr.vmem [resolvable:$true] %s692
          %695 = dma.vmem_to_smem %s693, 16, [#allocation18], [#allocation5]
        $region96: #{tpu_custom_call.1} parent=11 // pred_fallthru
          _
      $region12: #{tpu_custom_call.1} parent=5 // pred_fallthru
        _
      %p696 = scmp.lt.s32.totalorder %s37, 4
      // Predicated region
      $region97: #{tpu_custom_call.1} parent=5 // pred_check
        %p697 = pneg %p696
      $region98: #{tpu_custom_call.1} parent=5 // pred_check_branch
        %699 = sbr.rel (%p697) target = $region100
      $region99: #{tpu_custom_call.1} parent=5 // pred_region
        // Predicated region
        $region101: #{tpu_custom_call.1} parent=99 // pred_check
          %p700 = pneg %p57
        $region102: #{tpu_custom_call.1} parent=99 // pred_check_branch
          %702 = sbr.rel (%p700) target = $region104
        $region103: #{tpu_custom_call.1} parent=99 // pred_region
          %s703 = smul.u32 16, %s37
          %p704 = scmp.lt.s32.totalorder %s703, 63
          %s705 = scalar_select %p704, %s703, 63
          %s706 = smul.addr %s705, 8
          %s707 = scalar_lea.vmem %s0, %s706
          %s708 = smul.u32 16, %s37
        $region104: #{tpu_custom_call.1} parent=99 // pred_fallthru
          _
      $region100: #{tpu_custom_call.1} parent=5 // pred_fallthru
        _
      %p709 = scmp.le.s32.totalorder 1, %s37
      %p710 = scmp.lt.s32.totalorder %s37, 5
      %p711 = pnand %p709, %p710
      %p712 = pneg %p711
      // Predicated region
      $region105: #{tpu_custom_call.1} parent=5 // pred_check
        _
      $region106: #{tpu_custom_call.1} parent=5 // pred_check_branch
        %714 = sbr.rel (%p711) target = $region108
      $region107: #{tpu_custom_call.1} parent=5 // pred_region
        %s715 = ssub.s32 %s37, 1
        // Predicated region
        $region109: #{tpu_custom_call.1} parent=107 // pred_check
          %p716 = pneg %p105
        $region110: #{tpu_custom_call.1} parent=107 // pred_check_branch
          %718 = sbr.rel (%p716) target = $region112
        $region111: #{tpu_custom_call.1} parent=107 // pred_region
          %719 = dma.done [#allocation3], 64
        $region112: #{tpu_custom_call.1} parent=107 // pred_fallthru
          _
        // Predicated region
        $region113: #{tpu_custom_call.1} parent=107 // pred_check
          %p720 = pneg %p126
        $region114: #{tpu_custom_call.1} parent=107 // pred_check_branch
          %722 = sbr.rel (%p720) target = $region116
        $region115: #{tpu_custom_call.1} parent=107 // pred_region
          %723 = dma.done [#allocation7], 4096
        $region116: #{tpu_custom_call.1} parent=107 // pred_fallthru
          _
        // Predicated region
        $region117: #{tpu_custom_call.1} parent=107 // pred_check
          %p724 = pneg %p147
        $region118: #{tpu_custom_call.1} parent=107 // pred_check_branch
          %726 = sbr.rel (%p724) target = $region120
        $region119: #{tpu_custom_call.1} parent=107 // pred_region
          %727 = dma.done [#allocation7], 16
        $region120: #{tpu_custom_call.1} parent=107 // pred_fallthru
          _
        // Predicated region
        $region121: #{tpu_custom_call.1} parent=107 // pred_check
          %p728 = pneg %p168
        $region122: #{tpu_custom_call.1} parent=107 // pred_check_branch
          %730 = sbr.rel (%p728) target = $region124
        $region123: #{tpu_custom_call.1} parent=107 // pred_region
          %731 = dma.done [#allocation10], 4096
        $region124: #{tpu_custom_call.1} parent=107 // pred_fallthru
          _
        // Predicated region
        $region125: #{tpu_custom_call.1} parent=107 // pred_check
          %p732 = pneg %p189
        $region126: #{tpu_custom_call.1} parent=107 // pred_check_branch
          %734 = sbr.rel (%p732) target = $region128
        $region127: #{tpu_custom_call.1} parent=107 // pred_region
          %735 = dma.done [#allocation10], 64
        $region128: #{tpu_custom_call.1} parent=107 // pred_fallthru
          _
        // Predicated region
        $region129: #{tpu_custom_call.1} parent=107 // pred_check
          %p736 = pneg %p252
        $region130: #{tpu_custom_call.1} parent=107 // pred_check_branch
          %738 = sbr.rel (%p736) target = $region132
        $region131: #{tpu_custom_call.1} parent=107 // pred_region
          %739 = dma.done [#allocation13], 16
        $region132: #{tpu_custom_call.1} parent=107 // pred_fallthru
          _
        // Predicated region
        $region133: #{tpu_custom_call.1} parent=107 // pred_check
          %p740 = pneg %p420
        $region134: #{tpu_custom_call.1} parent=107 // pred_check_branch
          %742 = sbr.rel (%p740) target = $region136
        $region135: #{tpu_custom_call.1} parent=107 // pred_region
          %743 = dma.done [#allocation13], 512
        $region136: #{tpu_custom_call.1} parent=107 // pred_fallthru
          _
        // Predicated region
        $region137: #{tpu_custom_call.1} parent=107 // pred_check
          %p744 = pneg %p462
        $region138: #{tpu_custom_call.1} parent=107 // pred_check_branch
          %746 = sbr.rel (%p744) target = $region140
        $region139: #{tpu_custom_call.1} parent=107 // pred_region
          %747 = dma.done [#allocation16], 128
        $region140: #{tpu_custom_call.1} parent=107 // pred_fallthru
          _
        // Predicated region
        $region141: #{tpu_custom_call.1} parent=107 // pred_check
          %p748 = pneg %p483
        $region142: #{tpu_custom_call.1} parent=107 // pred_check_branch
          %750 = sbr.rel (%p748) target = $region144
        $region143: #{tpu_custom_call.1} parent=107 // pred_region
          %751 = dma.done [#allocation16], 16
        $region144: #{tpu_custom_call.1} parent=107 // pred_fallthru
          _
        // Predicated region
        $region145: #{tpu_custom_call.1} parent=107 // pred_check
          %p752 = pneg %p504
        $region146: #{tpu_custom_call.1} parent=107 // pred_check_branch
          %754 = sbr.rel (%p752) target = $region148
        $region147: #{tpu_custom_call.1} parent=107 // pred_region
          %755 = dma.done [#allocation5], 16
        $region148: #{tpu_custom_call.1} parent=107 // pred_fallthru
          _
        %756 = sfence
        %s757 = smul.u32 16, %s42
        %p758 = scmp.lt.s32.totalorder %s757, 63
        %s759 = scalar_select %p758, %s757, 63
        %s760 = smul.addr %s759, 8
        %s761 = scalar_lea.vmem %s0, %s760
        %p762 = pneg %p63
        %p763 = pneg %p60
        %p764 = pneg %p84
        %p765 = pneg %p81
        %p766 = pneg %p105
        %p767 = pneg %p102
        %p768 = pneg %p126
        %p769 = pneg %p123
        %p770 = pneg %p147
        %p771 = pneg %p144
        %p772 = pneg %p168
        %p773 = pneg %p165
        %p774 = pneg %p189
        %p775 = pneg %p186
        %p776 = pneg %p210
        %p777 = pneg %p207
        %p778 = pneg %p231
        %p779 = pneg %p228
        %p780 = pneg %p252
        %p781 = pneg %p249
        %p782 = pneg %p273
        %p783 = pneg %p270
        %p784 = pneg %p294
        %p785 = pneg %p291
        %p786 = pneg %p315
        %p787 = pneg %p312
        %p788 = pneg %p336
        %p789 = pneg %p333
        %p790 = pneg %p357
        %p791 = pneg %p354
        %p792 = pneg %p378
        %p793 = pneg %p375
        %p794 = pneg %p399
        %p795 = pneg %p396
        %p796 = pneg %p420
        %p797 = pneg %p417
        %p798 = pneg %p441
        %p799 = pneg %p438
        %p800 = pneg %p462
        %p801 = pneg %p459
        %p802 = pneg %p483
        %p803 = pneg %p480
        %p804 = pneg %p504
        %p805 = pneg %p501
        %p806 = pneg %p530
        %p807 = pneg %p527
        %s808 = sand.u32 %s517, 1
        %s809 = scalar_lea.sflag [#allocation4], %s808
        %s810 = sand.u32 %s517, 1
        %s811 = scalar_lea.vmem [#allocation19], %s810
        %s812 = smul.u32 16, %s42
        %p813 = scmp.lt.s32.totalorder %s812, 63
        %s814 = scalar_select %p813, %s812, 63
        %s815 = smul.addr %s814, 8
        %s816 = scalar_lea.vmem %s0, %s815
        %s817 = smul.u32 16, %s42
        %v819 = vld [vmem:[%s816] sm:$0xff]
        %v820 = vld [vmem:[%s816 + $0x8] sm:$0xff]
        %v821 = vld [vmem:[%s816 + $0x10] sm:$0xff]
        %v822 = vld [vmem:[%s816 + $0x18] sm:$0xff]
        %v823 = vld [vmem:[%s816 + $0x20] sm:$0xff]
        %v824 = vld [vmem:[%s816 + $0x28] sm:$0xff]
        %v825 = vld [vmem:[%s816 + $0x30] sm:$0xff]
        %v826 = vld [vmem:[%s816 + $0x38] sm:$0xff]
        %v827 = vld [vmem:[%s816 + $0x40] sm:$0xff]
        %v828 = vld [vmem:[%s816 + $0x48] sm:$0xff]
        %v829 = vld [vmem:[%s816 + $0x50] sm:$0xff]
        %v830 = vld [vmem:[%s816 + $0x58] sm:$0xff]
        %v831 = vld [vmem:[%s816 + $0x60] sm:$0xff]
        %v832 = vld [vmem:[%s816 + $0x68] sm:$0xff]
        %v833 = vld [vmem:[%s816 + $0x70] sm:$0xff]
        %v834 = vld [vmem:[%s816 + $0x78] sm:$0xff]
        %v835 = vpack.c.bf16 %v820, %v819
        %v836 = vpack.c.bf16 %v822, %v821
        %v837 = vpack.c.bf16 %v824, %v823
        %v838 = vpack.c.bf16 %v826, %v825
        %v839 = vpack.c.bf16 %v828, %v827
        %v840 = vpack.c.bf16 %v830, %v829
        %v841 = vpack.c.bf16 %v832, %v831
        %v842 = vpack.c.bf16 %v834, %v833
        %v843 = vld [vmem:[#allocation2] sm:$0xf]
        %v844 = vld [vmem:[%s1] sm:$0xff]
        %v845 = vld [vmem:[%s1 + $0x8] sm:$0xff]
        %v846 = vld [vmem:[%s1 + $0x10] sm:$0x11]
        %v847 = vld [vmem:[%s1 + $0x18] sm:$0x11]
        %v849 = vlaneseq
        %v850 = vshrl.u32 %v849, 7
        %v851 = vsub.s32 0, %v850
        %v852 = vrot.slane %v843, %v851
        %v853 = vlaneseq
        %v854 = vshrl.u32 %v853, 7
        %v855 = vsub.s32 1, %v854
        %v856 = vrot.slane %v843, %v855
        %v857 = vlaneseq
        %v858 = vshrl.u32 %v857, 7
        %v859 = vsub.s32 2, %v858
        %v860 = vrot.slane %v843, %v859
        %v861 = vlaneseq
        %v862 = vshrl.u32 %v861, 7
        %v863 = vsub.s32 3, %v862
        %v864 = vrot.slane %v843, %v863
        %v873 = vunpack.c.l.b16 %v844
        %v874 = vunpack.c.h.b16 %v844
        %v875 = vunpack.c.l.b16 %v845
        %v876 = vunpack.c.h.b16 %v845
        %v877 = vunpack.c.l.b16 %v846
        %v878 = vunpack.c.h.b16 %v846
        %v879 = vunpack.c.l.b16 %v847
        %v880 = vunpack.c.h.b16 %v847
        %v881 = vpack.c.b16 %v877, %v873
        %v882 = vpack.c.b16 %v878, %v874
        %v883 = vpack.c.b16 %v879, %v875
        %v884 = vpack.c.b16 %v880, %v876
        %vm885 = vcmask 80896
        %v887 = vsel %vm885, %v835, 0
        %v890 = vsel %vm885, %v836, 0
        %v893 = vsel %vm885, %v837, 0
        %v896 = vsel %vm885, %v838, 0
        %v899 = vsel %vm885, %v839, 0
        %v902 = vsel %vm885, %v840, 0
        %v905 = vsel %vm885, %v841, 0
        %v908 = vsel %vm885, %v842, 0
        %vm910 = vcmask 1044480
        %v912 = vsel %vm910, %v881, 0
        %v915 = vsel %vm910, %v882, 0
        %v918 = vsel %vm910, %v883, 0
        %v921 = vsel %vm910, %v884, 0
        %923 = vmatprep.subr.bf16.mxu0 %v915
        %924 = vmatpush1.bf16.msra.mxu0 %v912
        %925 = vmatprep.subr.bf16.mxu0 0
        %926 = vmatpush1.bf16.msra.mxu0 0
        %927 = vmatprep.subr.bf16.mxu0 0
        %928 = vmatpush1.bf16.msra.mxu0 0
        %929 = vmatprep.subr.bf16.mxu0 0
        %930 = vmatpush1.bf16.msra.mxu0 0
        %931 = vmatprep.subr.bf16.mxu0 0
        %932 = vmatpush1.bf16.msra.mxu0 0
        %933 = vmatprep.subr.bf16.mxu0 0
        %934 = vmatpush1.bf16.msra.mxu0 0
        %935 = vmatprep.subr.bf16.mxu0 0
        %936 = vmatpush1.bf16.msra.mxu0 0
        %937 = vmatprep.subr.bf16.mxu0 0
        %938 = vmatpush1.bf16.msra.mxu0 0
        %939 = vmatprep.subr.bf16.mxu0 0
        %940 = vmatpush1.bf16.msra.mxu0 0
        %941 = vmatprep.subr.bf16.mxu0 0
        %942 = vmatpush1.bf16.msra.mxu0 0
        %943 = vmatprep.subr.bf16.mxu0 0
        %944 = vmatpush1.bf16.msra.mxu0 0
        %945 = vmatprep.subr.bf16.mxu0 0
        %946 = vmatpush1.bf16.msra.mxu0 0
        %947 = vmatprep.subr.bf16.mxu0 0
        %948 = vmatpush1.bf16.msra.mxu0 0
        %949 = vmatprep.subr.bf16.mxu0 0
        %950 = vmatpush1.bf16.msra.mxu0 0
        %951 = vmatprep.subr.bf16.mxu0 0
        %952 = vmatpush1.bf16.msra.mxu0 0
        %953 = vmatprep.subr.bf16.mxu0 0
        %954 = vmatpush1.bf16.msra.mxu0 0
        %955 = vmatprep.mubr.bf16.mxu0 0
        %956 = vmatmul.mubr.bf16.gmra.mrb[0].mxu0 %v887
        %v957 = vpop.f32.mrb[0].mxu0
        %v958 = vadd.f32 %v852, %v957
        %v959 = vpop.f32.mrb[0].mxu0
        %v960 = vadd.f32 %v856, %v959
        %v961 = vpop.f32.mrb[0].mxu0
        %v962 = vadd.f32 %v852, %v961
        %v963 = vpop.f32.mrb[0].mxu0
        %v964 = vadd.f32 %v856, %v963
        %965 = vmatprep.mubr.bf16.mxu0 0
        %966 = vmatmul.mubr.bf16.gmra.mrb[0].mxu0 %v890
        %v967 = vpop.f32.mrb[0].mxu0
        %v968 = vadd.f32 %v852, %v967
        %v969 = vpop.f32.mrb[0].mxu0
        %v970 = vadd.f32 %v856, %v969
        %v971 = vpop.f32.mrb[0].mxu0
        %v972 = vadd.f32 %v852, %v971
        %v973 = vpop.f32.mrb[0].mxu0
        %v974 = vadd.f32 %v856, %v973
        %975 = vmatprep.mubr.bf16.mxu0 0
        %976 = vmatmul.mubr.bf16.gmra.mrb[0].mxu0 %v893
        %v977 = vpop.f32.mrb[0].mxu0
        %v978 = vadd.f32 %v852, %v977
        %v979 = vpop.f32.mrb[0].mxu0
        %v980 = vadd.f32 %v856, %v979
        %v981 = vpop.f32.mrb[0].mxu0
        %v982 = vadd.f32 %v852, %v981
        %v983 = vpop.f32.mrb[0].mxu0
        %v984 = vadd.f32 %v856, %v983
        %985 = vmatprep.mubr.bf16.mxu0 0
        %986 = vmatmul.mubr.bf16.gmra.mrb[0].mxu0 %v896
        %v987 = vpop.f32.mrb[0].mxu0
        %v988 = vadd.f32 %v852, %v987
        %v989 = vpop.f32.mrb[0].mxu0
        %v990 = vadd.f32 %v856, %v989
        %v991 = vpop.f32.mrb[0].mxu0
        %v992 = vadd.f32 %v852, %v991
        %v993 = vpop.f32.mrb[0].mxu0
        %v994 = vadd.f32 %v856, %v993
        %995 = vmatprep.mubr.bf16.mxu0 0
        %996 = vmatmul.mubr.bf16.gmra.mrb[0].mxu0 %v899
        %v997 = vpop.f32.mrb[0].mxu0
        %v998 = vadd.f32 %v852, %v997
        %v999 = vpop.f32.mrb[0].mxu0
        %v1000 = vadd.f32 %v856, %v999
        %v1001 = vpop.f32.mrb[0].mxu0
        %v1002 = vadd.f32 %v852, %v1001
        %v1003 = vpop.f32.mrb[0].mxu0
        %v1004 = vadd.f32 %v856, %v1003
        %1005 = vmatprep.mubr.bf16.mxu0 0
        %1006 = vmatmul.mubr.bf16.gmra.mrb[0].mxu0 %v902
        %v1007 = vpop.f32.mrb[0].mxu0
        %v1008 = vadd.f32 %v852, %v1007
        %v1009 = vpop.f32.mrb[0].mxu0
        %v1010 = vadd.f32 %v856, %v1009
        %v1011 = vpop.f32.mrb[0].mxu0
        %v1012 = vadd.f32 %v852, %v1011
        %v1013 = vpop.f32.mrb[0].mxu0
        %v1014 = vadd.f32 %v856, %v1013
        %1015 = vmatprep.mubr.bf16.mxu0 0
        %1016 = vmatmul.mubr.bf16.gmra.mrb[0].mxu0 %v905
        %v1017 = vpop.f32.mrb[0].mxu0
        %v1018 = vadd.f32 %v852, %v1017
        %v1019 = vpop.f32.mrb[0].mxu0
        %v1020 = vadd.f32 %v856, %v1019
        %v1021 = vpop.f32.mrb[0].mxu0
        %v1022 = vadd.f32 %v852, %v1021
        %v1023 = vpop.f32.mrb[0].mxu0
        %v1024 = vadd.f32 %v856, %v1023
        %1025 = vmatprep.mubr.bf16.mxu0 0
        %1026 = vmatmul.mubr.bf16.gmra.mrb[0].mxu0 %v908
        %v1027 = vpop.f32.mrb[0].mxu0
        %v1028 = vadd.f32 %v852, %v1027
        %v1029 = vpop.f32.mrb[0].mxu0
        %v1030 = vadd.f32 %v856, %v1029
        %v1031 = vpop.f32.mrb[0].mxu0
        %v1032 = vadd.f32 %v852, %v1031
        %v1033 = vpop.f32.mrb[0].mxu0
        %v1034 = vadd.f32 %v856, %v1033
        %1035 = vdwg.mxu0
        %1036 = vmatprep.subr.bf16.mxu0 %v921
        %1037 = vmatpush1.bf16.msra.mxu0 %v918
        %1038 = vmatprep.subr.bf16.mxu0 0
        %1039 = vmatpush1.bf16.msra.mxu0 0
        %1040 = vmatprep.subr.bf16.mxu0 0
        %1041 = vmatpush1.bf16.msra.mxu0 0
        %1042 = vmatprep.subr.bf16.mxu0 0
        %1043 = vmatpush1.bf16.msra.mxu0 0
        %1044 = vmatprep.subr.bf16.mxu0 0
        %1045 = vmatpush1.bf16.msra.mxu0 0
        %1046 = vmatprep.subr.bf16.mxu0 0
        %1047 = vmatpush1.bf16.msra.mxu0 0
        %1048 = vmatprep.subr.bf16.mxu0 0
        %1049 = vmatpush1.bf16.msra.mxu0 0
        %1050 = vmatprep.subr.bf16.mxu0 0
        %1051 = vmatpush1.bf16.msra.mxu0 0
        %1052 = vmatprep.subr.bf16.mxu0 0
        %1053 = vmatpush1.bf16.msra.mxu0 0
        %1054 = vmatprep.subr.bf16.mxu0 0
        %1055 = vmatpush1.bf16.msra.mxu0 0
        %1056 = vmatprep.subr.bf16.mxu0 0
        %1057 = vmatpush1.bf16.msra.mxu0 0
        %1058 = vmatprep.subr.bf16.mxu0 0
        %1059 = vmatpush1.bf16.msra.mxu0 0
        %1060 = vmatprep.subr.bf16.mxu0 0
        %1061 = vmatpush1.bf16.msra.mxu0 0
        %1062 = vmatprep.subr.bf16.mxu0 0
        %1063 = vmatpush1.bf16.msra.mxu0 0
        %1064 = vmatprep.subr.bf16.mxu0 0
        %1065 = vmatpush1.bf16.msra.mxu0 0
        %1066 = vmatprep.subr.bf16.mxu0 0
        %1067 = vmatpush1.bf16.msra.mxu0 0
        %1068 = vmatprep.mubr.bf16.mxu0 0
        %1069 = vmatmul.mubr.bf16.gmra.mrb[0].mxu0 %v887
        %v1070 = vpop.f32.mrb[0].mxu0
        %v1071 = vadd.f32 %v860, %v1070
        %v1072 = vpop.f32.mrb[0].mxu0
        %v1073 = vadd.f32 %v864, %v1072
        %v1074 = vpop.f32.mrb[0].mxu0
        %v1075 = vadd.f32 %v860, %v1074
        %v1076 = vpop.f32.mrb[0].mxu0
        %v1077 = vadd.f32 %v864, %v1076
        %1078 = vmatprep.mubr.bf16.mxu0 0
        %1079 = vmatmul.mubr.bf16.gmra.mrb[0].mxu0 %v890
        %v1080 = vpop.f32.mrb[0].mxu0
        %v1081 = vadd.f32 %v860, %v1080
        %v1082 = vpop.f32.mrb[0].mxu0
        %v1083 = vadd.f32 %v864, %v1082
        %v1084 = vpop.f32.mrb[0].mxu0
        %v1085 = vadd.f32 %v860, %v1084
        %v1086 = vpop.f32.mrb[0].mxu0
        %v1087 = vadd.f32 %v864, %v1086
        %1088 = vmatprep.mubr.bf16.mxu0 0
        %1089 = vmatmul.mubr.bf16.gmra.mrb[0].mxu0 %v893
        %v1090 = vpop.f32.mrb[0].mxu0
        %v1091 = vadd.f32 %v860, %v1090
        %v1092 = vpop.f32.mrb[0].mxu0
        %v1093 = vadd.f32 %v864, %v1092
        %v1094 = vpop.f32.mrb[0].mxu0
        %v1095 = vadd.f32 %v860, %v1094
        %v1096 = vpop.f32.mrb[0].mxu0
        %v1097 = vadd.f32 %v864, %v1096
        %1098 = vmatprep.mubr.bf16.mxu0 0
        %1099 = vmatmul.mubr.bf16.gmra.mrb[0].mxu0 %v896
        %v1100 = vpop.f32.mrb[0].mxu0
        %v1101 = vadd.f32 %v860, %v1100
        %v1102 = vpop.f32.mrb[0].mxu0
        %v1103 = vadd.f32 %v864, %v1102
        %v1104 = vpop.f32.mrb[0].mxu0
        %v1105 = vadd.f32 %v860, %v1104
        %v1106 = vpop.f32.mrb[0].mxu0
        %v1107 = vadd.f32 %v864, %v1106
        %1108 = vmatprep.mubr.bf16.mxu0 0
        %1109 = vmatmul.mubr.bf16.gmra.mrb[0].mxu0 %v899
        %v1110 = vpop.f32.mrb[0].mxu0
        %v1111 = vadd.f32 %v860, %v1110
        %v1112 = vpop.f32.mrb[0].mxu0
        %v1113 = vadd.f32 %v864, %v1112
        %v1114 = vpop.f32.mrb[0].mxu0
        %v1115 = vadd.f32 %v860, %v1114
        %v1116 = vpop.f32.mrb[0].mxu0
        %v1117 = vadd.f32 %v864, %v1116
        %1118 = vmatprep.mubr.bf16.mxu0 0
        %1119 = vmatmul.mubr.bf16.gmra.mrb[0].mxu0 %v902
        %v1120 = vpop.f32.mrb[0].mxu0
        %v1121 = vadd.f32 %v860, %v1120
        %v1122 = vpop.f32.mrb[0].mxu0
        %v1123 = vadd.f32 %v864, %v1122
        %v1124 = vpop.f32.mrb[0].mxu0
        %v1125 = vadd.f32 %v860, %v1124
        %v1126 = vpop.f32.mrb[0].mxu0
        %v1127 = vadd.f32 %v864, %v1126
        %1128 = vmatprep.mubr.bf16.mxu0 0
        %1129 = vmatmul.mubr.bf16.gmra.mrb[0].mxu0 %v905
        %v1130 = vpop.f32.mrb[0].mxu0
        %v1131 = vadd.f32 %v860, %v1130
        %v1132 = vpop.f32.mrb[0].mxu0
        %v1133 = vadd.f32 %v864, %v1132
        %v1134 = vpop.f32.mrb[0].mxu0
        %v1135 = vadd.f32 %v860, %v1134
        %v1136 = vpop.f32.mrb[0].mxu0
        %v1137 = vadd.f32 %v864, %v1136
        %1138 = vmatprep.mubr.bf16.mxu0 0
        %1139 = vmatmul.mubr.bf16.gmra.mrb[0].mxu0 %v908
        %v1140 = vpop.f32.mrb[0].mxu0
        %v1141 = vadd.f32 %v860, %v1140
        %v1142 = vpop.f32.mrb[0].mxu0
        %v1143 = vadd.f32 %v864, %v1142
        %v1144 = vpop.f32.mrb[0].mxu0
        %v1145 = vadd.f32 %v860, %v1144
        %v1146 = vpop.f32.mrb[0].mxu0
        %v1147 = vadd.f32 %v864, %v1146
        %1148 = vdwg.mxu0
        %v1149 = vmax.f32 %v958, 0.0
        %v1150 = vmax.f32 %v960, 0.0
        %v1151 = vmax.f32 %v1071, 0.0
        %v1152 = vmax.f32 %v1073, 0.0
        %v1153 = vmax.f32 %v962, 0.0
        %v1154 = vmax.f32 %v964, 0.0
        %v1155 = vmax.f32 %v1075, 0.0
        %v1156 = vmax.f32 %v1077, 0.0
        %v1157 = vmax.f32 %v968, 0.0
        %v1158 = vmax.f32 %v970, 0.0
        %v1159 = vmax.f32 %v1081, 0.0
        %v1160 = vmax.f32 %v1083, 0.0
        %v1161 = vmax.f32 %v972, 0.0
        %v1162 = vmax.f32 %v974, 0.0
        %v1163 = vmax.f32 %v1085, 0.0
        %v1164 = vmax.f32 %v1087, 0.0
        %v1165 = vmax.f32 %v978, 0.0
        %v1166 = vmax.f32 %v980, 0.0
        %v1167 = vmax.f32 %v1091, 0.0
        %v1168 = vmax.f32 %v1093, 0.0
        %v1169 = vmax.f32 %v982, 0.0
        %v1170 = vmax.f32 %v984, 0.0
        %v1171 = vmax.f32 %v1095, 0.0
        %v1172 = vmax.f32 %v1097, 0.0
        %v1173 = vmax.f32 %v988, 0.0
        %v1174 = vmax.f32 %v990, 0.0
        %v1175 = vmax.f32 %v1101, 0.0
        %v1176 = vmax.f32 %v1103, 0.0
        %v1177 = vmax.f32 %v992, 0.0
        %v1178 = vmax.f32 %v994, 0.0
        %v1179 = vmax.f32 %v1105, 0.0
        %v1180 = vmax.f32 %v1107, 0.0
        %v1181 = vmax.f32 %v998, 0.0
        %v1182 = vmax.f32 %v1000, 0.0
        %v1183 = vmax.f32 %v1111, 0.0
        %v1184 = vmax.f32 %v1113, 0.0
        %v1185 = vmax.f32 %v1002, 0.0
        %v1186 = vmax.f32 %v1004, 0.0
        %v1187 = vmax.f32 %v1115, 0.0
        %v1188 = vmax.f32 %v1117, 0.0
        %v1189 = vmax.f32 %v1008, 0.0
        %v1190 = vmax.f32 %v1010, 0.0
        %v1191 = vmax.f32 %v1121, 0.0
        %v1192 = vmax.f32 %v1123, 0.0
        %v1193 = vmax.f32 %v1012, 0.0
        %v1194 = vmax.f32 %v1014, 0.0
        %v1195 = vmax.f32 %v1125, 0.0
        %v1196 = vmax.f32 %v1127, 0.0
        %v1197 = vmax.f32 %v1018, 0.0
        %v1198 = vmax.f32 %v1020, 0.0
        %v1199 = vmax.f32 %v1131, 0.0
        %v1200 = vmax.f32 %v1133, 0.0
        %v1201 = vmax.f32 %v1022, 0.0
        %v1202 = vmax.f32 %v1024, 0.0
        %v1203 = vmax.f32 %v1135, 0.0
        %v1204 = vmax.f32 %v1137, 0.0
        %v1205 = vmax.f32 %v1028, 0.0
        %v1206 = vmax.f32 %v1030, 0.0
        %v1207 = vmax.f32 %v1141, 0.0
        %v1208 = vmax.f32 %v1143, 0.0
        %v1209 = vmax.f32 %v1032, 0.0
        %v1210 = vmax.f32 %v1034, 0.0
        %v1211 = vmax.f32 %v1145, 0.0
        %v1212 = vmax.f32 %v1147, 0.0
        %v1213 = vpack.c.bf16 %v1153, %v1149
        %v1214 = vpack.c.bf16 %v1154, %v1150
        %v1215 = vpack.c.bf16 %v1155, %v1151
        %v1216 = vpack.c.bf16 %v1156, %v1152
        %v1217 = vpack.c.bf16 %v1161, %v1157
        %v1218 = vpack.c.bf16 %v1162, %v1158
        %v1219 = vpack.c.bf16 %v1163, %v1159
        %v1220 = vpack.c.bf16 %v1164, %v1160
        %v1221 = vpack.c.bf16 %v1169, %v1165
        %v1222 = vpack.c.bf16 %v1170, %v1166
        %v1223 = vpack.c.bf16 %v1171, %v1167
        %v1224 = vpack.c.bf16 %v1172, %v1168
        %v1225 = vpack.c.bf16 %v1177, %v1173
        %v1226 = vpack.c.bf16 %v1178, %v1174
        %v1227 = vpack.c.bf16 %v1179, %v1175
        %v1228 = vpack.c.bf16 %v1180, %v1176
        %v1229 = vpack.c.bf16 %v1185, %v1181
        %v1230 = vpack.c.bf16 %v1186, %v1182
        %v1231 = vpack.c.bf16 %v1187, %v1183
        %v1232 = vpack.c.bf16 %v1188, %v1184
        %v1233 = vpack.c.bf16 %v1193, %v1189
        %v1234 = vpack.c.bf16 %v1194, %v1190
        %v1235 = vpack.c.bf16 %v1195, %v1191
        %v1236 = vpack.c.bf16 %v1196, %v1192
        %v1237 = vpack.c.bf16 %v1201, %v1197
        %v1238 = vpack.c.bf16 %v1202, %v1198
        %v1239 = vpack.c.bf16 %v1203, %v1199
        %v1240 = vpack.c.bf16 %v1204, %v1200
        %v1241 = vpack.c.bf16 %v1209, %v1205
        %v1242 = vpack.c.bf16 %v1210, %v1206
        %v1243 = vpack.c.bf16 %v1211, %v1207
        %v1244 = vpack.c.bf16 %v1212, %v1208
        %v1245 = vld [vmem:[#allocation8] sm:$0x1]
        %v1246 = vld [vmem:[#allocation6] sm:$0xf]
        %v1247 = vld [vmem:[#allocation6 + $0x4] sm:$0xf]
        %v1248 = vld [vmem:[#allocation6 + $0x8] sm:$0xf]
        %v1249 = vld [vmem:[#allocation6 + $0xc] sm:$0xf]
        %v1250 = vld [vmem:[#allocation6 + $0x10] sm:$0xf]
        %v1251 = vld [vmem:[#allocation6 + $0x14] sm:$0xf]
        %v1252 = vld [vmem:[#allocation6 + $0x18] sm:$0xf]
        %v1253 = vld [vmem:[#allocation6 + $0x1c] sm:$0xf]
        %v1254 = vld [vmem:[#allocation6 + $0x20] sm:$0xf]
        %v1255 = vld [vmem:[#allocation6 + $0x24] sm:$0xf]
        %v1256 = vld [vmem:[#allocation6 + $0x28] sm:$0xf]
        %v1257 = vld [vmem:[#allocation6 + $0x2c] sm:$0xf]
        %v1258 = vld [vmem:[#allocation6 + $0x30] sm:$0xf]
        %v1259 = vld [vmem:[#allocation6 + $0x34] sm:$0xf]
        %v1260 = vld [vmem:[#allocation6 + $0x38] sm:$0xf]
        %v1261 = vld [vmem:[#allocation6 + $0x3c] sm:$0xf]
        %v1262 = vld [vmem:[#allocation6 + $0x40] sm:$0xf]
        %v1263 = vld [vmem:[#allocation6 + $0x44] sm:$0xf]
        %v1264 = vld [vmem:[#allocation6 + $0x48] sm:$0xf]
        %v1265 = vld [vmem:[#allocation6 + $0x4c] sm:$0xf]
        %v1266 = vld [vmem:[#allocation6 + $0x50] sm:$0xf]
        %v1267 = vld [vmem:[#allocation6 + $0x54] sm:$0xf]
        %v1268 = vld [vmem:[#allocation6 + $0x58] sm:$0xf]
        %v1269 = vld [vmem:[#allocation6 + $0x5c] sm:$0xf]
        %v1270 = vld [vmem:[#allocation6 + $0x60] sm:$0xf]
        %v1271 = vld [vmem:[#allocation6 + $0x64] sm:$0xf]
        %v1272 = vld [vmem:[#allocation6 + $0x68] sm:$0xf]
        %v1273 = vld [vmem:[#allocation6 + $0x6c] sm:$0xf]
        %v1274 = vld [vmem:[#allocation6 + $0x70] sm:$0xf]
        %v1275 = vld [vmem:[#allocation6 + $0x74] sm:$0xf]
        %v1276 = vld [vmem:[#allocation6 + $0x78] sm:$0xf]
        %v1277 = vld [vmem:[#allocation6 + $0x7c] sm:$0xf]
        %v1278 = vld [vmem:[#allocation6 + $0x80] sm:$0xf]
        %v1279 = vld [vmem:[#allocation6 + $0x84] sm:$0xf]
        %v1280 = vld [vmem:[#allocation6 + $0x88] sm:$0xf]
        %v1281 = vld [vmem:[#allocation6 + $0x8c] sm:$0xf]
        %v1282 = vld [vmem:[#allocation6 + $0x90] sm:$0xf]
        %v1283 = vld [vmem:[#allocation6 + $0x94] sm:$0xf]
        %v1284 = vld [vmem:[#allocation6 + $0x98] sm:$0xf]
        %v1285 = vld [vmem:[#allocation6 + $0x9c] sm:$0xf]
        %v1286 = vld [vmem:[#allocation6 + $0xa0] sm:$0xf]
        %v1287 = vld [vmem:[#allocation6 + $0xa4] sm:$0xf]
        %v1288 = vld [vmem:[#allocation6 + $0xa8] sm:$0xf]
        %v1289 = vld [vmem:[#allocation6 + $0xac] sm:$0xf]
        %v1290 = vld [vmem:[#allocation6 + $0xb0] sm:$0xf]
        %v1291 = vld [vmem:[#allocation6 + $0xb4] sm:$0xf]
        %v1292 = vld [vmem:[#allocation6 + $0xb8] sm:$0xf]
        %v1293 = vld [vmem:[#allocation6 + $0xbc] sm:$0xf]
        %v1294 = vld [vmem:[#allocation6 + $0xc0] sm:$0xf]
        %v1295 = vld [vmem:[#allocation6 + $0xc4] sm:$0xf]
        %v1296 = vld [vmem:[#allocation6 + $0xc8] sm:$0xf]
        %v1297 = vld [vmem:[#allocation6 + $0xcc] sm:$0xf]
        %v1298 = vld [vmem:[#allocation6 + $0xd0] sm:$0xf]
        %v1299 = vld [vmem:[#allocation6 + $0xd4] sm:$0xf]
        %v1300 = vld [vmem:[#allocation6 + $0xd8] sm:$0xf]
        %v1301 = vld [vmem:[#allocation6 + $0xdc] sm:$0xf]
        %v1302 = vld [vmem:[#allocation6 + $0xe0] sm:$0xf]
        %v1303 = vld [vmem:[#allocation6 + $0xe4] sm:$0xf]
        %v1304 = vld [vmem:[#allocation6 + $0xe8] sm:$0xf]
        %v1305 = vld [vmem:[#allocation6 + $0xec] sm:$0xf]
        %v1306 = vld [vmem:[#allocation6 + $0xf0] sm:$0xf]
        %v1307 = vld [vmem:[#allocation6 + $0xf4] sm:$0xf]
        %v1308 = vld [vmem:[#allocation6 + $0xf8] sm:$0xf]
        %v1309 = vld [vmem:[#allocation6 + $0xfc] sm:$0xf]
        %v1311 = vlaneseq
        %v1312 = vshrl.u32 %v1311, 7
        %v1313 = vsub.s32 0, %v1312
        %v1314 = vrot.slane %v1245, %v1313
        %v1380 = vunpack.c.l.b16 %v1246
        %v1381 = vunpack.c.l.b16 %v1247
        %v1382 = vunpack.c.l.b16 %v1248
        %v1383 = vunpack.c.l.b16 %v1249
        %v1384 = vunpack.c.l.b16 %v1250
        %v1385 = vunpack.c.l.b16 %v1251
        %v1386 = vunpack.c.l.b16 %v1252
        %v1387 = vunpack.c.l.b16 %v1253
        %v1388 = vunpack.c.l.b16 %v1254
        %v1389 = vunpack.c.l.b16 %v1255
        %v1390 = vunpack.c.l.b16 %v1256
        %v1391 = vunpack.c.l.b16 %v1257
        %v1392 = vunpack.c.l.b16 %v1258
        %v1393 = vunpack.c.l.b16 %v1259
        %v1394 = vunpack.c.l.b16 %v1260
        %v1395 = vunpack.c.l.b16 %v1261
        %v1396 = vunpack.c.l.b16 %v1262
        %v1397 = vunpack.c.l.b16 %v1263
        %v1398 = vunpack.c.l.b16 %v1264
        %v1399 = vunpack.c.l.b16 %v1265
        %v1400 = vunpack.c.l.b16 %v1266
        %v1401 = vunpack.c.l.b16 %v1267
        %v1402 = vunpack.c.l.b16 %v1268
        %v1403 = vunpack.c.l.b16 %v1269
        %v1404 = vunpack.c.l.b16 %v1270
        %v1405 = vunpack.c.l.b16 %v1271
        %v1406 = vunpack.c.l.b16 %v1272
        %v1407 = vunpack.c.l.b16 %v1273
        %v1408 = vunpack.c.l.b16 %v1274
        %v1409 = vunpack.c.l.b16 %v1275
        %v1410 = vunpack.c.l.b16 %v1276
        %v1411 = vunpack.c.l.b16 %v1277
        %v1412 = vunpack.c.l.b16 %v1278
        %v1413 = vunpack.c.l.b16 %v1279
        %v1414 = vunpack.c.l.b16 %v1280
        %v1415 = vunpack.c.l.b16 %v1281
        %v1416 = vunpack.c.l.b16 %v1282
        %v1417 = vunpack.c.l.b16 %v1283
        %v1418 = vunpack.c.l.b16 %v1284
        %v1419 = vunpack.c.l.b16 %v1285
        %v1420 = vunpack.c.l.b16 %v1286
        %v1421 = vunpack.c.l.b16 %v1287
        %v1422 = vunpack.c.l.b16 %v1288
        %v1423 = vunpack.c.l.b16 %v1289
        %v1424 = vunpack.c.l.b16 %v1290
        %v1425 = vunpack.c.l.b16 %v1291
        %v1426 = vunpack.c.l.b16 %v1292
        %v1427 = vunpack.c.l.b16 %v1293
        %v1428 = vunpack.c.l.b16 %v1294
        %v1429 = vunpack.c.l.b16 %v1295
        %v1430 = vunpack.c.l.b16 %v1296
        %v1431 = vunpack.c.l.b16 %v1297
        %v1432 = vunpack.c.l.b16 %v1298
        %v1433 = vunpack.c.l.b16 %v1299
        %v1434 = vunpack.c.l.b16 %v1300
        %v1435 = vunpack.c.l.b16 %v1301
        %v1436 = vunpack.c.l.b16 %v1302
        %v1437 = vunpack.c.l.b16 %v1303
        %v1438 = vunpack.c.l.b16 %v1304
        %v1439 = vunpack.c.l.b16 %v1305
        %v1440 = vunpack.c.l.b16 %v1306
        %v1441 = vunpack.c.l.b16 %v1307
        %v1442 = vunpack.c.l.b16 %v1308
        %v1443 = vunpack.c.l.b16 %v1309
        %v1444 = vpack.c.b16 %v1381, %v1380
        %v1445 = vpack.c.b16 %v1383, %v1382
        %v1446 = vpack.c.b16 %v1385, %v1384
        %v1447 = vpack.c.b16 %v1387, %v1386
        %v1448 = vpack.c.b16 %v1389, %v1388
        %v1449 = vpack.c.b16 %v1391, %v1390
        %v1450 = vpack.c.b16 %v1393, %v1392
        %v1451 = vpack.c.b16 %v1395, %v1394
        %v1452 = vpack.c.b16 %v1397, %v1396
        %v1453 = vpack.c.b16 %v1399, %v1398
        %v1454 = vpack.c.b16 %v1401, %v1400
        %v1455 = vpack.c.b16 %v1403, %v1402
        %v1456 = vpack.c.b16 %v1405, %v1404
        %v1457 = vpack.c.b16 %v1407, %v1406
        %v1458 = vpack.c.b16 %v1409, %v1408
        %v1459 = vpack.c.b16 %v1411, %v1410
        %v1460 = vpack.c.b16 %v1413, %v1412
        %v1461 = vpack.c.b16 %v1415, %v1414
        %v1462 = vpack.c.b16 %v1417, %v1416
        %v1463 = vpack.c.b16 %v1419, %v1418
        %v1464 = vpack.c.b16 %v1421, %v1420
        %v1465 = vpack.c.b16 %v1423, %v1422
        %v1466 = vpack.c.b16 %v1425, %v1424
        %v1467 = vpack.c.b16 %v1427, %v1426
        %v1468 = vpack.c.b16 %v1429, %v1428
        %v1469 = vpack.c.b16 %v1431, %v1430
        %v1470 = vpack.c.b16 %v1433, %v1432
        %v1471 = vpack.c.b16 %v1435, %v1434
        %v1472 = vpack.c.b16 %v1437, %v1436
        %v1473 = vpack.c.b16 %v1439, %v1438
        %v1474 = vpack.c.b16 %v1441, %v1440
        %v1475 = vpack.c.b16 %v1443, %v1442
        %1508 = vmatprep.subr.bf16.mxu0 0
        %1509 = vmatpush1.bf16.msra.mxu0 %v1444
        %1510 = vmatprep.subr.bf16.mxu0 0
        %1511 = vmatpush1.bf16.msra.mxu0 %v1445
        %1512 = vmatprep.subr.bf16.mxu0 0
        %1513 = vmatpush1.bf16.msra.mxu0 %v1446
        %1514 = vmatprep.subr.bf16.mxu0 0
        %1515 = vmatpush1.bf16.msra.mxu0 %v1447
        %1516 = vmatprep.subr.bf16.mxu0 0
        %1517 = vmatpush1.bf16.msra.mxu0 %v1448
        %1518 = vmatprep.subr.bf16.mxu0 0
        %1519 = vmatpush1.bf16.msra.mxu0 %v1449
        %1520 = vmatprep.subr.bf16.mxu0 0
        %1521 = vmatpush1.bf16.msra.mxu0 %v1450
        %1522 = vmatprep.subr.bf16.mxu0 0
        %1523 = vmatpush1.bf16.msra.mxu0 %v1451
        %1524 = vmatprep.subr.bf16.mxu0 0
        %1525 = vmatpush1.bf16.msra.mxu0 %v1452
        %1526 = vmatprep.subr.bf16.mxu0 0
        %1527 = vmatpush1.bf16.msra.mxu0 %v1453
        %1528 = vmatprep.subr.bf16.mxu0 0
        %1529 = vmatpush1.bf16.msra.mxu0 %v1454
        %1530 = vmatprep.subr.bf16.mxu0 0
        %1531 = vmatpush1.bf16.msra.mxu0 %v1455
        %1532 = vmatprep.subr.bf16.mxu0 0
        %1533 = vmatpush1.bf16.msra.mxu0 %v1456
        %1534 = vmatprep.subr.bf16.mxu0 0
        %1535 = vmatpush1.bf16.msra.mxu0 %v1457
        %1536 = vmatprep.subr.bf16.mxu0 0
        %1537 = vmatpush1.bf16.msra.mxu0 %v1458
        %1538 = vmatprep.subr.bf16.mxu0 0
        %1539 = vmatpush1.bf16.msra.mxu0 %v1459
        %1540 = vmatprep.mubr.bf16.mxu0 %v1214
        %1541 = vmatmul.mubr.bf16.gmra.mrb[0].mxu0 %v1213
        %v1542 = vpop.f32.mrb[0].mxu0
        %v1543 = vadd.f32 %v1314, %v1542
        %v1544 = vpop.f32.mrb[0].mxu0
        %v1545 = vpop.f32.mrb[0].mxu0
        %v1546 = vadd.f32 %v1314, %v1545
        %v1547 = vpop.f32.mrb[0].mxu0
        %1548 = vmatprep.mubr.bf16.mxu0 %v1218
        %1549 = vmatmul.mubr.bf16.gmra.mrb[0].mxu0 %v1217
        %v1550 = vpop.f32.mrb[0].mxu0
        %v1551 = vadd.f32 %v1314, %v1550
        %v1552 = vpop.f32.mrb[0].mxu0
        %v1553 = vpop.f32.mrb[0].mxu0
        %v1554 = vadd.f32 %v1314, %v1553
        %v1555 = vpop.f32.mrb[0].mxu0
        %1556 = vmatprep.mubr.bf16.mxu0 %v1222
        %1557 = vmatmul.mubr.bf16.gmra.mrb[0].mxu0 %v1221
        %v1558 = vpop.f32.mrb[0].mxu0
        %v1559 = vadd.f32 %v1314, %v1558
        %v1560 = vpop.f32.mrb[0].mxu0
        %v1561 = vpop.f32.mrb[0].mxu0
        %v1562 = vadd.f32 %v1314, %v1561
        %v1563 = vpop.f32.mrb[0].mxu0
        %1564 = vmatprep.mubr.bf16.mxu0 %v1226
        %1565 = vmatmul.mubr.bf16.gmra.mrb[0].mxu0 %v1225
        %v1566 = vpop.f32.mrb[0].mxu0
        %v1567 = vadd.f32 %v1314, %v1566
        %v1568 = vpop.f32.mrb[0].mxu0
        %v1569 = vpop.f32.mrb[0].mxu0
        %v1570 = vadd.f32 %v1314, %v1569
        %v1571 = vpop.f32.mrb[0].mxu0
        %1572 = vmatprep.mubr.bf16.mxu0 %v1230
        %1573 = vmatmul.mubr.bf16.gmra.mrb[0].mxu0 %v1229
        %v1574 = vpop.f32.mrb[0].mxu0
        %v1575 = vadd.f32 %v1314, %v1574
        %v1576 = vpop.f32.mrb[0].mxu0
        %v1577 = vpop.f32.mrb[0].mxu0
        %v1578 = vadd.f32 %v1314, %v1577
        %v1579 = vpop.f32.mrb[0].mxu0
        %1580 = vmatprep.mubr.bf16.mxu0 %v1234
        %1581 = vmatmul.mubr.bf16.gmra.mrb[0].mxu0 %v1233
        %v1582 = vpop.f32.mrb[0].mxu0
        %v1583 = vadd.f32 %v1314, %v1582
        %v1584 = vpop.f32.mrb[0].mxu0
        %v1585 = vpop.f32.mrb[0].mxu0
        %v1586 = vadd.f32 %v1314, %v1585
        %v1587 = vpop.f32.mrb[0].mxu0
        %1588 = vmatprep.mubr.bf16.mxu0 %v1238
        %1589 = vmatmul.mubr.bf16.gmra.mrb[0].mxu0 %v1237
        %v1590 = vpop.f32.mrb[0].mxu0
        %v1591 = vadd.f32 %v1314, %v1590
        %v1592 = vpop.f32.mrb[0].mxu0
        %v1593 = vpop.f32.mrb[0].mxu0
        %v1594 = vadd.f32 %v1314, %v1593
        %v1595 = vpop.f32.mrb[0].mxu0
        %1596 = vmatprep.mubr.bf16.mxu0 %v1242
        %1597 = vmatmul.mubr.bf16.gmra.mrb[0].mxu0 %v1241
        %v1598 = vpop.f32.mrb[0].mxu0
        %v1599 = vadd.f32 %v1314, %v1598
        %v1600 = vpop.f32.mrb[0].mxu0
        %v1601 = vpop.f32.mrb[0].mxu0
        %v1602 = vadd.f32 %v1314, %v1601
        %v1603 = vpop.f32.mrb[0].mxu0
        %1604 = vdwg.mxu0
        %1605 = vmatprep.subr.bf16.mxu0 0
        %1606 = vmatpush1.bf16.msra.mxu0 %v1460
        %1607 = vmatprep.subr.bf16.mxu0 0
        %1608 = vmatpush1.bf16.msra.mxu0 %v1461
        %1609 = vmatprep.subr.bf16.mxu0 0
        %1610 = vmatpush1.bf16.msra.mxu0 %v1462
        %1611 = vmatprep.subr.bf16.mxu0 0
        %1612 = vmatpush1.bf16.msra.mxu0 %v1463
        %1613 = vmatprep.subr.bf16.mxu0 0
        %1614 = vmatpush1.bf16.msra.mxu0 %v1464
        %1615 = vmatprep.subr.bf16.mxu0 0
        %1616 = vmatpush1.bf16.msra.mxu0 %v1465
        %1617 = vmatprep.subr.bf16.mxu0 0
        %1618 = vmatpush1.bf16.msra.mxu0 %v1466
        %1619 = vmatprep.subr.bf16.mxu0 0
        %1620 = vmatpush1.bf16.msra.mxu0 %v1467
        %1621 = vmatprep.subr.bf16.mxu0 0
        %1622 = vmatpush1.bf16.msra.mxu0 %v1468
        %1623 = vmatprep.subr.bf16.mxu0 0
        %1624 = vmatpush1.bf16.msra.mxu0 %v1469
        %1625 = vmatprep.subr.bf16.mxu0 0
        %1626 = vmatpush1.bf16.msra.mxu0 %v1470
        %1627 = vmatprep.subr.bf16.mxu0 0
        %1628 = vmatpush1.bf16.msra.mxu0 %v1471
        %1629 = vmatprep.subr.bf16.mxu0 0
        %1630 = vmatpush1.bf16.msra.mxu0 %v1472
        %1631 = vmatprep.subr.bf16.mxu0 0
        %1632 = vmatpush1.bf16.msra.mxu0 %v1473
        %1633 = vmatprep.subr.bf16.mxu0 0
        %1634 = vmatpush1.bf16.msra.mxu0 %v1474
        %1635 = vmatprep.subr.bf16.mxu0 0
        %1636 = vmatpush1.bf16.msra.mxu0 %v1475
        %1637 = vmatprep.mubr.bf16.mxu0 %v1216
        %1638 = vmatmul.mubr.bf16.gmra.mrb[0].mxu0 %v1215
        %v1639 = vpop.f32.mrb[0].mxu0
        %v1640 = vadd.f32 %v1543, %v1639
        %v1641 = vpop.f32.mrb[0].mxu0
        %v1642 = vpop.f32.mrb[0].mxu0
        %v1643 = vadd.f32 %v1546, %v1642
        %v1644 = vpop.f32.mrb[0].mxu0
        %1645 = vmatprep.mubr.bf16.mxu0 %v1220
        %1646 = vmatmul.mubr.bf16.gmra.mrb[0].mxu0 %v1219
        %v1647 = vpop.f32.mrb[0].mxu0
        %v1648 = vadd.f32 %v1551, %v1647
        %v1649 = vpop.f32.mrb[0].mxu0
        %v1650 = vpop.f32.mrb[0].mxu0
        %v1651 = vadd.f32 %v1554, %v1650
        %v1652 = vpop.f32.mrb[0].mxu0
        %1653 = vmatprep.mubr.bf16.mxu0 %v1224
        %1654 = vmatmul.mubr.bf16.gmra.mrb[0].mxu0 %v1223
        %v1655 = vpop.f32.mrb[0].mxu0
        %v1656 = vadd.f32 %v1559, %v1655
        %v1657 = vpop.f32.mrb[0].mxu0
        %v1658 = vpop.f32.mrb[0].mxu0
        %v1659 = vadd.f32 %v1562, %v1658
        %v1660 = vpop.f32.mrb[0].mxu0
        %1661 = vmatprep.mubr.bf16.mxu0 %v1228
        %1662 = vmatmul.mubr.bf16.gmra.mrb[0].mxu0 %v1227
        %v1663 = vpop.f32.mrb[0].mxu0
        %v1664 = vadd.f32 %v1567, %v1663
        %v1665 = vpop.f32.mrb[0].mxu0
        %v1666 = vpop.f32.mrb[0].mxu0
        %v1667 = vadd.f32 %v1570, %v1666
        %v1668 = vpop.f32.mrb[0].mxu0
        %1669 = vmatprep.mubr.bf16.mxu0 %v1232
        %1670 = vmatmul.mubr.bf16.gmra.mrb[0].mxu0 %v1231
        %v1671 = vpop.f32.mrb[0].mxu0
        %v1672 = vadd.f32 %v1575, %v1671
        %v1673 = vpop.f32.mrb[0].mxu0
        %v1674 = vpop.f32.mrb[0].mxu0
        %v1675 = vadd.f32 %v1578, %v1674
        %v1676 = vpop.f32.mrb[0].mxu0
        %1677 = vmatprep.mubr.bf16.mxu0 %v1236
        %1678 = vmatmul.mubr.bf16.gmra.mrb[0].mxu0 %v1235
        %v1679 = vpop.f32.mrb[0].mxu0
        %v1680 = vadd.f32 %v1583, %v1679
        %v1681 = vpop.f32.mrb[0].mxu0
        %v1682 = vpop.f32.mrb[0].mxu0
        %v1683 = vadd.f32 %v1586, %v1682
        %v1684 = vpop.f32.mrb[0].mxu0
        %1685 = vmatprep.mubr.bf16.mxu0 %v1240
        %1686 = vmatmul.mubr.bf16.gmra.mrb[0].mxu0 %v1239
        %v1687 = vpop.f32.mrb[0].mxu0
        %v1688 = vadd.f32 %v1591, %v1687
        %v1689 = vpop.f32.mrb[0].mxu0
        %v1690 = vpop.f32.mrb[0].mxu0
        %v1691 = vadd.f32 %v1594, %v1690
        %v1692 = vpop.f32.mrb[0].mxu0
        %1693 = vmatprep.mubr.bf16.mxu0 %v1244
        %1694 = vmatmul.mubr.bf16.gmra.mrb[0].mxu0 %v1243
        %v1695 = vpop.f32.mrb[0].mxu0
        %v1696 = vadd.f32 %v1599, %v1695
        %v1697 = vpop.f32.mrb[0].mxu0
        %v1698 = vpop.f32.mrb[0].mxu0
        %v1699 = vadd.f32 %v1602, %v1698
        %v1700 = vpop.f32.mrb[0].mxu0
        %1701 = vdwg.mxu0
        %v1702 = vmax.f32 %v1640, 0.0
        %v1703 = vmax.f32 %v1643, 0.0
        %v1704 = vmax.f32 %v1648, 0.0
        %v1705 = vmax.f32 %v1651, 0.0
        %v1706 = vmax.f32 %v1656, 0.0
        %v1707 = vmax.f32 %v1659, 0.0
        %v1708 = vmax.f32 %v1664, 0.0
        %v1709 = vmax.f32 %v1667, 0.0
        %v1710 = vmax.f32 %v1672, 0.0
        %v1711 = vmax.f32 %v1675, 0.0
        %v1712 = vmax.f32 %v1680, 0.0
        %v1713 = vmax.f32 %v1683, 0.0
        %v1714 = vmax.f32 %v1688, 0.0
        %v1715 = vmax.f32 %v1691, 0.0
        %v1716 = vmax.f32 %v1696, 0.0
        %v1717 = vmax.f32 %v1699, 0.0
        %v1718 = vpack.c.bf16 %v1703, %v1702
        %v1719 = vpack.c.bf16 %v1705, %v1704
        %v1720 = vpack.c.bf16 %v1707, %v1706
        %v1721 = vpack.c.bf16 %v1709, %v1708
        %v1722 = vpack.c.bf16 %v1711, %v1710
        %v1723 = vpack.c.bf16 %v1713, %v1712
        %v1724 = vpack.c.bf16 %v1715, %v1714
        %v1725 = vpack.c.bf16 %v1717, %v1716
        %v1726 = vld [vmem:[#allocation11] sm:$0xf]
        %v1727 = vld [vmem:[#allocation9] sm:$0xff]
        %v1728 = vld [vmem:[#allocation9 + $0x8] sm:$0xff]
        %v1729 = vld [vmem:[#allocation9 + $0x10] sm:$0xff]
        %v1730 = vld [vmem:[#allocation9 + $0x18] sm:$0xff]
        %v1731 = vld [vmem:[#allocation9 + $0x20] sm:$0xff]
        %v1732 = vld [vmem:[#allocation9 + $0x28] sm:$0xff]
        %v1733 = vld [vmem:[#allocation9 + $0x30] sm:$0xff]
        %v1734 = vld [vmem:[#allocation9 + $0x38] sm:$0xff]
        %v1735 = vld [vmem:[#allocation9 + $0x40] sm:$0xff]
        %v1736 = vld [vmem:[#allocation9 + $0x48] sm:$0xff]
        %v1737 = vld [vmem:[#allocation9 + $0x50] sm:$0xff]
        %v1738 = vld [vmem:[#allocation9 + $0x58] sm:$0xff]
        %v1739 = vld [vmem:[#allocation9 + $0x60] sm:$0xff]
        %v1740 = vld [vmem:[#allocation9 + $0x68] sm:$0xff]
        %v1741 = vld [vmem:[#allocation9 + $0x70] sm:$0xff]
        %v1742 = vld [vmem:[#allocation9 + $0x78] sm:$0xff]
        %v1743 = vld [vmem:[#allocation9 + $0x80] sm:$0xff]
        %v1744 = vld [vmem:[#allocation9 + $0x88] sm:$0xff]
        %v1745 = vld [vmem:[#allocation9 + $0x90] sm:$0xff]
        %v1746 = vld [vmem:[#allocation9 + $0x98] sm:$0xff]
        %v1747 = vld [vmem:[#allocation9 + $0xa0] sm:$0xff]
        %v1748 = vld [vmem:[#allocation9 + $0xa8] sm:$0xff]
        %v1749 = vld [vmem:[#allocation9 + $0xb0] sm:$0xff]
        %v1750 = vld [vmem:[#allocation9 + $0xb8] sm:$0xff]
        %v1751 = vld [vmem:[#allocation9 + $0xc0] sm:$0xff]
        %v1752 = vld [vmem:[#allocation9 + $0xc8] sm:$0xff]
        %v1753 = vld [vmem:[#allocation9 + $0xd0] sm:$0xff]
        %v1754 = vld [vmem:[#allocation9 + $0xd8] sm:$0xff]
        %v1755 = vld [vmem:[#allocation9 + $0xe0] sm:$0xff]
        %v1756 = vld [vmem:[#allocation9 + $0xe8] sm:$0xff]
        %v1757 = vld [vmem:[#allocation9 + $0xf0] sm:$0xff]
        %v1758 = vld [vmem:[#allocation9 + $0xf8] sm:$0xff]
        %v1760 = vlaneseq
        %v1761 = vshrl.u32 %v1760, 7
        %v1762 = vsub.s32 0, %v1761
        %v1763 = vrot.slane %v1726, %v1762
        %v1764 = vlaneseq
        %v1765 = vshrl.u32 %v1764, 7
        %v1766 = vsub.s32 1, %v1765
        %v1767 = vrot.slane %v1726, %v1766
        %v1768 = vlaneseq
        %v1769 = vshrl.u32 %v1768, 7
        %v1770 = vsub.s32 2, %v1769
        %v1771 = vrot.slane %v1726, %v1770
        %v1772 = vlaneseq
        %v1773 = vshrl.u32 %v1772, 7
        %v1774 = vsub.s32 3, %v1773
        %v1775 = vrot.slane %v1726, %v1774
        %v1812 = vunpack.c.l.b16 %v1727
        %v1813 = vunpack.c.h.b16 %v1727
        %v1814 = vunpack.c.l.b16 %v1728
        %v1815 = vunpack.c.h.b16 %v1728
        %v1816 = vunpack.c.l.b16 %v1729
        %v1817 = vunpack.c.h.b16 %v1729
        %v1818 = vunpack.c.l.b16 %v1730
        %v1819 = vunpack.c.h.b16 %v1730
        %v1820 = vunpack.c.l.b16 %v1731
        %v1821 = vunpack.c.h.b16 %v1731
        %v1822 = vunpack.c.l.b16 %v1732
        %v1823 = vunpack.c.h.b16 %v1732
        %v1824 = vunpack.c.l.b16 %v1733
        %v1825 = vunpack.c.h.b16 %v1733
        %v1826 = vunpack.c.l.b16 %v1734
        %v1827 = vunpack.c.h.b16 %v1734
        %v1828 = vunpack.c.l.b16 %v1735
        %v1829 = vunpack.c.h.b16 %v1735
        %v1830 = vunpack.c.l.b16 %v1736
        %v1831 = vunpack.c.h.b16 %v1736
        %v1832 = vunpack.c.l.b16 %v1737
        %v1833 = vunpack.c.h.b16 %v1737
        %v1834 = vunpack.c.l.b16 %v1738
        %v1835 = vunpack.c.h.b16 %v1738
        %v1836 = vunpack.c.l.b16 %v1739
        %v1837 = vunpack.c.h.b16 %v1739
        %v1838 = vunpack.c.l.b16 %v1740
        %v1839 = vunpack.c.h.b16 %v1740
        %v1840 = vunpack.c.l.b16 %v1741
        %v1841 = vunpack.c.h.b16 %v1741
        %v1842 = vunpack.c.l.b16 %v1742
        %v1843 = vunpack.c.h.b16 %v1742
        %v1844 = vunpack.c.l.b16 %v1743
        %v1845 = vunpack.c.h.b16 %v1743
        %v1846 = vunpack.c.l.b16 %v1744
        %v1847 = vunpack.c.h.b16 %v1744
        %v1848 = vunpack.c.l.b16 %v1745
        %v1849 = vunpack.c.h.b16 %v1745
        %v1850 = vunpack.c.l.b16 %v1746
        %v1851 = vunpack.c.h.b16 %v1746
        %v1852 = vunpack.c.l.b16 %v1747
        %v1853 = vunpack.c.h.b16 %v1747
        %v1854 = vunpack.c.l.b16 %v1748
        %v1855 = vunpack.c.h.b16 %v1748
        %v1856 = vunpack.c.l.b16 %v1749
        %v1857 = vunpack.c.h.b16 %v1749
        %v1858 = vunpack.c.l.b16 %v1750
        %v1859 = vunpack.c.h.b16 %v1750
        %v1860 = vunpack.c.l.b16 %v1751
        %v1861 = vunpack.c.h.b16 %v1751
        %v1862 = vunpack.c.l.b16 %v1752
        %v1863 = vunpack.c.h.b16 %v1752
        %v1864 = vunpack.c.l.b16 %v1753
        %v1865 = vunpack.c.h.b16 %v1753
        %v1866 = vunpack.c.l.b16 %v1754
        %v1867 = vunpack.c.h.b16 %v1754
        %v1868 = vunpack.c.l.b16 %v1755
        %v1869 = vunpack.c.h.b16 %v1755
        %v1870 = vunpack.c.l.b16 %v1756
        %v1871 = vunpack.c.h.b16 %v1756
        %v1872 = vunpack.c.l.b16 %v1757
        %v1873 = vunpack.c.h.b16 %v1757
        %v1874 = vunpack.c.l.b16 %v1758
        %v1875 = vunpack.c.h.b16 %v1758
        %v1876 = vpack.c.b16 %v1816, %v1812
        %v1877 = vpack.c.b16 %v1817, %v1813
        %v1878 = vpack.c.b16 %v1818, %v1814
        %v1879 = vpack.c.b16 %v1819, %v1815
        %v1880 = vpack.c.b16 %v1824, %v1820
        %v1881 = vpack.c.b16 %v1825, %v1821
        %v1882 = vpack.c.b16 %v1826, %v1822
        %v1883 = vpack.c.b16 %v1827, %v1823
        %v1884 = vpack.c.b16 %v1832, %v1828
        %v1885 = vpack.c.b16 %v1833, %v1829
        %v1886 = vpack.c.b16 %v1834, %v1830
        %v1887 = vpack.c.b16 %v1835, %v1831
        %v1888 = vpack.c.b16 %v1840, %v1836
        %v1889 = vpack.c.b16 %v1841, %v1837
        %v1890 = vpack.c.b16 %v1842, %v1838
        %v1891 = vpack.c.b16 %v1843, %v1839
        %v1892 = vpack.c.b16 %v1848, %v1844
        %v1893 = vpack.c.b16 %v1849, %v1845
        %v1894 = vpack.c.b16 %v1850, %v1846
        %v1895 = vpack.c.b16 %v1851, %v1847
        %v1896 = vpack.c.b16 %v1856, %v1852
        %v1897 = vpack.c.b16 %v1857, %v1853
        %v1898 = vpack.c.b16 %v1858, %v1854
        %v1899 = vpack.c.b16 %v1859, %v1855
        %v1900 = vpack.c.b16 %v1864, %v1860
        %v1901 = vpack.c.b16 %v1865, %v1861
        %v1902 = vpack.c.b16 %v1866, %v1862
        %v1903 = vpack.c.b16 %v1867, %v1863
        %v1904 = vpack.c.b16 %v1872, %v1868
        %v1905 = vpack.c.b16 %v1873, %v1869
        %v1906 = vpack.c.b16 %v1874, %v1870
        %v1907 = vpack.c.b16 %v1875, %v1871
        %1940 = vmatprep.subr.bf16.mxu0 %v1877
        %1941 = vmatpush1.bf16.msra.mxu0 %v1876
        %1942 = vmatprep.subr.bf16.mxu0 %v1881
        %1943 = vmatpush1.bf16.msra.mxu0 %v1880
        %1944 = vmatprep.subr.bf16.mxu0 %v1885
        %1945 = vmatpush1.bf16.msra.mxu0 %v1884
        %1946 = vmatprep.subr.bf16.mxu0 %v1889
        %1947 = vmatpush1.bf16.msra.mxu0 %v1888
        %1948 = vmatprep.subr.bf16.mxu0 %v1893
        %1949 = vmatpush1.bf16.msra.mxu0 %v1892
        %1950 = vmatprep.subr.bf16.mxu0 %v1897
        %1951 = vmatpush1.bf16.msra.mxu0 %v1896
        %1952 = vmatprep.subr.bf16.mxu0 %v1901
        %1953 = vmatpush1.bf16.msra.mxu0 %v1900
        %1954 = vmatprep.subr.bf16.mxu0 %v1905
        %1955 = vmatpush1.bf16.msra.mxu0 %v1904
        %1956 = vmatprep.subr.bf16.mxu0 0
        %1957 = vmatpush1.bf16.msra.mxu0 0
        %1958 = vmatprep.subr.bf16.mxu0 0
        %1959 = vmatpush1.bf16.msra.mxu0 0
        %1960 = vmatprep.subr.bf16.mxu0 0
        %1961 = vmatpush1.bf16.msra.mxu0 0
        %1962 = vmatprep.subr.bf16.mxu0 0
        %1963 = vmatpush1.bf16.msra.mxu0 0
        %1964 = vmatprep.subr.bf16.mxu0 0
        %1965 = vmatpush1.bf16.msra.mxu0 0
        %1966 = vmatprep.subr.bf16.mxu0 0
        %1967 = vmatpush1.bf16.msra.mxu0 0
        %1968 = vmatprep.subr.bf16.mxu0 0
        %1969 = vmatpush1.bf16.msra.mxu0 0
        %1970 = vmatprep.subr.bf16.mxu0 0
        %1971 = vmatpush1.bf16.msra.mxu0 0
        %1972 = vmatprep.mubr.bf16.mxu0 0
        %1973 = vmatmul.mubr.bf16.gmra.mrb[0].mxu0 %v1718
        %v1974 = vpop.f32.mrb[0].mxu0
        %v1975 = vadd.f32 %v1763, %v1974
        %v1976 = vpop.f32.mrb[0].mxu0
        %v1977 = vadd.f32 %v1767, %v1976
        %v1978 = vpop.f32.mrb[0].mxu0
        %v1979 = vadd.f32 %v1763, %v1978
        %v1980 = vpop.f32.mrb[0].mxu0
        %v1981 = vadd.f32 %v1767, %v1980
        %1982 = vmatprep.mubr.bf16.mxu0 0
        %1983 = vmatmul.mubr.bf16.gmra.mrb[0].mxu0 %v1719
        %v1984 = vpop.f32.mrb[0].mxu0
        %v1985 = vadd.f32 %v1763, %v1984
        %v1986 = vpop.f32.mrb[0].mxu0
        %v1987 = vadd.f32 %v1767, %v1986
        %v1988 = vpop.f32.mrb[0].mxu0
        %v1989 = vadd.f32 %v1763, %v1988
        %v1990 = vpop.f32.mrb[0].mxu0
        %v1991 = vadd.f32 %v1767, %v1990
        %1992 = vmatprep.mubr.bf16.mxu0 0
        %1993 = vmatmul.mubr.bf16.gmra.mrb[0].mxu0 %v1720
        %v1994 = vpop.f32.mrb[0].mxu0
        %v1995 = vadd.f32 %v1763, %v1994
        %v1996 = vpop.f32.mrb[0].mxu0
        %v1997 = vadd.f32 %v1767, %v1996
        %v1998 = vpop.f32.mrb[0].mxu0
        %v1999 = vadd.f32 %v1763, %v1998
        %v2000 = vpop.f32.mrb[0].mxu0
        %v2001 = vadd.f32 %v1767, %v2000
        %2002 = vmatprep.mubr.bf16.mxu0 0
        %2003 = vmatmul.mubr.bf16.gmra.mrb[0].mxu0 %v1721
        %v2004 = vpop.f32.mrb[0].mxu0
        %v2005 = vadd.f32 %v1763, %v2004
        %v2006 = vpop.f32.mrb[0].mxu0
        %v2007 = vadd.f32 %v1767, %v2006
        %v2008 = vpop.f32.mrb[0].mxu0
        %v2009 = vadd.f32 %v1763, %v2008
        %v2010 = vpop.f32.mrb[0].mxu0
        %v2011 = vadd.f32 %v1767, %v2010
        %2012 = vmatprep.mubr.bf16.mxu0 0
        %2013 = vmatmul.mubr.bf16.gmra.mrb[0].mxu0 %v1722
        %v2014 = vpop.f32.mrb[0].mxu0
        %v2015 = vadd.f32 %v1763, %v2014
        %v2016 = vpop.f32.mrb[0].mxu0
        %v2017 = vadd.f32 %v1767, %v2016
        %v2018 = vpop.f32.mrb[0].mxu0
        %v2019 = vadd.f32 %v1763, %v2018
        %v2020 = vpop.f32.mrb[0].mxu0
        %v2021 = vadd.f32 %v1767, %v2020
        %2022 = vmatprep.mubr.bf16.mxu0 0
        %2023 = vmatmul.mubr.bf16.gmra.mrb[0].mxu0 %v1723
        %v2024 = vpop.f32.mrb[0].mxu0
        %v2025 = vadd.f32 %v1763, %v2024
        %v2026 = vpop.f32.mrb[0].mxu0
        %v2027 = vadd.f32 %v1767, %v2026
        %v2028 = vpop.f32.mrb[0].mxu0
        %v2029 = vadd.f32 %v1763, %v2028
        %v2030 = vpop.f32.mrb[0].mxu0
        %v2031 = vadd.f32 %v1767, %v2030
        %2032 = vmatprep.mubr.bf16.mxu0 0
        %2033 = vmatmul.mubr.bf16.gmra.mrb[0].mxu0 %v1724
        %v2034 = vpop.f32.mrb[0].mxu0
        %v2035 = vadd.f32 %v1763, %v2034
        %v2036 = vpop.f32.mrb[0].mxu0
        %v2037 = vadd.f32 %v1767, %v2036
        %v2038 = vpop.f32.mrb[0].mxu0
        %v2039 = vadd.f32 %v1763, %v2038
        %v2040 = vpop.f32.mrb[0].mxu0
        %v2041 = vadd.f32 %v1767, %v2040
        %2042 = vmatprep.mubr.bf16.mxu0 0
        %2043 = vmatmul.mubr.bf16.gmra.mrb[0].mxu0 %v1725
        %v2044 = vpop.f32.mrb[0].mxu0
        %v2045 = vadd.f32 %v1763, %v2044
        %v2046 = vpop.f32.mrb[0].mxu0
        %v2047 = vadd.f32 %v1767, %v2046
        %v2048 = vpop.f32.mrb[0].mxu0
        %v2049 = vadd.f32 %v1763, %v2048
        %v2050 = vpop.f32.mrb[0].mxu0
        %v2051 = vadd.f32 %v1767, %v2050
        %2052 = vdwg.mxu0
        %2053 = vmatprep.subr.bf16.mxu0 %v1879
        %2054 = vmatpush1.bf16.msra.mxu0 %v1878
        %2055 = vmatprep.subr.bf16.mxu0 %v1883
        %2056 = vmatpush1.bf16.msra.mxu0 %v1882
        %2057 = vmatprep.subr.bf16.mxu0 %v1887
        %2058 = vmatpush1.bf16.msra.mxu0 %v1886
        %2059 = vmatprep.subr.bf16.mxu0 %v1891
        %2060 = vmatpush1.bf16.msra.mxu0 %v1890
        %2061 = vmatprep.subr.bf16.mxu0 %v1895
        %2062 = vmatpush1.bf16.msra.mxu0 %v1894
        %2063 = vmatprep.subr.bf16.mxu0 %v1899
        %2064 = vmatpush1.bf16.msra.mxu0 %v1898
        %2065 = vmatprep.subr.bf16.mxu0 %v1903
        %2066 = vmatpush1.bf16.msra.mxu0 %v1902
        %2067 = vmatprep.subr.bf16.mxu0 %v1907
        %2068 = vmatpush1.bf16.msra.mxu0 %v1906
        %2069 = vmatprep.subr.bf16.mxu0 0
        %2070 = vmatpush1.bf16.msra.mxu0 0
        %2071 = vmatprep.subr.bf16.mxu0 0
        %2072 = vmatpush1.bf16.msra.mxu0 0
        %2073 = vmatprep.subr.bf16.mxu0 0
        %2074 = vmatpush1.bf16.msra.mxu0 0
        %2075 = vmatprep.subr.bf16.mxu0 0
        %2076 = vmatpush1.bf16.msra.mxu0 0
        %2077 = vmatprep.subr.bf16.mxu0 0
        %2078 = vmatpush1.bf16.msra.mxu0 0
        %2079 = vmatprep.subr.bf16.mxu0 0
        %2080 = vmatpush1.bf16.msra.mxu0 0
        %2081 = vmatprep.subr.bf16.mxu0 0
        %2082 = vmatpush1.bf16.msra.mxu0 0
        %2083 = vmatprep.subr.bf16.mxu0 0
        %2084 = vmatpush1.bf16.msra.mxu0 0
        %2085 = vmatprep.mubr.bf16.mxu0 0
        %2086 = vmatmul.mubr.bf16.gmra.mrb[0].mxu0 %v1718
        %v2087 = vpop.f32.mrb[0].mxu0
        %v2088 = vadd.f32 %v1771, %v2087
        %v2089 = vpop.f32.mrb[0].mxu0
        %v2090 = vadd.f32 %v1775, %v2089
        %v2091 = vpop.f32.mrb[0].mxu0
        %v2092 = vadd.f32 %v1771, %v2091
        %v2093 = vpop.f32.mrb[0].mxu0
        %v2094 = vadd.f32 %v1775, %v2093
        %2095 = vmatprep.mubr.bf16.mxu0 0
        %2096 = vmatmul.mubr.bf16.gmra.mrb[0].mxu0 %v1719
        %v2097 = vpop.f32.mrb[0].mxu0
        %v2098 = vadd.f32 %v1771, %v2097
        %v2099 = vpop.f32.mrb[0].mxu0
        %v2100 = vadd.f32 %v1775, %v2099
        %v2101 = vpop.f32.mrb[0].mxu0
        %v2102 = vadd.f32 %v1771, %v2101
        %v2103 = vpop.f32.mrb[0].mxu0
        %v2104 = vadd.f32 %v1775, %v2103
        %2105 = vmatprep.mubr.bf16.mxu0 0
        %2106 = vmatmul.mubr.bf16.gmra.mrb[0].mxu0 %v1720
        %v2107 = vpop.f32.mrb[0].mxu0
        %v2108 = vadd.f32 %v1771, %v2107
        %v2109 = vpop.f32.mrb[0].mxu0
        %v2110 = vadd.f32 %v1775, %v2109
        %v2111 = vpop.f32.mrb[0].mxu0
        %v2112 = vadd.f32 %v1771, %v2111
        %v2113 = vpop.f32.mrb[0].mxu0
        %v2114 = vadd.f32 %v1775, %v2113
        %2115 = vmatprep.mubr.bf16.mxu0 0
        %2116 = vmatmul.mubr.bf16.gmra.mrb[0].mxu0 %v1721
        %v2117 = vpop.f32.mrb[0].mxu0
        %v2118 = vadd.f32 %v1771, %v2117
        %v2119 = vpop.f32.mrb[0].mxu0
        %v2120 = vadd.f32 %v1775, %v2119
        %v2121 = vpop.f32.mrb[0].mxu0
        %v2122 = vadd.f32 %v1771, %v2121
        %v2123 = vpop.f32.mrb[0].mxu0
        %v2124 = vadd.f32 %v1775, %v2123
        %2125 = vmatprep.mubr.bf16.mxu0 0
        %2126 = vmatmul.mubr.bf16.gmra.mrb[0].mxu0 %v1722
        %v2127 = vpop.f32.mrb[0].mxu0
        %v2128 = vadd.f32 %v1771, %v2127
        %v2129 = vpop.f32.mrb[0].mxu0
        %v2130 = vadd.f32 %v1775, %v2129
        %v2131 = vpop.f32.mrb[0].mxu0
        %v2132 = vadd.f32 %v1771, %v2131
        %v2133 = vpop.f32.mrb[0].mxu0
        %v2134 = vadd.f32 %v1775, %v2133
        %2135 = vmatprep.mubr.bf16.mxu0 0
        %2136 = vmatmul.mubr.bf16.gmra.mrb[0].mxu0 %v1723
        %v2137 = vpop.f32.mrb[0].mxu0
        %v2138 = vadd.f32 %v1771, %v2137
        %v2139 = vpop.f32.mrb[0].mxu0
        %v2140 = vadd.f32 %v1775, %v2139
        %v2141 = vpop.f32.mrb[0].mxu0
        %v2142 = vadd.f32 %v1771, %v2141
        %v2143 = vpop.f32.mrb[0].mxu0
        %v2144 = vadd.f32 %v1775, %v2143
        %2145 = vmatprep.mubr.bf16.mxu0 0
        %2146 = vmatmul.mubr.bf16.gmra.mrb[0].mxu0 %v1724
        %v2147 = vpop.f32.mrb[0].mxu0
        %v2148 = vadd.f32 %v1771, %v2147
        %v2149 = vpop.f32.mrb[0].mxu0
        %v2150 = vadd.f32 %v1775, %v2149
        %v2151 = vpop.f32.mrb[0].mxu0
        %v2152 = vadd.f32 %v1771, %v2151
        %v2153 = vpop.f32.mrb[0].mxu0
        %v2154 = vadd.f32 %v1775, %v2153
        %2155 = vmatprep.mubr.bf16.mxu0 0
        %2156 = vmatmul.mubr.bf16.gmra.mrb[0].mxu0 %v1725
        %v2157 = vpop.f32.mrb[0].mxu0
        %v2158 = vadd.f32 %v1771, %v2157
        %v2159 = vpop.f32.mrb[0].mxu0
        %v2160 = vadd.f32 %v1775, %v2159
        %v2161 = vpop.f32.mrb[0].mxu0
        %v2162 = vadd.f32 %v1771, %v2161
        %v2163 = vpop.f32.mrb[0].mxu0
        %v2164 = vadd.f32 %v1775, %v2163
        %2165 = vdwg.mxu0
        %v2166 = vmax.f32 %v1975, 0.0
        %v2167 = vmax.f32 %v1977, 0.0
        %v2168 = vmax.f32 %v2088, 0.0
        %v2169 = vmax.f32 %v2090, 0.0
        %v2170 = vmax.f32 %v1979, 0.0
        %v2171 = vmax.f32 %v1981, 0.0
        %v2172 = vmax.f32 %v2092, 0.0
        %v2173 = vmax.f32 %v2094, 0.0
        %v2174 = vmax.f32 %v1985, 0.0
        %v2175 = vmax.f32 %v1987, 0.0
        %v2176 = vmax.f32 %v2098, 0.0
        %v2177 = vmax.f32 %v2100, 0.0
        %v2178 = vmax.f32 %v1989, 0.0
        %v2179 = vmax.f32 %v1991, 0.0
        %v2180 = vmax.f32 %v2102, 0.0
        %v2181 = vmax.f32 %v2104, 0.0
        %v2182 = vmax.f32 %v1995, 0.0
        %v2183 = vmax.f32 %v1997, 0.0
        %v2184 = vmax.f32 %v2108, 0.0
        %v2185 = vmax.f32 %v2110, 0.0
        %v2186 = vmax.f32 %v1999, 0.0
        %v2187 = vmax.f32 %v2001, 0.0
        %v2188 = vmax.f32 %v2112, 0.0
        %v2189 = vmax.f32 %v2114, 0.0
        %v2190 = vmax.f32 %v2005, 0.0
        %v2191 = vmax.f32 %v2007, 0.0
        %v2192 = vmax.f32 %v2118, 0.0
        %v2193 = vmax.f32 %v2120, 0.0
        %v2194 = vmax.f32 %v2009, 0.0
        %v2195 = vmax.f32 %v2011, 0.0
        %v2196 = vmax.f32 %v2122, 0.0
        %v2197 = vmax.f32 %v2124, 0.0
        %v2198 = vmax.f32 %v2015, 0.0
        %v2199 = vmax.f32 %v2017, 0.0
        %v2200 = vmax.f32 %v2128, 0.0
        %v2201 = vmax.f32 %v2130, 0.0
        %v2202 = vmax.f32 %v2019, 0.0
        %v2203 = vmax.f32 %v2021, 0.0
        %v2204 = vmax.f32 %v2132, 0.0
        %v2205 = vmax.f32 %v2134, 0.0
        %v2206 = vmax.f32 %v2025, 0.0
        %v2207 = vmax.f32 %v2027, 0.0
        %v2208 = vmax.f32 %v2138, 0.0
        %v2209 = vmax.f32 %v2140, 0.0
        %v2210 = vmax.f32 %v2029, 0.0
        %v2211 = vmax.f32 %v2031, 0.0
        %v2212 = vmax.f32 %v2142, 0.0
        %v2213 = vmax.f32 %v2144, 0.0
        %v2214 = vmax.f32 %v2035, 0.0
        %v2215 = vmax.f32 %v2037, 0.0
        %v2216 = vmax.f32 %v2148, 0.0
        %v2217 = vmax.f32 %v2150, 0.0
        %v2218 = vmax.f32 %v2039, 0.0
        %v2219 = vmax.f32 %v2041, 0.0
        %v2220 = vmax.f32 %v2152, 0.0
        %v2221 = vmax.f32 %v2154, 0.0
        %v2222 = vmax.f32 %v2045, 0.0
        %v2223 = vmax.f32 %v2047, 0.0
        %v2224 = vmax.f32 %v2158, 0.0
        %v2225 = vmax.f32 %v2160, 0.0
        %v2226 = vmax.f32 %v2049, 0.0
        %v2227 = vmax.f32 %v2051, 0.0
        %v2228 = vmax.f32 %v2162, 0.0
        %v2229 = vmax.f32 %v2164, 0.0
        %v2230 = vpack.c.bf16 %v2170, %v2166
        %v2231 = vpack.c.bf16 %v2171, %v2167
        %v2232 = vpack.c.bf16 %v2172, %v2168
        %v2233 = vpack.c.bf16 %v2173, %v2169
        %v2234 = vpack.c.bf16 %v2178, %v2174
        %v2235 = vpack.c.bf16 %v2179, %v2175
        %v2236 = vpack.c.bf16 %v2180, %v2176
        %v2237 = vpack.c.bf16 %v2181, %v2177
        %v2238 = vpack.c.bf16 %v2186, %v2182
        %v2239 = vpack.c.bf16 %v2187, %v2183
        %v2240 = vpack.c.bf16 %v2188, %v2184
        %v2241 = vpack.c.bf16 %v2189, %v2185
        %v2242 = vpack.c.bf16 %v2194, %v2190
        %v2243 = vpack.c.bf16 %v2195, %v2191
        %v2244 = vpack.c.bf16 %v2196, %v2192
        %v2245 = vpack.c.bf16 %v2197, %v2193
        %v2246 = vpack.c.bf16 %v2202, %v2198
        %v2247 = vpack.c.bf16 %v2203, %v2199
        %v2248 = vpack.c.bf16 %v2204, %v2200
        %v2249 = vpack.c.bf16 %v2205, %v2201
        %v2250 = vpack.c.bf16 %v2210, %v2206
        %v2251 = vpack.c.bf16 %v2211, %v2207
        %v2252 = vpack.c.bf16 %v2212, %v2208
        %v2253 = vpack.c.bf16 %v2213, %v2209
        %v2254 = vpack.c.bf16 %v2218, %v2214
        %v2255 = vpack.c.bf16 %v2219, %v2215
        %v2256 = vpack.c.bf16 %v2220, %v2216
        %v2257 = vpack.c.bf16 %v2221, %v2217
        %v2258 = vpack.c.bf16 %v2226, %v2222
        %v2259 = vpack.c.bf16 %v2227, %v2223
        %v2260 = vpack.c.bf16 %v2228, %v2224
        %v2261 = vpack.c.bf16 %v2229, %v2225
        %s2262 = sld [smem:[#allocation18]]
        %v2263 = vld [vmem:[%s7] sm:$0xff]
        %v2264 = vld [vmem:[%s7 + $0x8] sm:$0xff]
        %v2265 = vld [vmem:[%s7 + $0x10] sm:$0xff]
        %v2266 = vld [vmem:[%s7 + $0x18] sm:$0xff]
        %v2267 = vld [vmem:[%s7 + $0x20] sm:$0xff]
        %v2268 = vld [vmem:[%s7 + $0x28] sm:$0xff]
        %v2269 = vld [vmem:[%s7 + $0x30] sm:$0xff]
        %v2270 = vld [vmem:[%s7 + $0x38] sm:$0xff]
        %v2271 = vld [vmem:[%s7 + $0x40] sm:$0xff]
        %v2272 = vld [vmem:[%s7 + $0x48] sm:$0xff]
        %v2273 = vld [vmem:[%s7 + $0x50] sm:$0xff]
        %v2274 = vld [vmem:[%s7 + $0x58] sm:$0xff]
        %v2275 = vld [vmem:[%s7 + $0x60] sm:$0xff]
        %v2276 = vld [vmem:[%s7 + $0x68] sm:$0xff]
        %v2277 = vld [vmem:[%s7 + $0x70] sm:$0xff]
        %v2278 = vld [vmem:[%s7 + $0x78] sm:$0xff]
        %v2279 = vld [vmem:[%s7 + $0x80] sm:$0xff]
        %v2280 = vld [vmem:[%s7 + $0x88] sm:$0xff]
        %v2281 = vld [vmem:[%s7 + $0x90] sm:$0xff]
        %v2282 = vld [vmem:[%s7 + $0x98] sm:$0xff]
        %v2283 = vld [vmem:[%s7 + $0xa0] sm:$0xff]
        %v2284 = vld [vmem:[%s7 + $0xa8] sm:$0xff]
        %v2285 = vld [vmem:[%s7 + $0xb0] sm:$0xff]
        %v2286 = vld [vmem:[%s7 + $0xb8] sm:$0xff]
        %v2287 = vld [vmem:[%s7 + $0xc0] sm:$0xff]
        %v2288 = vld [vmem:[%s7 + $0xc8] sm:$0xff]
        %v2289 = vld [vmem:[%s7 + $0xd0] sm:$0xff]
        %v2290 = vld [vmem:[%s7 + $0xd8] sm:$0xff]
        %v2291 = vld [vmem:[%s7 + $0xe0] sm:$0xff]
        %v2292 = vld [vmem:[%s7 + $0xe8] sm:$0xff]
        %v2293 = vld [vmem:[%s7 + $0xf0] sm:$0xff]
        %v2294 = vld [vmem:[%s7 + $0xf8] sm:$0xff]
        %v2295 = vld [vmem:[%s7 + $0x100] sm:$0xff]
        %v2296 = vld [vmem:[%s7 + $0x108] sm:$0xff]
        %v2297 = vld [vmem:[%s7 + $0x110] sm:$0xff]
        %v2298 = vld [vmem:[%s7 + $0x118] sm:$0xff]
        %v2299 = vld [vmem:[%s7 + $0x120] sm:$0xff]
        %v2300 = vld [vmem:[%s7 + $0x128] sm:$0xff]
        %v2301 = vld [vmem:[%s7 + $0x130] sm:$0xff]
        %v2302 = vld [vmem:[%s7 + $0x138] sm:$0xff]
        %v2303 = vld [vmem:[%s7 + $0x140] sm:$0xff]
        %v2304 = vld [vmem:[%s7 + $0x148] sm:$0xff]
        %v2305 = vld [vmem:[%s7 + $0x150] sm:$0xff]
        %v2306 = vld [vmem:[%s7 + $0x158] sm:$0xff]
        %v2307 = vld [vmem:[%s7 + $0x160] sm:$0xff]
        %v2308 = vld [vmem:[%s7 + $0x168] sm:$0xff]
        %v2309 = vld [vmem:[%s7 + $0x170] sm:$0xff]
        %v2310 = vld [vmem:[%s7 + $0x178] sm:$0xff]
        %v2311 = vld [vmem:[%s7 + $0x180] sm:$0xff]
        %v2312 = vld [vmem:[%s7 + $0x188] sm:$0xff]
        %v2313 = vld [vmem:[%s7 + $0x190] sm:$0xff]
        %v2314 = vld [vmem:[%s7 + $0x198] sm:$0xff]
        %v2315 = vld [vmem:[%s7 + $0x1a0] sm:$0xff]
        %v2316 = vld [vmem:[%s7 + $0x1a8] sm:$0xff]
        %v2317 = vld [vmem:[%s7 + $0x1b0] sm:$0xff]
        %v2318 = vld [vmem:[%s7 + $0x1b8] sm:$0xff]
        %v2319 = vld [vmem:[%s7 + $0x1c0] sm:$0xff]
        %v2320 = vld [vmem:[%s7 + $0x1c8] sm:$0xff]
        %v2321 = vld [vmem:[%s7 + $0x1d0] sm:$0xff]
        %v2322 = vld [vmem:[%s7 + $0x1d8] sm:$0xff]
        %v2323 = vld [vmem:[%s7 + $0x1e0] sm:$0xff]
        %v2324 = vld [vmem:[%s7 + $0x1e8] sm:$0xff]
        %v2325 = vld [vmem:[%s7 + $0x1f0] sm:$0xff]
        %v2326 = vld [vmem:[%s7 + $0x1f8] sm:$0xff]
        %v2327 = vstv %s2262
        %v2392 = vunpack.c.l.b16 %v2263
        %v2393 = vunpack.c.h.b16 %v2263
        %v2394 = vunpack.c.l.b16 %v2264
        %v2395 = vunpack.c.h.b16 %v2264
        %v2396 = vunpack.c.l.b16 %v2265
        %v2397 = vunpack.c.h.b16 %v2265
        %v2398 = vunpack.c.l.b16 %v2266
        %v2399 = vunpack.c.h.b16 %v2266
        %v2400 = vunpack.c.l.b16 %v2267
        %v2401 = vunpack.c.h.b16 %v2267
        %v2402 = vunpack.c.l.b16 %v2268
        %v2403 = vunpack.c.h.b16 %v2268
        %v2404 = vunpack.c.l.b16 %v2269
        %v2405 = vunpack.c.h.b16 %v2269
        %v2406 = vunpack.c.l.b16 %v2270
        %v2407 = vunpack.c.h.b16 %v2270
        %v2408 = vunpack.c.l.b16 %v2271
        %v2409 = vunpack.c.h.b16 %v2271
        %v2410 = vunpack.c.l.b16 %v2272
        %v2411 = vunpack.c.h.b16 %v2272
        %v2412 = vunpack.c.l.b16 %v2273
        %v2413 = vunpack.c.h.b16 %v2273
        %v2414 = vunpack.c.l.b16 %v2274
        %v2415 = vunpack.c.h.b16 %v2274
        %v2416 = vunpack.c.l.b16 %v2275
        %v2417 = vunpack.c.h.b16 %v2275
        %v2418 = vunpack.c.l.b16 %v2276
        %v2419 = vunpack.c.h.b16 %v2276
        %v2420 = vunpack.c.l.b16 %v2277
        %v2421 = vunpack.c.h.b16 %v2277
        %v2422 = vunpack.c.l.b16 %v2278
        %v2423 = vunpack.c.h.b16 %v2278
        %v2424 = vunpack.c.l.b16 %v2279
        %v2425 = vunpack.c.h.b16 %v2279
        %v2426 = vunpack.c.l.b16 %v2280
        %v2427 = vunpack.c.h.b16 %v2280
        %v2428 = vunpack.c.l.b16 %v2281
        %v2429 = vunpack.c.h.b16 %v2281
        %v2430 = vunpack.c.l.b16 %v2282
        %v2431 = vunpack.c.h.b16 %v2282
        %v2432 = vunpack.c.l.b16 %v2283
        %v2433 = vunpack.c.h.b16 %v2283
        %v2434 = vunpack.c.l.b16 %v2284
        %v2435 = vunpack.c.h.b16 %v2284
        %v2436 = vunpack.c.l.b16 %v2285
        %v2437 = vunpack.c.h.b16 %v2285
        %v2438 = vunpack.c.l.b16 %v2286
        %v2439 = vunpack.c.h.b16 %v2286
        %v2440 = vunpack.c.l.b16 %v2287
        %v2441 = vunpack.c.h.b16 %v2287
        %v2442 = vunpack.c.l.b16 %v2288
        %v2443 = vunpack.c.h.b16 %v2288
        %v2444 = vunpack.c.l.b16 %v2289
        %v2445 = vunpack.c.h.b16 %v2289
        %v2446 = vunpack.c.l.b16 %v2290
        %v2447 = vunpack.c.h.b16 %v2290
        %v2448 = vunpack.c.l.b16 %v2291
        %v2449 = vunpack.c.h.b16 %v2291
        %v2450 = vunpack.c.l.b16 %v2292
        %v2451 = vunpack.c.h.b16 %v2292
        %v2452 = vunpack.c.l.b16 %v2293
        %v2453 = vunpack.c.h.b16 %v2293
        %v2454 = vunpack.c.l.b16 %v2294
        %v2455 = vunpack.c.h.b16 %v2294
        %v2456 = vunpack.c.l.b16 %v2295
        %v2457 = vunpack.c.h.b16 %v2295
        %v2458 = vunpack.c.l.b16 %v2296
        %v2459 = vunpack.c.h.b16 %v2296
        %v2460 = vunpack.c.l.b16 %v2297
        %v2461 = vunpack.c.h.b16 %v2297
        %v2462 = vunpack.c.l.b16 %v2298
        %v2463 = vunpack.c.h.b16 %v2298
        %v2464 = vunpack.c.l.b16 %v2299
        %v2465 = vunpack.c.h.b16 %v2299
        %v2466 = vunpack.c.l.b16 %v2300
        %v2467 = vunpack.c.h.b16 %v2300
        %v2468 = vunpack.c.l.b16 %v2301
        %v2469 = vunpack.c.h.b16 %v2301
        %v2470 = vunpack.c.l.b16 %v2302
        %v2471 = vunpack.c.h.b16 %v2302
        %v2472 = vunpack.c.l.b16 %v2303
        %v2473 = vunpack.c.h.b16 %v2303
        %v2474 = vunpack.c.l.b16 %v2304
        %v2475 = vunpack.c.h.b16 %v2304
        %v2476 = vunpack.c.l.b16 %v2305
        %v2477 = vunpack.c.h.b16 %v2305
        %v2478 = vunpack.c.l.b16 %v2306
        %v2479 = vunpack.c.h.b16 %v2306
        %v2480 = vunpack.c.l.b16 %v2307
        %v2481 = vunpack.c.h.b16 %v2307
        %v2482 = vunpack.c.l.b16 %v2308
        %v2483 = vunpack.c.h.b16 %v2308
        %v2484 = vunpack.c.l.b16 %v2309
        %v2485 = vunpack.c.h.b16 %v2309
        %v2486 = vunpack.c.l.b16 %v2310
        %v2487 = vunpack.c.h.b16 %v2310
        %v2488 = vunpack.c.l.b16 %v2311
        %v2489 = vunpack.c.h.b16 %v2311
        %v2490 = vunpack.c.l.b16 %v2312
        %v2491 = vunpack.c.h.b16 %v2312
        %v2492 = vunpack.c.l.b16 %v2313
        %v2493 = vunpack.c.h.b16 %v2313
        %v2494 = vunpack.c.l.b16 %v2314
        %v2495 = vunpack.c.h.b16 %v2314
        %v2496 = vunpack.c.l.b16 %v2315
        %v2497 = vunpack.c.h.b16 %v2315
        %v2498 = vunpack.c.l.b16 %v2316
        %v2499 = vunpack.c.h.b16 %v2316
        %v2500 = vunpack.c.l.b16 %v2317
        %v2501 = vunpack.c.h.b16 %v2317
        %v2502 = vunpack.c.l.b16 %v2318
        %v2503 = vunpack.c.h.b16 %v2318
        %v2504 = vunpack.c.l.b16 %v2319
        %v2505 = vunpack.c.h.b16 %v2319
        %v2506 = vunpack.c.l.b16 %v2320
        %v2507 = vunpack.c.h.b16 %v2320
        %v2508 = vunpack.c.l.b16 %v2321
        %v2509 = vunpack.c.h.b16 %v2321
        %v2510 = vunpack.c.l.b16 %v2322
        %v2511 = vunpack.c.h.b16 %v2322
        %v2512 = vunpack.c.l.b16 %v2323
        %v2513 = vunpack.c.h.b16 %v2323
        %v2514 = vunpack.c.l.b16 %v2324
        %v2515 = vunpack.c.h.b16 %v2324
        %v2516 = vunpack.c.l.b16 %v2325
        %v2517 = vunpack.c.h.b16 %v2325
        %v2518 = vunpack.c.l.b16 %v2326
        %v2519 = vunpack.c.h.b16 %v2326
        %v2520 = vpack.c.b16 %v2394, %v2392
        %v2521 = vpack.c.b16 %v2395, %v2393
        %v2522 = vpack.c.b16 %v2398, %v2396
        %v2523 = vpack.c.b16 %v2399, %v2397
        %v2524 = vpack.c.b16 %v2402, %v2400
        %v2525 = vpack.c.b16 %v2403, %v2401
        %v2526 = vpack.c.b16 %v2406, %v2404
        %v2527 = vpack.c.b16 %v2407, %v2405
        %v2528 = vpack.c.b16 %v2410, %v2408
        %v2529 = vpack.c.b16 %v2411, %v2409
        %v2530 = vpack.c.b16 %v2414, %v2412
        %v2531 = vpack.c.b16 %v2415, %v2413
        %v2532 = vpack.c.b16 %v2418, %v2416
        %v2533 = vpack.c.b16 %v2419, %v2417
        %v2534 = vpack.c.b16 %v2422, %v2420
        %v2535 = vpack.c.b16 %v2423, %v2421
        %v2536 = vpack.c.b16 %v2426, %v2424
        %v2537 = vpack.c.b16 %v2427, %v2425
        %v2538 = vpack.c.b16 %v2430, %v2428
        %v2539 = vpack.c.b16 %v2431, %v2429
        %v2540 = vpack.c.b16 %v2434, %v2432
        %v2541 = vpack.c.b16 %v2435, %v2433
        %v2542 = vpack.c.b16 %v2438, %v2436
        %v2543 = vpack.c.b16 %v2439, %v2437
        %v2544 = vpack.c.b16 %v2442, %v2440
        %v2545 = vpack.c.b16 %v2443, %v2441
        %v2546 = vpack.c.b16 %v2446, %v2444
        %v2547 = vpack.c.b16 %v2447, %v2445
        %v2548 = vpack.c.b16 %v2450, %v2448
        %v2549 = vpack.c.b16 %v2451, %v2449
        %v2550 = vpack.c.b16 %v2454, %v2452
        %v2551 = vpack.c.b16 %v2455, %v2453
        %v2552 = vpack.c.b16 %v2458, %v2456
        %v2553 = vpack.c.b16 %v2459, %v2457
        %v2554 = vpack.c.b16 %v2462, %v2460
        %v2555 = vpack.c.b16 %v2463, %v2461
        %v2556 = vpack.c.b16 %v2466, %v2464
        %v2557 = vpack.c.b16 %v2467, %v2465
        %v2558 = vpack.c.b16 %v2470, %v2468
        %v2559 = vpack.c.b16 %v2471, %v2469
        %v2560 = vpack.c.b16 %v2474, %v2472
        %v2561 = vpack.c.b16 %v2475, %v2473
        %v2562 = vpack.c.b16 %v2478, %v2476
        %v2563 = vpack.c.b16 %v2479, %v2477
        %v2564 = vpack.c.b16 %v2482, %v2480
        %v2565 = vpack.c.b16 %v2483, %v2481
        %v2566 = vpack.c.b16 %v2486, %v2484
        %v2567 = vpack.c.b16 %v2487, %v2485
        %v2568 = vpack.c.b16 %v2490, %v2488
        %v2569 = vpack.c.b16 %v2491, %v2489
        %v2570 = vpack.c.b16 %v2494, %v2492
        %v2571 = vpack.c.b16 %v2495, %v2493
        %v2572 = vpack.c.b16 %v2498, %v2496
        %v2573 = vpack.c.b16 %v2499, %v2497
        %v2574 = vpack.c.b16 %v2502, %v2500
        %v2575 = vpack.c.b16 %v2503, %v2501
        %v2576 = vpack.c.b16 %v2506, %v2504
        %v2577 = vpack.c.b16 %v2507, %v2505
        %v2578 = vpack.c.b16 %v2510, %v2508
        %v2579 = vpack.c.b16 %v2511, %v2509
        %v2580 = vpack.c.b16 %v2514, %v2512
        %v2581 = vpack.c.b16 %v2515, %v2513
        %v2582 = vpack.c.b16 %v2518, %v2516
        %v2583 = vpack.c.b16 %v2519, %v2517
        %2648 = vmatprep.subr.bf16.mxu0 %v2521
        %2649 = vmatpush1.bf16.msra.mxu0 %v2520
        %2650 = vmatprep.subr.bf16.mxu0 %v2523
        %2651 = vmatpush1.bf16.msra.mxu0 %v2522
        %2652 = vmatprep.subr.bf16.mxu0 %v2525
        %2653 = vmatpush1.bf16.msra.mxu0 %v2524
        %2654 = vmatprep.subr.bf16.mxu0 %v2527
        %2655 = vmatpush1.bf16.msra.mxu0 %v2526
        %2656 = vmatprep.subr.bf16.mxu0 %v2529
        %2657 = vmatpush1.bf16.msra.mxu0 %v2528
        %2658 = vmatprep.subr.bf16.mxu0 %v2531
        %2659 = vmatpush1.bf16.msra.mxu0 %v2530
        %2660 = vmatprep.subr.bf16.mxu0 %v2533
        %2661 = vmatpush1.bf16.msra.mxu0 %v2532
        %2662 = vmatprep.subr.bf16.mxu0 %v2535
        %2663 = vmatpush1.bf16.msra.mxu0 %v2534
        %2664 = vmatprep.subr.bf16.mxu0 %v2537
        %2665 = vmatpush1.bf16.msra.mxu0 %v2536
        %2666 = vmatprep.subr.bf16.mxu0 %v2539
        %2667 = vmatpush1.bf16.msra.mxu0 %v2538
        %2668 = vmatprep.subr.bf16.mxu0 %v2541
        %2669 = vmatpush1.bf16.msra.mxu0 %v2540
        %2670 = vmatprep.subr.bf16.mxu0 %v2543
        %2671 = vmatpush1.bf16.msra.mxu0 %v2542
        %2672 = vmatprep.subr.bf16.mxu0 %v2545
        %2673 = vmatpush1.bf16.msra.mxu0 %v2544
        %2674 = vmatprep.subr.bf16.mxu0 %v2547
        %2675 = vmatpush1.bf16.msra.mxu0 %v2546
        %2676 = vmatprep.subr.bf16.mxu0 %v2549
        %2677 = vmatpush1.bf16.msra.mxu0 %v2548
        %2678 = vmatprep.subr.bf16.mxu0 %v2551
        %2679 = vmatpush1.bf16.msra.mxu0 %v2550
        %2680 = vmatprep.mubr.bf16.mxu0 %v2231
        %2681 = vmatmul.mubr.bf16.gmra.mrb[0].mxu0 %v2230
        %v2682 = vpop.f32.mrb[0].mxu0
        %v2683 = vadd.f32 %v2327, %v2682
        %v2684 = vpop.f32.mrb[0].mxu0
        %v2685 = vadd.f32 %v2327, %v2684
        %v2686 = vpop.f32.mrb[0].mxu0
        %v2687 = vadd.f32 %v2327, %v2686
        %v2688 = vpop.f32.mrb[0].mxu0
        %v2689 = vadd.f32 %v2327, %v2688
        %2690 = vmatprep.mubr.bf16.mxu0 %v2235
        %2691 = vmatmul.mubr.bf16.gmra.mrb[0].mxu0 %v2234
        %v2692 = vpop.f32.mrb[0].mxu0
        %v2693 = vadd.f32 %v2327, %v2692
        %v2694 = vpop.f32.mrb[0].mxu0
        %v2695 = vadd.f32 %v2327, %v2694
        %v2696 = vpop.f32.mrb[0].mxu0
        %v2697 = vadd.f32 %v2327, %v2696
        %v2698 = vpop.f32.mrb[0].mxu0
        %v2699 = vadd.f32 %v2327, %v2698
        %2700 = vmatprep.mubr.bf16.mxu0 %v2239
        %2701 = vmatmul.mubr.bf16.gmra.mrb[0].mxu0 %v2238
        %v2702 = vpop.f32.mrb[0].mxu0
        %v2703 = vadd.f32 %v2327, %v2702
        %v2704 = vpop.f32.mrb[0].mxu0
        %v2705 = vadd.f32 %v2327, %v2704
        %v2706 = vpop.f32.mrb[0].mxu0
        %v2707 = vadd.f32 %v2327, %v2706
        %v2708 = vpop.f32.mrb[0].mxu0
        %v2709 = vadd.f32 %v2327, %v2708
        %2710 = vmatprep.mubr.bf16.mxu0 %v2243
        %2711 = vmatmul.mubr.bf16.gmra.mrb[0].mxu0 %v2242
        %v2712 = vpop.f32.mrb[0].mxu0
        %v2713 = vadd.f32 %v2327, %v2712
        %v2714 = vpop.f32.mrb[0].mxu0
        %v2715 = vadd.f32 %v2327, %v2714
        %v2716 = vpop.f32.mrb[0].mxu0
        %v2717 = vadd.f32 %v2327, %v2716
        %v2718 = vpop.f32.mrb[0].mxu0
        %v2719 = vadd.f32 %v2327, %v2718
        %2720 = vmatprep.mubr.bf16.mxu0 %v2247
        %2721 = vmatmul.mubr.bf16.gmra.mrb[0].mxu0 %v2246
        %v2722 = vpop.f32.mrb[0].mxu0
        %v2723 = vadd.f32 %v2327, %v2722
        %v2724 = vpop.f32.mrb[0].mxu0
        %v2725 = vadd.f32 %v2327, %v2724
        %v2726 = vpop.f32.mrb[0].mxu0
        %v2727 = vadd.f32 %v2327, %v2726
        %v2728 = vpop.f32.mrb[0].mxu0
        %v2729 = vadd.f32 %v2327, %v2728
        %2730 = vmatprep.mubr.bf16.mxu0 %v2251
        %2731 = vmatmul.mubr.bf16.gmra.mrb[0].mxu0 %v2250
        %v2732 = vpop.f32.mrb[0].mxu0
        %v2733 = vadd.f32 %v2327, %v2732
        %v2734 = vpop.f32.mrb[0].mxu0
        %v2735 = vadd.f32 %v2327, %v2734
        %v2736 = vpop.f32.mrb[0].mxu0
        %v2737 = vadd.f32 %v2327, %v2736
        %v2738 = vpop.f32.mrb[0].mxu0
        %v2739 = vadd.f32 %v2327, %v2738
        %2740 = vmatprep.mubr.bf16.mxu0 %v2255
        %2741 = vmatmul.mubr.bf16.gmra.mrb[0].mxu0 %v2254
        %v2742 = vpop.f32.mrb[0].mxu0
        %v2743 = vadd.f32 %v2327, %v2742
        %v2744 = vpop.f32.mrb[0].mxu0
        %v2745 = vadd.f32 %v2327, %v2744
        %v2746 = vpop.f32.mrb[0].mxu0
        %v2747 = vadd.f32 %v2327, %v2746
        %v2748 = vpop.f32.mrb[0].mxu0
        %v2749 = vadd.f32 %v2327, %v2748
        %2750 = vmatprep.mubr.bf16.mxu0 %v2259
        %2751 = vmatmul.mubr.bf16.gmra.mrb[0].mxu0 %v2258
        %v2752 = vpop.f32.mrb[0].mxu0
        %v2753 = vadd.f32 %v2327, %v2752
        %v2754 = vpop.f32.mrb[0].mxu0
        %v2755 = vadd.f32 %v2327, %v2754
        %v2756 = vpop.f32.mrb[0].mxu0
        %v2757 = vadd.f32 %v2327, %v2756
        %v2758 = vpop.f32.mrb[0].mxu0
        %v2759 = vadd.f32 %v2327, %v2758
        %2760 = vdwg.mxu0
        %2761 = vmatprep.subr.bf16.mxu0 %v2553
        %2762 = vmatpush1.bf16.msra.mxu0 %v2552
        %2763 = vmatprep.subr.bf16.mxu0 %v2555
        %2764 = vmatpush1.bf16.msra.mxu0 %v2554
        %2765 = vmatprep.subr.bf16.mxu0 %v2557
        %2766 = vmatpush1.bf16.msra.mxu0 %v2556
        %2767 = vmatprep.subr.bf16.mxu0 %v2559
        %2768 = vmatpush1.bf16.msra.mxu0 %v2558
        %2769 = vmatprep.subr.bf16.mxu0 %v2561
        %2770 = vmatpush1.bf16.msra.mxu0 %v2560
        %2771 = vmatprep.subr.bf16.mxu0 %v2563
        %2772 = vmatpush1.bf16.msra.mxu0 %v2562
        %2773 = vmatprep.subr.bf16.mxu0 %v2565
        %2774 = vmatpush1.bf16.msra.mxu0 %v2564
        %2775 = vmatprep.subr.bf16.mxu0 %v2567
        %2776 = vmatpush1.bf16.msra.mxu0 %v2566
        %2777 = vmatprep.subr.bf16.mxu0 %v2569
        %2778 = vmatpush1.bf16.msra.mxu0 %v2568
        %2779 = vmatprep.subr.bf16.mxu0 %v2571
        %2780 = vmatpush1.bf16.msra.mxu0 %v2570
        %2781 = vmatprep.subr.bf16.mxu0 %v2573
        %2782 = vmatpush1.bf16.msra.mxu0 %v2572
        %2783 = vmatprep.subr.bf16.mxu0 %v2575
        %2784 = vmatpush1.bf16.msra.mxu0 %v2574
        %2785 = vmatprep.subr.bf16.mxu0 %v2577
        %2786 = vmatpush1.bf16.msra.mxu0 %v2576
        %2787 = vmatprep.subr.bf16.mxu0 %v2579
        %2788 = vmatpush1.bf16.msra.mxu0 %v2578
        %2789 = vmatprep.subr.bf16.mxu0 %v2581
        %2790 = vmatpush1.bf16.msra.mxu0 %v2580
        %2791 = vmatprep.subr.bf16.mxu0 %v2583
        %2792 = vmatpush1.bf16.msra.mxu0 %v2582
        %2793 = vmatprep.mubr.bf16.mxu0 %v2233
        %2794 = vmatmul.mubr.bf16.gmra.mrb[0].mxu0 %v2232
        %v2795 = vpop.f32.mrb[0].mxu0
        %v2796 = vadd.f32 %v2683, %v2795
        %v2797 = vpop.f32.mrb[0].mxu0
        %v2798 = vadd.f32 %v2685, %v2797
        %v2799 = vpop.f32.mrb[0].mxu0
        %v2800 = vadd.f32 %v2687, %v2799
        %v2801 = vpop.f32.mrb[0].mxu0
        %v2802 = vadd.f32 %v2689, %v2801
        %2803 = vmatprep.mubr.bf16.mxu0 %v2237
        %2804 = vmatmul.mubr.bf16.gmra.mrb[0].mxu0 %v2236
        %v2805 = vpop.f32.mrb[0].mxu0
        %v2806 = vadd.f32 %v2693, %v2805
        %v2807 = vpop.f32.mrb[0].mxu0
        %v2808 = vadd.f32 %v2695, %v2807
        %v2809 = vpop.f32.mrb[0].mxu0
        %v2810 = vadd.f32 %v2697, %v2809
        %v2811 = vpop.f32.mrb[0].mxu0
        %v2812 = vadd.f32 %v2699, %v2811
        %2813 = vmatprep.mubr.bf16.mxu0 %v2241
        %2814 = vmatmul.mubr.bf16.gmra.mrb[0].mxu0 %v2240
        %v2815 = vpop.f32.mrb[0].mxu0
        %v2816 = vadd.f32 %v2703, %v2815
        %v2817 = vpop.f32.mrb[0].mxu0
        %v2818 = vadd.f32 %v2705, %v2817
        %v2819 = vpop.f32.mrb[0].mxu0
        %v2820 = vadd.f32 %v2707, %v2819
        %v2821 = vpop.f32.mrb[0].mxu0
        %v2822 = vadd.f32 %v2709, %v2821
        %2823 = vmatprep.mubr.bf16.mxu0 %v2245
        %2824 = vmatmul.mubr.bf16.gmra.mrb[0].mxu0 %v2244
        %v2825 = vpop.f32.mrb[0].mxu0
        %v2826 = vadd.f32 %v2713, %v2825
        %v2827 = vpop.f32.mrb[0].mxu0
        %v2828 = vadd.f32 %v2715, %v2827
        %v2829 = vpop.f32.mrb[0].mxu0
        %v2830 = vadd.f32 %v2717, %v2829
        %v2831 = vpop.f32.mrb[0].mxu0
        %v2832 = vadd.f32 %v2719, %v2831
        %2833 = vmatprep.mubr.bf16.mxu0 %v2249
        %2834 = vmatmul.mubr.bf16.gmra.mrb[0].mxu0 %v2248
        %v2835 = vpop.f32.mrb[0].mxu0
        %v2836 = vadd.f32 %v2723, %v2835
        %v2837 = vpop.f32.mrb[0].mxu0
        %v2838 = vadd.f32 %v2725, %v2837
        %v2839 = vpop.f32.mrb[0].mxu0
        %v2840 = vadd.f32 %v2727, %v2839
        %v2841 = vpop.f32.mrb[0].mxu0
        %v2842 = vadd.f32 %v2729, %v2841
        %2843 = vmatprep.mubr.bf16.mxu0 %v2253
        %2844 = vmatmul.mubr.bf16.gmra.mrb[0].mxu0 %v2252
        %v2845 = vpop.f32.mrb[0].mxu0
        %v2846 = vadd.f32 %v2733, %v2845
        %v2847 = vpop.f32.mrb[0].mxu0
        %v2848 = vadd.f32 %v2735, %v2847
        %v2849 = vpop.f32.mrb[0].mxu0
        %v2850 = vadd.f32 %v2737, %v2849
        %v2851 = vpop.f32.mrb[0].mxu0
        %v2852 = vadd.f32 %v2739, %v2851
        %2853 = vmatprep.mubr.bf16.mxu0 %v2257
        %2854 = vmatmul.mubr.bf16.gmra.mrb[0].mxu0 %v2256
        %v2855 = vpop.f32.mrb[0].mxu0
        %v2856 = vadd.f32 %v2743, %v2855
        %v2857 = vpop.f32.mrb[0].mxu0
        %v2858 = vadd.f32 %v2745, %v2857
        %v2859 = vpop.f32.mrb[0].mxu0
        %v2860 = vadd.f32 %v2747, %v2859
        %v2861 = vpop.f32.mrb[0].mxu0
        %v2862 = vadd.f32 %v2749, %v2861
        %2863 = vmatprep.mubr.bf16.mxu0 %v2261
        %2864 = vmatmul.mubr.bf16.gmra.mrb[0].mxu0 %v2260
        %v2865 = vpop.f32.mrb[0].mxu0
        %v2866 = vadd.f32 %v2753, %v2865
        %v2867 = vpop.f32.mrb[0].mxu0
        %v2868 = vadd.f32 %v2755, %v2867
        %v2869 = vpop.f32.mrb[0].mxu0
        %v2870 = vadd.f32 %v2757, %v2869
        %v2871 = vpop.f32.mrb[0].mxu0
        %v2872 = vadd.f32 %v2759, %v2871
        %2873 = vdwg.mxu0
        %v2874 = vmax.f32 %v2796, 0.0
        %v2875 = vmax.f32 %v2798, 0.0
        %v2876 = vmax.f32 %v2800, 0.0
        %v2877 = vmax.f32 %v2802, 0.0
        %v2878 = vmax.f32 %v2806, 0.0
        %v2879 = vmax.f32 %v2808, 0.0
        %v2880 = vmax.f32 %v2810, 0.0
        %v2881 = vmax.f32 %v2812, 0.0
        %v2882 = vmax.f32 %v2816, 0.0
        %v2883 = vmax.f32 %v2818, 0.0
        %v2884 = vmax.f32 %v2820, 0.0
        %v2885 = vmax.f32 %v2822, 0.0
        %v2886 = vmax.f32 %v2826, 0.0
        %v2887 = vmax.f32 %v2828, 0.0
        %v2888 = vmax.f32 %v2830, 0.0
        %v2889 = vmax.f32 %v2832, 0.0
        %v2890 = vmax.f32 %v2836, 0.0
        %v2891 = vmax.f32 %v2838, 0.0
        %v2892 = vmax.f32 %v2840, 0.0
        %v2893 = vmax.f32 %v2842, 0.0
        %v2894 = vmax.f32 %v2846, 0.0
        %v2895 = vmax.f32 %v2848, 0.0
        %v2896 = vmax.f32 %v2850, 0.0
        %v2897 = vmax.f32 %v2852, 0.0
        %v2898 = vmax.f32 %v2856, 0.0
        %v2899 = vmax.f32 %v2858, 0.0
        %v2900 = vmax.f32 %v2860, 0.0
        %v2901 = vmax.f32 %v2862, 0.0
        %v2902 = vmax.f32 %v2866, 0.0
        %v2903 = vmax.f32 %v2868, 0.0
        %v2904 = vmax.f32 %v2870, 0.0
        %v2905 = vmax.f32 %v2872, 0.0
        %v2906 = vpack.c.bf16 %v2876, %v2874
        %v2907 = vpack.c.bf16 %v2877, %v2875
        %v2908 = vpack.c.bf16 %v2880, %v2878
        %v2909 = vpack.c.bf16 %v2881, %v2879
        %v2910 = vpack.c.bf16 %v2884, %v2882
        %v2911 = vpack.c.bf16 %v2885, %v2883
        %v2912 = vpack.c.bf16 %v2888, %v2886
        %v2913 = vpack.c.bf16 %v2889, %v2887
        %v2914 = vpack.c.bf16 %v2892, %v2890
        %v2915 = vpack.c.bf16 %v2893, %v2891
        %v2916 = vpack.c.bf16 %v2896, %v2894
        %v2917 = vpack.c.bf16 %v2897, %v2895
        %v2918 = vpack.c.bf16 %v2900, %v2898
        %v2919 = vpack.c.bf16 %v2901, %v2899
        %v2920 = vpack.c.bf16 %v2904, %v2902
        %v2921 = vpack.c.bf16 %v2905, %v2903
        %v2922 = vld [vmem:[#allocation12] sm:$0x1]
        %v2923 = vld [vmem:[%s8] sm:$0xf]
        %v2924 = vld [vmem:[%s8 + $0x4] sm:$0xf]
        %v2925 = vld [vmem:[%s8 + $0x8] sm:$0xf]
        %v2926 = vld [vmem:[%s8 + $0xc] sm:$0xf]
        %v2927 = vld [vmem:[%s8 + $0x10] sm:$0xf]
        %v2928 = vld [vmem:[%s8 + $0x14] sm:$0xf]
        %v2929 = vld [vmem:[%s8 + $0x18] sm:$0xf]
        %v2930 = vld [vmem:[%s8 + $0x1c] sm:$0xf]
        %v2931 = vld [vmem:[%s8 + $0x20] sm:$0xf]
        %v2932 = vld [vmem:[%s8 + $0x24] sm:$0xf]
        %v2933 = vld [vmem:[%s8 + $0x28] sm:$0xf]
        %v2934 = vld [vmem:[%s8 + $0x2c] sm:$0xf]
        %v2935 = vld [vmem:[%s8 + $0x30] sm:$0xf]
        %v2936 = vld [vmem:[%s8 + $0x34] sm:$0xf]
        %v2937 = vld [vmem:[%s8 + $0x38] sm:$0xf]
        %v2938 = vld [vmem:[%s8 + $0x3c] sm:$0xf]
        %v2939 = vld [vmem:[%s8 + $0x40] sm:$0xf]
        %v2940 = vld [vmem:[%s8 + $0x44] sm:$0xf]
        %v2941 = vld [vmem:[%s8 + $0x48] sm:$0xf]
        %v2942 = vld [vmem:[%s8 + $0x4c] sm:$0xf]
        %v2943 = vld [vmem:[%s8 + $0x50] sm:$0xf]
        %v2944 = vld [vmem:[%s8 + $0x54] sm:$0xf]
        %v2945 = vld [vmem:[%s8 + $0x58] sm:$0xf]
        %v2946 = vld [vmem:[%s8 + $0x5c] sm:$0xf]
        %v2947 = vld [vmem:[%s8 + $0x60] sm:$0xf]
        %v2948 = vld [vmem:[%s8 + $0x64] sm:$0xf]
        %v2949 = vld [vmem:[%s8 + $0x68] sm:$0xf]
        %v2950 = vld [vmem:[%s8 + $0x6c] sm:$0xf]
        %v2951 = vld [vmem:[%s8 + $0x70] sm:$0xf]
        %v2952 = vld [vmem:[%s8 + $0x74] sm:$0xf]
        %v2953 = vld [vmem:[%s8 + $0x78] sm:$0xf]
        %v2954 = vld [vmem:[%s8 + $0x7c] sm:$0xf]
        %v2956 = vlaneseq
        %v2957 = vshrl.u32 %v2956, 7
        %v2958 = vsub.s32 0, %v2957
        %v2959 = vrot.slane %v2922, %v2958
        %v2993 = vunpack.c.l.b16 %v2923
        %v2994 = vunpack.c.l.b16 %v2924
        %v2995 = vunpack.c.l.b16 %v2925
        %v2996 = vunpack.c.l.b16 %v2926
        %v2997 = vunpack.c.l.b16 %v2927
        %v2998 = vunpack.c.l.b16 %v2928
        %v2999 = vunpack.c.l.b16 %v2929
        %v3000 = vunpack.c.l.b16 %v2930
        %v3001 = vunpack.c.l.b16 %v2931
        %v3002 = vunpack.c.l.b16 %v2932
        %v3003 = vunpack.c.l.b16 %v2933
        %v3004 = vunpack.c.l.b16 %v2934
        %v3005 = vunpack.c.l.b16 %v2935
        %v3006 = vunpack.c.l.b16 %v2936
        %v3007 = vunpack.c.l.b16 %v2937
        %v3008 = vunpack.c.l.b16 %v2938
        %v3009 = vunpack.c.l.b16 %v2939
        %v3010 = vunpack.c.l.b16 %v2940
        %v3011 = vunpack.c.l.b16 %v2941
        %v3012 = vunpack.c.l.b16 %v2942
        %v3013 = vunpack.c.l.b16 %v2943
        %v3014 = vunpack.c.l.b16 %v2944
        %v3015 = vunpack.c.l.b16 %v2945
        %v3016 = vunpack.c.l.b16 %v2946
        %v3017 = vunpack.c.l.b16 %v2947
        %v3018 = vunpack.c.l.b16 %v2948
        %v3019 = vunpack.c.l.b16 %v2949
        %v3020 = vunpack.c.l.b16 %v2950
        %v3021 = vunpack.c.l.b16 %v2951
        %v3022 = vunpack.c.l.b16 %v2952
        %v3023 = vunpack.c.l.b16 %v2953
        %v3024 = vunpack.c.l.b16 %v2954
        %v3025 = vpack.c.b16 %v2994, %v2993
        %v3026 = vpack.c.b16 %v2996, %v2995
        %v3027 = vpack.c.b16 %v2998, %v2997
        %v3028 = vpack.c.b16 %v3000, %v2999
        %v3029 = vpack.c.b16 %v3002, %v3001
        %v3030 = vpack.c.b16 %v3004, %v3003
        %v3031 = vpack.c.b16 %v3006, %v3005
        %v3032 = vpack.c.b16 %v3008, %v3007
        %v3033 = vpack.c.b16 %v3010, %v3009
        %v3034 = vpack.c.b16 %v3012, %v3011
        %v3035 = vpack.c.b16 %v3014, %v3013
        %v3036 = vpack.c.b16 %v3016, %v3015
        %v3037 = vpack.c.b16 %v3018, %v3017
        %v3038 = vpack.c.b16 %v3020, %v3019
        %v3039 = vpack.c.b16 %v3022, %v3021
        %v3040 = vpack.c.b16 %v3024, %v3023
        %3057 = vmatprep.subr.bf16.mxu0 0
        %3058 = vmatpush1.bf16.msra.mxu0 %v3025
        %3059 = vmatprep.subr.bf16.mxu0 0
        %3060 = vmatpush1.bf16.msra.mxu0 %v3026
        %3061 = vmatprep.subr.bf16.mxu0 0
        %3062 = vmatpush1.bf16.msra.mxu0 %v3027
        %3063 = vmatprep.subr.bf16.mxu0 0
        %3064 = vmatpush1.bf16.msra.mxu0 %v3028
        %3065 = vmatprep.subr.bf16.mxu0 0
        %3066 = vmatpush1.bf16.msra.mxu0 %v3029
        %3067 = vmatprep.subr.bf16.mxu0 0
        %3068 = vmatpush1.bf16.msra.mxu0 %v3030
        %3069 = vmatprep.subr.bf16.mxu0 0
        %3070 = vmatpush1.bf16.msra.mxu0 %v3031
        %3071 = vmatprep.subr.bf16.mxu0 0
        %3072 = vmatpush1.bf16.msra.mxu0 %v3032
        %3073 = vmatprep.subr.bf16.mxu0 0
        %3074 = vmatpush1.bf16.msra.mxu0 %v3033
        %3075 = vmatprep.subr.bf16.mxu0 0
        %3076 = vmatpush1.bf16.msra.mxu0 %v3034
        %3077 = vmatprep.subr.bf16.mxu0 0
        %3078 = vmatpush1.bf16.msra.mxu0 %v3035
        %3079 = vmatprep.subr.bf16.mxu0 0
        %3080 = vmatpush1.bf16.msra.mxu0 %v3036
        %3081 = vmatprep.subr.bf16.mxu0 0
        %3082 = vmatpush1.bf16.msra.mxu0 %v3037
        %3083 = vmatprep.subr.bf16.mxu0 0
        %3084 = vmatpush1.bf16.msra.mxu0 %v3038
        %3085 = vmatprep.subr.bf16.mxu0 0
        %3086 = vmatpush1.bf16.msra.mxu0 %v3039
        %3087 = vmatprep.subr.bf16.mxu0 0
        %3088 = vmatpush1.bf16.msra.mxu0 %v3040
        %3089 = vmatprep.mubr.bf16.mxu0 %v2907
        %3090 = vmatmul.mubr.bf16.gmra.mrb[0].mxu0 %v2906
        %v3091 = vpop.f32.mrb[0].mxu0
        %v3092 = vadd.f32 %v2959, %v3091
        %v3093 = vpop.f32.mrb[0].mxu0
        %v3094 = vpop.f32.mrb[0].mxu0
        %v3095 = vadd.f32 %v2959, %v3094
        %v3096 = vpop.f32.mrb[0].mxu0
        %3097 = vmatprep.mubr.bf16.mxu0 %v2909
        %3098 = vmatmul.mubr.bf16.gmra.mrb[0].mxu0 %v2908
        %v3099 = vpop.f32.mrb[0].mxu0
        %v3100 = vadd.f32 %v2959, %v3099
        %v3101 = vpop.f32.mrb[0].mxu0
        %v3102 = vpop.f32.mrb[0].mxu0
        %v3103 = vadd.f32 %v2959, %v3102
        %v3104 = vpop.f32.mrb[0].mxu0
        %3105 = vmatprep.mubr.bf16.mxu0 %v2911
        %3106 = vmatmul.mubr.bf16.gmra.mrb[0].mxu0 %v2910
        %v3107 = vpop.f32.mrb[0].mxu0
        %v3108 = vadd.f32 %v2959, %v3107
        %v3109 = vpop.f32.mrb[0].mxu0
        %v3110 = vpop.f32.mrb[0].mxu0
        %v3111 = vadd.f32 %v2959, %v3110
        %v3112 = vpop.f32.mrb[0].mxu0
        %3113 = vmatprep.mubr.bf16.mxu0 %v2913
        %3114 = vmatmul.mubr.bf16.gmra.mrb[0].mxu0 %v2912
        %v3115 = vpop.f32.mrb[0].mxu0
        %v3116 = vadd.f32 %v2959, %v3115
        %v3117 = vpop.f32.mrb[0].mxu0
        %v3118 = vpop.f32.mrb[0].mxu0
        %v3119 = vadd.f32 %v2959, %v3118
        %v3120 = vpop.f32.mrb[0].mxu0
        %3121 = vmatprep.mubr.bf16.mxu0 %v2915
        %3122 = vmatmul.mubr.bf16.gmra.mrb[0].mxu0 %v2914
        %v3123 = vpop.f32.mrb[0].mxu0
        %v3124 = vadd.f32 %v2959, %v3123
        %v3125 = vpop.f32.mrb[0].mxu0
        %v3126 = vpop.f32.mrb[0].mxu0
        %v3127 = vadd.f32 %v2959, %v3126
        %v3128 = vpop.f32.mrb[0].mxu0
        %3129 = vmatprep.mubr.bf16.mxu0 %v2917
        %3130 = vmatmul.mubr.bf16.gmra.mrb[0].mxu0 %v2916
        %v3131 = vpop.f32.mrb[0].mxu0
        %v3132 = vadd.f32 %v2959, %v3131
        %v3133 = vpop.f32.mrb[0].mxu0
        %v3134 = vpop.f32.mrb[0].mxu0
        %v3135 = vadd.f32 %v2959, %v3134
        %v3136 = vpop.f32.mrb[0].mxu0
        %3137 = vmatprep.mubr.bf16.mxu0 %v2919
        %3138 = vmatmul.mubr.bf16.gmra.mrb[0].mxu0 %v2918
        %v3139 = vpop.f32.mrb[0].mxu0
        %v3140 = vadd.f32 %v2959, %v3139
        %v3141 = vpop.f32.mrb[0].mxu0
        %v3142 = vpop.f32.mrb[0].mxu0
        %v3143 = vadd.f32 %v2959, %v3142
        %v3144 = vpop.f32.mrb[0].mxu0
        %3145 = vmatprep.mubr.bf16.mxu0 %v2921
        %3146 = vmatmul.mubr.bf16.gmra.mrb[0].mxu0 %v2920
        %v3147 = vpop.f32.mrb[0].mxu0
        %v3148 = vadd.f32 %v2959, %v3147
        %v3149 = vpop.f32.mrb[0].mxu0
        %v3150 = vpop.f32.mrb[0].mxu0
        %v3151 = vadd.f32 %v2959, %v3150
        %v3152 = vpop.f32.mrb[0].mxu0
        %3153 = vdwg.mxu0
        %v3154 = vmax.f32 %v3092, 0.0
        %v3155 = vmax.f32 %v3095, 0.0
        %v3156 = vmax.f32 %v3100, 0.0
        %v3157 = vmax.f32 %v3103, 0.0
        %v3158 = vmax.f32 %v3108, 0.0
        %v3159 = vmax.f32 %v3111, 0.0
        %v3160 = vmax.f32 %v3116, 0.0
        %v3161 = vmax.f32 %v3119, 0.0
        %v3162 = vmax.f32 %v3124, 0.0
        %v3163 = vmax.f32 %v3127, 0.0
        %v3164 = vmax.f32 %v3132, 0.0
        %v3165 = vmax.f32 %v3135, 0.0
        %v3166 = vmax.f32 %v3140, 0.0
        %v3167 = vmax.f32 %v3143, 0.0
        %v3168 = vmax.f32 %v3148, 0.0
        %v3169 = vmax.f32 %v3151, 0.0
        %v3170 = vpack.c.bf16 %v3155, %v3154
        %v3171 = vpack.c.bf16 %v3157, %v3156
        %v3172 = vpack.c.bf16 %v3159, %v3158
        %v3173 = vpack.c.bf16 %v3161, %v3160
        %v3174 = vpack.c.bf16 %v3163, %v3162
        %v3175 = vpack.c.bf16 %v3165, %v3164
        %v3176 = vpack.c.bf16 %v3167, %v3166
        %v3177 = vpack.c.bf16 %v3169, %v3168
        %v3178 = vld [vmem:[%s11] sm:$0x3]
        %v3179 = vld [vmem:[%s10] sm:$0xff]
        %v3180 = vld [vmem:[%s10 + $0x8] sm:$0xff]
        %v3181 = vld [vmem:[%s10 + $0x10] sm:$0xff]
        %v3182 = vld [vmem:[%s10 + $0x18] sm:$0xff]
        %v3183 = vld [vmem:[%s10 + $0x20] sm:$0xff]
        %v3184 = vld [vmem:[%s10 + $0x28] sm:$0xff]
        %v3185 = vld [vmem:[%s10 + $0x30] sm:$0xff]
        %v3186 = vld [vmem:[%s10 + $0x38] sm:$0xff]
        %v3188 = vlaneseq
        %v3189 = vshrl.u32 %v3188, 7
        %v3190 = vsub.s32 0, %v3189
        %v3191 = vrot.slane %v3178, %v3190
        %v3192 = vlaneseq
        %v3193 = vshrl.u32 %v3192, 7
        %v3194 = vsub.s32 1, %v3193
        %v3195 = vrot.slane %v3178, %v3194
        %v3206 = vunpack.c.l.b16 %v3179
        %v3207 = vunpack.c.h.b16 %v3179
        %v3208 = vunpack.c.l.b16 %v3180
        %v3209 = vunpack.c.h.b16 %v3180
        %v3210 = vunpack.c.l.b16 %v3181
        %v3211 = vunpack.c.h.b16 %v3181
        %v3212 = vunpack.c.l.b16 %v3182
        %v3213 = vunpack.c.h.b16 %v3182
        %v3214 = vunpack.c.l.b16 %v3183
        %v3215 = vunpack.c.h.b16 %v3183
        %v3216 = vunpack.c.l.b16 %v3184
        %v3217 = vunpack.c.h.b16 %v3184
        %v3218 = vunpack.c.l.b16 %v3185
        %v3219 = vunpack.c.h.b16 %v3185
        %v3220 = vunpack.c.l.b16 %v3186
        %v3221 = vunpack.c.h.b16 %v3186
        %v3222 = vpack.c.b16 %v3208, %v3206
        %v3223 = vpack.c.b16 %v3209, %v3207
        %v3224 = vpack.c.b16 %v3212, %v3210
        %v3225 = vpack.c.b16 %v3213, %v3211
        %v3226 = vpack.c.b16 %v3216, %v3214
        %v3227 = vpack.c.b16 %v3217, %v3215
        %v3228 = vpack.c.b16 %v3220, %v3218
        %v3229 = vpack.c.b16 %v3221, %v3219
        %vm3238 = vcmask 523264
        %v3240 = vsel %vm3238, %v3170, 0
        %v3243 = vsel %vm3238, %v3171, 0
        %v3246 = vsel %vm3238, %v3172, 0
        %v3249 = vsel %vm3238, %v3173, 0
        %v3252 = vsel %vm3238, %v3174, 0
        %v3255 = vsel %vm3238, %v3175, 0
        %v3258 = vsel %vm3238, %v3176, 0
        %v3261 = vsel %vm3238, %v3177, 0
        %3263 = vmatprep.subr.bf16.mxu0 %v3223
        %3264 = vmatpush1.bf16.msra.mxu0 %v3222
        %3265 = vmatprep.subr.bf16.mxu0 %v3225
        %3266 = vmatpush1.bf16.msra.mxu0 %v3224
        %3267 = vmatprep.subr.bf16.mxu0 %v3227
        %3268 = vmatpush1.bf16.msra.mxu0 %v3226
        %3269 = vmatprep.subr.bf16.mxu0 %v3229
        %3270 = vmatpush1.bf16.msra.mxu0 %v3228
        %3271 = vmatprep.subr.bf16.mxu0 0
        %3272 = vmatpush1.bf16.msra.mxu0 0
        %3273 = vmatprep.subr.bf16.mxu0 0
        %3274 = vmatpush1.bf16.msra.mxu0 0
        %3275 = vmatprep.subr.bf16.mxu0 0
        %3276 = vmatpush1.bf16.msra.mxu0 0
        %3277 = vmatprep.subr.bf16.mxu0 0
        %3278 = vmatpush1.bf16.msra.mxu0 0
        %3279 = vmatprep.subr.bf16.mxu0 0
        %3280 = vmatpush1.bf16.msra.mxu0 0
        %3281 = vmatprep.subr.bf16.mxu0 0
        %3282 = vmatpush1.bf16.msra.mxu0 0
        %3283 = vmatprep.subr.bf16.mxu0 0
        %3284 = vmatpush1.bf16.msra.mxu0 0
        %3285 = vmatprep.subr.bf16.mxu0 0
        %3286 = vmatpush1.bf16.msra.mxu0 0
        %3287 = vmatprep.subr.bf16.mxu0 0
        %3288 = vmatpush1.bf16.msra.mxu0 0
        %3289 = vmatprep.subr.bf16.mxu0 0
        %3290 = vmatpush1.bf16.msra.mxu0 0
        %3291 = vmatprep.subr.bf16.mxu0 0
        %3292 = vmatpush1.bf16.msra.mxu0 0
        %3293 = vmatprep.subr.bf16.mxu0 0
        %3294 = vmatpush1.bf16.msra.mxu0 0
        %3295 = vmatprep.mubr.bf16.mxu0 0
        %3296 = vmatmul.mubr.bf16.gmra.mrb[0].mxu0 %v3240
        %v3297 = vpop.f32.mrb[0].mxu0
        %v3298 = vadd.f32 %v3191, %v3297
        %v3299 = vpop.f32.mrb[0].mxu0
        %v3300 = vadd.f32 %v3195, %v3299
        %v3301 = vpop.f32.mrb[0].mxu0
        %v3302 = vadd.f32 %v3191, %v3301
        %v3303 = vpop.f32.mrb[0].mxu0
        %v3304 = vadd.f32 %v3195, %v3303
        %3305 = vmatprep.mubr.bf16.mxu0 0
        %3306 = vmatmul.mubr.bf16.gmra.mrb[0].mxu0 %v3243
        %v3307 = vpop.f32.mrb[0].mxu0
        %v3308 = vadd.f32 %v3191, %v3307
        %v3309 = vpop.f32.mrb[0].mxu0
        %v3310 = vadd.f32 %v3195, %v3309
        %v3311 = vpop.f32.mrb[0].mxu0
        %v3312 = vadd.f32 %v3191, %v3311
        %v3313 = vpop.f32.mrb[0].mxu0
        %v3314 = vadd.f32 %v3195, %v3313
        %3315 = vmatprep.mubr.bf16.mxu0 0
        %3316 = vmatmul.mubr.bf16.gmra.mrb[0].mxu0 %v3246
        %v3317 = vpop.f32.mrb[0].mxu0
        %v3318 = vadd.f32 %v3191, %v3317
        %v3319 = vpop.f32.mrb[0].mxu0
        %v3320 = vadd.f32 %v3195, %v3319
        %v3321 = vpop.f32.mrb[0].mxu0
        %v3322 = vadd.f32 %v3191, %v3321
        %v3323 = vpop.f32.mrb[0].mxu0
        %v3324 = vadd.f32 %v3195, %v3323
        %3325 = vmatprep.mubr.bf16.mxu0 0
        %3326 = vmatmul.mubr.bf16.gmra.mrb[0].mxu0 %v3249
        %v3327 = vpop.f32.mrb[0].mxu0
        %v3328 = vadd.f32 %v3191, %v3327
        %v3329 = vpop.f32.mrb[0].mxu0
        %v3330 = vadd.f32 %v3195, %v3329
        %v3331 = vpop.f32.mrb[0].mxu0
        %v3332 = vadd.f32 %v3191, %v3331
        %v3333 = vpop.f32.mrb[0].mxu0
        %v3334 = vadd.f32 %v3195, %v3333
        %3335 = vmatprep.mubr.bf16.mxu0 0
        %3336 = vmatmul.mubr.bf16.gmra.mrb[0].mxu0 %v3252
        %v3337 = vpop.f32.mrb[0].mxu0
        %v3338 = vadd.f32 %v3191, %v3337
        %v3339 = vpop.f32.mrb[0].mxu0
        %v3340 = vadd.f32 %v3195, %v3339
        %v3341 = vpop.f32.mrb[0].mxu0
        %v3342 = vadd.f32 %v3191, %v3341
        %v3343 = vpop.f32.mrb[0].mxu0
        %v3344 = vadd.f32 %v3195, %v3343
        %3345 = vmatprep.mubr.bf16.mxu0 0
        %3346 = vmatmul.mubr.bf16.gmra.mrb[0].mxu0 %v3255
        %v3347 = vpop.f32.mrb[0].mxu0
        %v3348 = vadd.f32 %v3191, %v3347
        %v3349 = vpop.f32.mrb[0].mxu0
        %v3350 = vadd.f32 %v3195, %v3349
        %v3351 = vpop.f32.mrb[0].mxu0
        %v3352 = vadd.f32 %v3191, %v3351
        %v3353 = vpop.f32.mrb[0].mxu0
        %v3354 = vadd.f32 %v3195, %v3353
        %3355 = vmatprep.mubr.bf16.mxu0 0
        %3356 = vmatmul.mubr.bf16.gmra.mrb[0].mxu0 %v3258
        %v3357 = vpop.f32.mrb[0].mxu0
        %v3358 = vadd.f32 %v3191, %v3357
        %v3359 = vpop.f32.mrb[0].mxu0
        %v3360 = vadd.f32 %v3195, %v3359
        %v3361 = vpop.f32.mrb[0].mxu0
        %v3362 = vadd.f32 %v3191, %v3361
        %v3363 = vpop.f32.mrb[0].mxu0
        %v3364 = vadd.f32 %v3195, %v3363
        %3365 = vmatprep.mubr.bf16.mxu0 0
        %3366 = vmatmul.mubr.bf16.gmra.mrb[0].mxu0 %v3261
        %v3367 = vpop.f32.mrb[0].mxu0
        %v3368 = vadd.f32 %v3191, %v3367
        %v3369 = vpop.f32.mrb[0].mxu0
        %v3370 = vadd.f32 %v3195, %v3369
        %v3371 = vpop.f32.mrb[0].mxu0
        %v3372 = vadd.f32 %v3191, %v3371
        %v3373 = vpop.f32.mrb[0].mxu0
        %v3374 = vadd.f32 %v3195, %v3373
        %3375 = vdwg.mxu0
        %v3376 = vmax.f32 %v3298, 0.0
        %v3377 = vmax.f32 %v3300, 0.0
        %v3378 = vmax.f32 %v3302, 0.0
        %v3379 = vmax.f32 %v3304, 0.0
        %v3380 = vmax.f32 %v3308, 0.0
        %v3381 = vmax.f32 %v3310, 0.0
        %v3382 = vmax.f32 %v3312, 0.0
        %v3383 = vmax.f32 %v3314, 0.0
        %v3384 = vmax.f32 %v3318, 0.0
        %v3385 = vmax.f32 %v3320, 0.0
        %v3386 = vmax.f32 %v3322, 0.0
        %v3387 = vmax.f32 %v3324, 0.0
        %v3388 = vmax.f32 %v3328, 0.0
        %v3389 = vmax.f32 %v3330, 0.0
        %v3390 = vmax.f32 %v3332, 0.0
        %v3391 = vmax.f32 %v3334, 0.0
        %v3392 = vmax.f32 %v3338, 0.0
        %v3393 = vmax.f32 %v3340, 0.0
        %v3394 = vmax.f32 %v3342, 0.0
        %v3395 = vmax.f32 %v3344, 0.0
        %v3396 = vmax.f32 %v3348, 0.0
        %v3397 = vmax.f32 %v3350, 0.0
        %v3398 = vmax.f32 %v3352, 0.0
        %v3399 = vmax.f32 %v3354, 0.0
        %v3400 = vmax.f32 %v3358, 0.0
        %v3401 = vmax.f32 %v3360, 0.0
        %v3402 = vmax.f32 %v3362, 0.0
        %v3403 = vmax.f32 %v3364, 0.0
        %v3404 = vmax.f32 %v3368, 0.0
        %v3405 = vmax.f32 %v3370, 0.0
        %v3406 = vmax.f32 %v3372, 0.0
        %v3407 = vmax.f32 %v3374, 0.0
        %v3408 = vpack.c.bf16 %v3378, %v3376
        %v3409 = vpack.c.bf16 %v3379, %v3377
        %v3410 = vpack.c.bf16 %v3382, %v3380
        %v3411 = vpack.c.bf16 %v3383, %v3381
        %v3412 = vpack.c.bf16 %v3386, %v3384
        %v3413 = vpack.c.bf16 %v3387, %v3385
        %v3414 = vpack.c.bf16 %v3390, %v3388
        %v3415 = vpack.c.bf16 %v3391, %v3389
        %v3416 = vpack.c.bf16 %v3394, %v3392
        %v3417 = vpack.c.bf16 %v3395, %v3393
        %v3418 = vpack.c.bf16 %v3398, %v3396
        %v3419 = vpack.c.bf16 %v3399, %v3397
        %v3420 = vpack.c.bf16 %v3402, %v3400
        %v3421 = vpack.c.bf16 %v3403, %v3401
        %v3422 = vpack.c.bf16 %v3406, %v3404
        %v3423 = vpack.c.bf16 %v3407, %v3405
        %s3424 = sld [smem:[#allocation18 + $0x1]]
        %v3425 = vld [vmem:[%s12] sm:$0xf]
        %v3426 = vld [vmem:[%s12 + $0x4] sm:$0xf]
        %v3427 = vld [vmem:[%s12 + $0x8] sm:$0xf]
        %v3428 = vld [vmem:[%s12 + $0xc] sm:$0xf]
        %v3429 = vld [vmem:[%s12 + $0x10] sm:$0xf]
        %v3430 = vld [vmem:[%s12 + $0x14] sm:$0xf]
        %v3431 = vld [vmem:[%s12 + $0x18] sm:$0xf]
        %v3432 = vld [vmem:[%s12 + $0x1c] sm:$0xf]
        %v3433 = vld [vmem:[%s12 + $0x20] sm:$0xf]
        %v3434 = vld [vmem:[%s12 + $0x24] sm:$0xf]
        %v3435 = vld [vmem:[%s12 + $0x28] sm:$0xf]
        %v3436 = vld [vmem:[%s12 + $0x2c] sm:$0xf]
        %v3437 = vld [vmem:[%s12 + $0x30] sm:$0xf]
        %v3438 = vld [vmem:[%s12 + $0x34] sm:$0xf]
        %v3439 = vld [vmem:[%s12 + $0x38] sm:$0xf]
        %v3440 = vld [vmem:[%s12 + $0x3c] sm:$0xf]
        %v3441 = vld [vmem:[%s12 + $0x40] sm:$0xf]
        %v3442 = vld [vmem:[%s12 + $0x44] sm:$0xf]
        %v3443 = vld [vmem:[%s12 + $0x48] sm:$0xf]
        %v3444 = vld [vmem:[%s12 + $0x4c] sm:$0xf]
        %v3445 = vld [vmem:[%s12 + $0x50] sm:$0xf]
        %v3446 = vld [vmem:[%s12 + $0x54] sm:$0xf]
        %v3447 = vld [vmem:[%s12 + $0x58] sm:$0xf]
        %v3448 = vld [vmem:[%s12 + $0x5c] sm:$0xf]
        %v3449 = vld [vmem:[%s12 + $0x60] sm:$0xf]
        %v3450 = vld [vmem:[%s12 + $0x64] sm:$0xf]
        %v3451 = vld [vmem:[%s12 + $0x68] sm:$0xf]
        %v3452 = vld [vmem:[%s12 + $0x6c] sm:$0xf]
        %v3453 = vld [vmem:[%s12 + $0x70] sm:$0xf]
        %v3454 = vld [vmem:[%s12 + $0x74] sm:$0xf]
        %v3455 = vld [vmem:[%s12 + $0x78] sm:$0xf]
        %v3456 = vld [vmem:[%s12 + $0x7c] sm:$0xf]
        %v3457 = vstv %s3424
        %v3490 = vunpack.c.l.b16 %v3425
        %v3491 = vunpack.c.l.b16 %v3426
        %v3492 = vunpack.c.l.b16 %v3427
        %v3493 = vunpack.c.l.b16 %v3428
        %v3494 = vunpack.c.l.b16 %v3429
        %v3495 = vunpack.c.l.b16 %v3430
        %v3496 = vunpack.c.l.b16 %v3431
        %v3497 = vunpack.c.l.b16 %v3432
        %v3498 = vunpack.c.l.b16 %v3433
        %v3499 = vunpack.c.l.b16 %v3434
        %v3500 = vunpack.c.l.b16 %v3435
        %v3501 = vunpack.c.l.b16 %v3436
        %v3502 = vunpack.c.l.b16 %v3437
        %v3503 = vunpack.c.l.b16 %v3438
        %v3504 = vunpack.c.l.b16 %v3439
        %v3505 = vunpack.c.l.b16 %v3440
        %v3506 = vunpack.c.l.b16 %v3441
        %v3507 = vunpack.c.l.b16 %v3442
        %v3508 = vunpack.c.l.b16 %v3443
        %v3509 = vunpack.c.l.b16 %v3444
        %v3510 = vunpack.c.l.b16 %v3445
        %v3511 = vunpack.c.l.b16 %v3446
        %v3512 = vunpack.c.l.b16 %v3447
        %v3513 = vunpack.c.l.b16 %v3448
        %v3514 = vunpack.c.l.b16 %v3449
        %v3515 = vunpack.c.l.b16 %v3450
        %v3516 = vunpack.c.l.b16 %v3451
        %v3517 = vunpack.c.l.b16 %v3452
        %v3518 = vunpack.c.l.b16 %v3453
        %v3519 = vunpack.c.l.b16 %v3454
        %v3520 = vunpack.c.l.b16 %v3455
        %v3521 = vunpack.c.l.b16 %v3456
        %v3522 = vpack.c.b16 %v3491, %v3490
        %v3523 = vpack.c.b16 %v3493, %v3492
        %v3524 = vpack.c.b16 %v3495, %v3494
        %v3525 = vpack.c.b16 %v3497, %v3496
        %v3526 = vpack.c.b16 %v3499, %v3498
        %v3527 = vpack.c.b16 %v3501, %v3500
        %v3528 = vpack.c.b16 %v3503, %v3502
        %v3529 = vpack.c.b16 %v3505, %v3504
        %v3530 = vpack.c.b16 %v3507, %v3506
        %v3531 = vpack.c.b16 %v3509, %v3508
        %v3532 = vpack.c.b16 %v3511, %v3510
        %v3533 = vpack.c.b16 %v3513, %v3512
        %v3534 = vpack.c.b16 %v3515, %v3514
        %v3535 = vpack.c.b16 %v3517, %v3516
        %v3536 = vpack.c.b16 %v3519, %v3518
        %v3537 = vpack.c.b16 %v3521, %v3520
        %3554 = vmatprep.subr.bf16.mxu0 0
        %3555 = vmatpush1.bf16.msra.mxu0 %v3522
        %3556 = vmatprep.subr.bf16.mxu0 0
        %3557 = vmatpush1.bf16.msra.mxu0 %v3523
        %3558 = vmatprep.subr.bf16.mxu0 0
        %3559 = vmatpush1.bf16.msra.mxu0 %v3524
        %3560 = vmatprep.subr.bf16.mxu0 0
        %3561 = vmatpush1.bf16.msra.mxu0 %v3525
        %3562 = vmatprep.subr.bf16.mxu0 0
        %3563 = vmatpush1.bf16.msra.mxu0 %v3526
        %3564 = vmatprep.subr.bf16.mxu0 0
        %3565 = vmatpush1.bf16.msra.mxu0 %v3527
        %3566 = vmatprep.subr.bf16.mxu0 0
        %3567 = vmatpush1.bf16.msra.mxu0 %v3528
        %3568 = vmatprep.subr.bf16.mxu0 0
        %3569 = vmatpush1.bf16.msra.mxu0 %v3529
        %3570 = vmatprep.subr.bf16.mxu0 0
        %3571 = vmatpush1.bf16.msra.mxu0 %v3530
        %3572 = vmatprep.subr.bf16.mxu0 0
        %3573 = vmatpush1.bf16.msra.mxu0 %v3531
        %3574 = vmatprep.subr.bf16.mxu0 0
        %3575 = vmatpush1.bf16.msra.mxu0 %v3532
        %3576 = vmatprep.subr.bf16.mxu0 0
        %3577 = vmatpush1.bf16.msra.mxu0 %v3533
        %3578 = vmatprep.subr.bf16.mxu0 0
        %3579 = vmatpush1.bf16.msra.mxu0 %v3534
        %3580 = vmatprep.subr.bf16.mxu0 0
        %3581 = vmatpush1.bf16.msra.mxu0 %v3535
        %3582 = vmatprep.subr.bf16.mxu0 0
        %3583 = vmatpush1.bf16.msra.mxu0 %v3536
        %3584 = vmatprep.subr.bf16.mxu0 0
        %3585 = vmatpush1.bf16.msra.mxu0 %v3537
        %3586 = vmatprep.mubr.bf16.mxu0 %v3409
        %3587 = vmatmul.mubr.bf16.gmra.mrb[0].mxu0 %v3408
        %v3588 = vpop.f32.mrb[0].mxu0
        %v3589 = vadd.f32 %v3457, %v3588
        %v3590 = vpop.f32.mrb[0].mxu0
        %v3591 = vpop.f32.mrb[0].mxu0
        %v3592 = vadd.f32 %v3457, %v3591
        %v3593 = vpop.f32.mrb[0].mxu0
        %3594 = vmatprep.mubr.bf16.mxu0 %v3411
        %3595 = vmatmul.mubr.bf16.gmra.mrb[0].mxu0 %v3410
        %v3596 = vpop.f32.mrb[0].mxu0
        %v3597 = vadd.f32 %v3457, %v3596
        %v3598 = vpop.f32.mrb[0].mxu0
        %v3599 = vpop.f32.mrb[0].mxu0
        %v3600 = vadd.f32 %v3457, %v3599
        %v3601 = vpop.f32.mrb[0].mxu0
        %3602 = vmatprep.mubr.bf16.mxu0 %v3413
        %3603 = vmatmul.mubr.bf16.gmra.mrb[0].mxu0 %v3412
        %v3604 = vpop.f32.mrb[0].mxu0
        %v3605 = vadd.f32 %v3457, %v3604
        %v3606 = vpop.f32.mrb[0].mxu0
        %v3607 = vpop.f32.mrb[0].mxu0
        %v3608 = vadd.f32 %v3457, %v3607
        %v3609 = vpop.f32.mrb[0].mxu0
        %3610 = vmatprep.mubr.bf16.mxu0 %v3415
        %3611 = vmatmul.mubr.bf16.gmra.mrb[0].mxu0 %v3414
        %v3612 = vpop.f32.mrb[0].mxu0
        %v3613 = vadd.f32 %v3457, %v3612
        %v3614 = vpop.f32.mrb[0].mxu0
        %v3615 = vpop.f32.mrb[0].mxu0
        %v3616 = vadd.f32 %v3457, %v3615
        %v3617 = vpop.f32.mrb[0].mxu0
        %3618 = vmatprep.mubr.bf16.mxu0 %v3417
        %3619 = vmatmul.mubr.bf16.gmra.mrb[0].mxu0 %v3416
        %v3620 = vpop.f32.mrb[0].mxu0
        %v3621 = vadd.f32 %v3457, %v3620
        %v3622 = vpop.f32.mrb[0].mxu0
        %v3623 = vpop.f32.mrb[0].mxu0
        %v3624 = vadd.f32 %v3457, %v3623
        %v3625 = vpop.f32.mrb[0].mxu0
        %3626 = vmatprep.mubr.bf16.mxu0 %v3419
        %3627 = vmatmul.mubr.bf16.gmra.mrb[0].mxu0 %v3418
        %v3628 = vpop.f32.mrb[0].mxu0
        %v3629 = vadd.f32 %v3457, %v3628
        %v3630 = vpop.f32.mrb[0].mxu0
        %v3631 = vpop.f32.mrb[0].mxu0
        %v3632 = vadd.f32 %v3457, %v3631
        %v3633 = vpop.f32.mrb[0].mxu0
        %3634 = vmatprep.mubr.bf16.mxu0 %v3421
        %3635 = vmatmul.mubr.bf16.gmra.mrb[0].mxu0 %v3420
        %v3636 = vpop.f32.mrb[0].mxu0
        %v3637 = vadd.f32 %v3457, %v3636
        %v3638 = vpop.f32.mrb[0].mxu0
        %v3639 = vpop.f32.mrb[0].mxu0
        %v3640 = vadd.f32 %v3457, %v3639
        %v3641 = vpop.f32.mrb[0].mxu0
        %3642 = vmatprep.mubr.bf16.mxu0 %v3423
        %3643 = vmatmul.mubr.bf16.gmra.mrb[0].mxu0 %v3422
        %v3644 = vpop.f32.mrb[0].mxu0
        %v3645 = vadd.f32 %v3457, %v3644
        %v3646 = vpop.f32.mrb[0].mxu0
        %v3647 = vpop.f32.mrb[0].mxu0
        %v3648 = vadd.f32 %v3457, %v3647
        %v3649 = vpop.f32.mrb[0].mxu0
        %3650 = vdwg.mxu0
        %v3651 = vmax.f32 %v3589, 0.0
        %v3652 = vmax.f32 %v3592, 0.0
        %v3653 = vmax.f32 %v3597, 0.0
        %v3654 = vmax.f32 %v3600, 0.0
        %v3655 = vmax.f32 %v3605, 0.0
        %v3656 = vmax.f32 %v3608, 0.0
        %v3657 = vmax.f32 %v3613, 0.0
        %v3658 = vmax.f32 %v3616, 0.0
        %v3659 = vmax.f32 %v3621, 0.0
        %v3660 = vmax.f32 %v3624, 0.0
        %v3661 = vmax.f32 %v3629, 0.0
        %v3662 = vmax.f32 %v3632, 0.0
        %v3663 = vmax.f32 %v3637, 0.0
        %v3664 = vmax.f32 %v3640, 0.0
        %v3665 = vmax.f32 %v3645, 0.0
        %v3666 = vmax.f32 %v3648, 0.0
        %v3667 = vpack.c.bf16 %v3652, %v3651
        %v3668 = vpack.c.bf16 %v3654, %v3653
        %v3669 = vpack.c.bf16 %v3656, %v3655
        %v3670 = vpack.c.bf16 %v3658, %v3657
        %v3671 = vpack.c.bf16 %v3660, %v3659
        %v3672 = vpack.c.bf16 %v3662, %v3661
        %v3673 = vpack.c.bf16 %v3664, %v3663
        %v3674 = vpack.c.bf16 %v3666, %v3665
        %v3675 = vld [vmem:[%s14] sm:$0x1]
        %v3676 = vld [vmem:[%s13] sm:$0xf]
        %v3677 = vld [vmem:[%s13 + $0x4] sm:$0xf]
        %v3678 = vld [vmem:[%s13 + $0x8] sm:$0xf]
        %v3679 = vld [vmem:[%s13 + $0xc] sm:$0xf]
        %v3680 = vld [vmem:[%s13 + $0x10] sm:$0xf]
        %v3681 = vld [vmem:[%s13 + $0x14] sm:$0xf]
        %v3682 = vld [vmem:[%s13 + $0x18] sm:$0xf]
        %v3683 = vld [vmem:[%s13 + $0x1c] sm:$0xf]
        %v3684 = vld [vmem:[%s13 + $0x20] sm:$0xf]
        %v3685 = vld [vmem:[%s13 + $0x24] sm:$0xf]
        %v3686 = vld [vmem:[%s13 + $0x28] sm:$0xf]
        %v3687 = vld [vmem:[%s13 + $0x2c] sm:$0xf]
        %v3688 = vld [vmem:[%s13 + $0x30] sm:$0xf]
        %v3689 = vld [vmem:[%s13 + $0x34] sm:$0xf]
        %v3690 = vld [vmem:[%s13 + $0x38] sm:$0xf]
        %v3691 = vld [vmem:[%s13 + $0x3c] sm:$0xf]
        %v3693 = vlaneseq
        %v3694 = vshrl.u32 %v3693, 7
        %v3695 = vsub.s32 0, %v3694
        %v3696 = vrot.slane %v3675, %v3695
        %v3714 = vunpack.c.l.b16 %v3676
        %v3715 = vunpack.c.l.b16 %v3677
        %v3716 = vunpack.c.l.b16 %v3678
        %v3717 = vunpack.c.l.b16 %v3679
        %v3718 = vunpack.c.l.b16 %v3680
        %v3719 = vunpack.c.l.b16 %v3681
        %v3720 = vunpack.c.l.b16 %v3682
        %v3721 = vunpack.c.l.b16 %v3683
        %v3722 = vunpack.c.l.b16 %v3684
        %v3723 = vunpack.c.l.b16 %v3685
        %v3724 = vunpack.c.l.b16 %v3686
        %v3725 = vunpack.c.l.b16 %v3687
        %v3726 = vunpack.c.l.b16 %v3688
        %v3727 = vunpack.c.l.b16 %v3689
        %v3728 = vunpack.c.l.b16 %v3690
        %v3729 = vunpack.c.l.b16 %v3691
        %v3730 = vpack.c.b16 %v3715, %v3714
        %v3731 = vpack.c.b16 %v3717, %v3716
        %v3732 = vpack.c.b16 %v3719, %v3718
        %v3733 = vpack.c.b16 %v3721, %v3720
        %v3734 = vpack.c.b16 %v3723, %v3722
        %v3735 = vpack.c.b16 %v3725, %v3724
        %v3736 = vpack.c.b16 %v3727, %v3726
        %v3737 = vpack.c.b16 %v3729, %v3728
        %3746 = vmatprep.subr.bf16.mxu0 0
        %3747 = vmatpush1.bf16.msra.mxu0 %v3730
        %3748 = vmatprep.subr.bf16.mxu0 0
        %3749 = vmatpush1.bf16.msra.mxu0 %v3731
        %3750 = vmatprep.subr.bf16.mxu0 0
        %3751 = vmatpush1.bf16.msra.mxu0 %v3732
        %3752 = vmatprep.subr.bf16.mxu0 0
        %3753 = vmatpush1.bf16.msra.mxu0 %v3733
        %3754 = vmatprep.subr.bf16.mxu0 0
        %3755 = vmatpush1.bf16.msra.mxu0 %v3734
        %3756 = vmatprep.subr.bf16.mxu0 0
        %3757 = vmatpush1.bf16.msra.mxu0 %v3735
        %3758 = vmatprep.subr.bf16.mxu0 0
        %3759 = vmatpush1.bf16.msra.mxu0 %v3736
        %3760 = vmatprep.subr.bf16.mxu0 0
        %3761 = vmatpush1.bf16.msra.mxu0 %v3737
        %3762 = vmatprep.subr.bf16.mxu0 0
        %3763 = vmatpush1.bf16.msra.mxu0 0
        %3764 = vmatprep.subr.bf16.mxu0 0
        %3765 = vmatpush1.bf16.msra.mxu0 0
        %3766 = vmatprep.subr.bf16.mxu0 0
        %3767 = vmatpush1.bf16.msra.mxu0 0
        %3768 = vmatprep.subr.bf16.mxu0 0
        %3769 = vmatpush1.bf16.msra.mxu0 0
        %3770 = vmatprep.subr.bf16.mxu0 0
        %3771 = vmatpush1.bf16.msra.mxu0 0
        %3772 = vmatprep.subr.bf16.mxu0 0
        %3773 = vmatpush1.bf16.msra.mxu0 0
        %3774 = vmatprep.subr.bf16.mxu0 0
        %3775 = vmatpush1.bf16.msra.mxu0 0
        %3776 = vmatprep.subr.bf16.mxu0 0
        %3777 = vmatpush1.bf16.msra.mxu0 0
        %3778 = vmatprep.mubr.bf16.mxu0 0
        %3779 = vmatmul.mubr.bf16.gmra.mrb[0].mxu0 %v3667
        %v3780 = vpop.f32.mrb[0].mxu0
        %v3781 = vadd.f32 %v3696, %v3780
        %v3782 = vpop.f32.mrb[0].mxu0
        %v3783 = vpop.f32.mrb[0].mxu0
        %v3784 = vadd.f32 %v3696, %v3783
        %v3785 = vpop.f32.mrb[0].mxu0
        %3786 = vmatprep.mubr.bf16.mxu0 0
        %3787 = vmatmul.mubr.bf16.gmra.mrb[0].mxu0 %v3668
        %v3788 = vpop.f32.mrb[0].mxu0
        %v3789 = vadd.f32 %v3696, %v3788
        %v3790 = vpop.f32.mrb[0].mxu0
        %v3791 = vpop.f32.mrb[0].mxu0
        %v3792 = vadd.f32 %v3696, %v3791
        %v3793 = vpop.f32.mrb[0].mxu0
        %3794 = vmatprep.mubr.bf16.mxu0 0
        %3795 = vmatmul.mubr.bf16.gmra.mrb[0].mxu0 %v3669
        %v3796 = vpop.f32.mrb[0].mxu0
        %v3797 = vadd.f32 %v3696, %v3796
        %v3798 = vpop.f32.mrb[0].mxu0
        %v3799 = vpop.f32.mrb[0].mxu0
        %v3800 = vadd.f32 %v3696, %v3799
        %v3801 = vpop.f32.mrb[0].mxu0
        %3802 = vmatprep.mubr.bf16.mxu0 0
        %3803 = vmatmul.mubr.bf16.gmra.mrb[0].mxu0 %v3670
        %v3804 = vpop.f32.mrb[0].mxu0
        %v3805 = vadd.f32 %v3696, %v3804
        %v3806 = vpop.f32.mrb[0].mxu0
        %v3807 = vpop.f32.mrb[0].mxu0
        %v3808 = vadd.f32 %v3696, %v3807
        %v3809 = vpop.f32.mrb[0].mxu0
        %3810 = vmatprep.mubr.bf16.mxu0 0
        %3811 = vmatmul.mubr.bf16.gmra.mrb[0].mxu0 %v3671
        %v3812 = vpop.f32.mrb[0].mxu0
        %v3813 = vadd.f32 %v3696, %v3812
        %v3814 = vpop.f32.mrb[0].mxu0
        %v3815 = vpop.f32.mrb[0].mxu0
        %v3816 = vadd.f32 %v3696, %v3815
        %v3817 = vpop.f32.mrb[0].mxu0
        %3818 = vmatprep.mubr.bf16.mxu0 0
        %3819 = vmatmul.mubr.bf16.gmra.mrb[0].mxu0 %v3672
        %v3820 = vpop.f32.mrb[0].mxu0
        %v3821 = vadd.f32 %v3696, %v3820
        %v3822 = vpop.f32.mrb[0].mxu0
        %v3823 = vpop.f32.mrb[0].mxu0
        %v3824 = vadd.f32 %v3696, %v3823
        %v3825 = vpop.f32.mrb[0].mxu0
        %3826 = vmatprep.mubr.bf16.mxu0 0
        %3827 = vmatmul.mubr.bf16.gmra.mrb[0].mxu0 %v3673
        %v3828 = vpop.f32.mrb[0].mxu0
        %v3829 = vadd.f32 %v3696, %v3828
        %v3830 = vpop.f32.mrb[0].mxu0
        %v3831 = vpop.f32.mrb[0].mxu0
        %v3832 = vadd.f32 %v3696, %v3831
        %v3833 = vpop.f32.mrb[0].mxu0
        %3834 = vmatprep.mubr.bf16.mxu0 0
        %3835 = vmatmul.mubr.bf16.gmra.mrb[0].mxu0 %v3674
        %v3836 = vpop.f32.mrb[0].mxu0
        %v3837 = vadd.f32 %v3696, %v3836
        %v3838 = vpop.f32.mrb[0].mxu0
        %v3839 = vpop.f32.mrb[0].mxu0
        %v3840 = vadd.f32 %v3696, %v3839
        %v3841 = vpop.f32.mrb[0].mxu0
        %3842 = vdwg.mxu0
        %v3843 = vmax.f32 %v3781, 0.0
        %v3844 = vmax.f32 %v3784, 0.0
        %v3845 = vmax.f32 %v3789, 0.0
        %v3846 = vmax.f32 %v3792, 0.0
        %v3847 = vmax.f32 %v3797, 0.0
        %v3848 = vmax.f32 %v3800, 0.0
        %v3849 = vmax.f32 %v3805, 0.0
        %v3850 = vmax.f32 %v3808, 0.0
        %v3851 = vmax.f32 %v3813, 0.0
        %v3852 = vmax.f32 %v3816, 0.0
        %v3853 = vmax.f32 %v3821, 0.0
        %v3854 = vmax.f32 %v3824, 0.0
        %v3855 = vmax.f32 %v3829, 0.0
        %v3856 = vmax.f32 %v3832, 0.0
        %v3857 = vmax.f32 %v3837, 0.0
        %v3858 = vmax.f32 %v3840, 0.0
        %v3859 = vpack.c.bf16 %v3844, %v3843
        %v3860 = vpack.c.bf16 %v3846, %v3845
        %v3861 = vpack.c.bf16 %v3848, %v3847
        %v3862 = vpack.c.bf16 %v3850, %v3849
        %v3863 = vpack.c.bf16 %v3852, %v3851
        %v3864 = vpack.c.bf16 %v3854, %v3853
        %v3865 = vpack.c.bf16 %v3856, %v3855
        %v3866 = vpack.c.bf16 %v3858, %v3857
        %v3867 = vld [vmem:[%s16] sm:$0x1]
        %v3868 = vld [vmem:[%s15] sm:$0xf]
        %v3869 = vld [vmem:[%s15 + $0x4] sm:$0xf]
        %v3870 = vld [vmem:[%s15 + $0x8] sm:$0xf]
        %v3871 = vld [vmem:[%s15 + $0xc] sm:$0xf]
        %v3873 = vlaneseq
        %v3874 = vshrl.u32 %v3873, 7
        %v3875 = vsub.s32 0, %v3874
        %v3876 = vrot.slane %v3867, %v3875
        %v3882 = vunpack.c.l.b16 %v3868
        %v3883 = vunpack.c.l.b16 %v3869
        %v3884 = vunpack.c.l.b16 %v3870
        %v3885 = vunpack.c.l.b16 %v3871
        %v3886 = vpack.c.b16 %v3883, %v3882
        %v3887 = vpack.c.b16 %v3885, %v3884
        %vm3890 = vcmask 261120
        %v3892 = vsel %vm3890, %v3859, 0
        %v3895 = vsel %vm3890, %v3860, 0
        %v3898 = vsel %vm3890, %v3861, 0
        %v3901 = vsel %vm3890, %v3862, 0
        %v3904 = vsel %vm3890, %v3863, 0
        %v3907 = vsel %vm3890, %v3864, 0
        %v3910 = vsel %vm3890, %v3865, 0
        %v3913 = vsel %vm3890, %v3866, 0
        %3915 = vmatprep.subr.bf16.mxu0 0
        %3916 = vmatpush1.bf16.msra.mxu0 %v3886
        %3917 = vmatprep.subr.bf16.mxu0 0
        %3918 = vmatpush1.bf16.msra.mxu0 %v3887
        %3919 = vmatprep.subr.bf16.mxu0 0
        %3920 = vmatpush1.bf16.msra.mxu0 0
        %3921 = vmatprep.subr.bf16.mxu0 0
        %3922 = vmatpush1.bf16.msra.mxu0 0
        %3923 = vmatprep.subr.bf16.mxu0 0
        %3924 = vmatpush1.bf16.msra.mxu0 0
        %3925 = vmatprep.subr.bf16.mxu0 0
        %3926 = vmatpush1.bf16.msra.mxu0 0
        %3927 = vmatprep.subr.bf16.mxu0 0
        %3928 = vmatpush1.bf16.msra.mxu0 0
        %3929 = vmatprep.subr.bf16.mxu0 0
        %3930 = vmatpush1.bf16.msra.mxu0 0
        %3931 = vmatprep.subr.bf16.mxu0 0
        %3932 = vmatpush1.bf16.msra.mxu0 0
        %3933 = vmatprep.subr.bf16.mxu0 0
        %3934 = vmatpush1.bf16.msra.mxu0 0
        %3935 = vmatprep.subr.bf16.mxu0 0
        %3936 = vmatpush1.bf16.msra.mxu0 0
        %3937 = vmatprep.subr.bf16.mxu0 0
        %3938 = vmatpush1.bf16.msra.mxu0 0
        %3939 = vmatprep.subr.bf16.mxu0 0
        %3940 = vmatpush1.bf16.msra.mxu0 0
        %3941 = vmatprep.subr.bf16.mxu0 0
        %3942 = vmatpush1.bf16.msra.mxu0 0
        %3943 = vmatprep.subr.bf16.mxu0 0
        %3944 = vmatpush1.bf16.msra.mxu0 0
        %3945 = vmatprep.subr.bf16.mxu0 0
        %3946 = vmatpush1.bf16.msra.mxu0 0
        %3947 = vmatprep.mubr.bf16.mxu0 0
        %3948 = vmatmul.mubr.bf16.gmra.mrb[0].mxu0 %v3892
        %v3949 = vpop.f32.mrb[0].mxu0
        %v3950 = vadd.f32 %v3876, %v3949
        %v3951 = vpop.f32.mrb[0].mxu0
        %v3952 = vpop.f32.mrb[0].mxu0
        %v3953 = vadd.f32 %v3876, %v3952
        %v3954 = vpop.f32.mrb[0].mxu0
        %3955 = vmatprep.mubr.bf16.mxu0 0
        %3956 = vmatmul.mubr.bf16.gmra.mrb[0].mxu0 %v3895
        %v3957 = vpop.f32.mrb[0].mxu0
        %v3958 = vadd.f32 %v3876, %v3957
        %v3959 = vpop.f32.mrb[0].mxu0
        %v3960 = vpop.f32.mrb[0].mxu0
        %v3961 = vadd.f32 %v3876, %v3960
        %v3962 = vpop.f32.mrb[0].mxu0
        %3963 = vmatprep.mubr.bf16.mxu0 0
        %3964 = vmatmul.mubr.bf16.gmra.mrb[0].mxu0 %v3898
        %v3965 = vpop.f32.mrb[0].mxu0
        %v3966 = vadd.f32 %v3876, %v3965
        %v3967 = vpop.f32.mrb[0].mxu0
        %v3968 = vpop.f32.mrb[0].mxu0
        %v3969 = vadd.f32 %v3876, %v3968
        %v3970 = vpop.f32.mrb[0].mxu0
        %3971 = vmatprep.mubr.bf16.mxu0 0
        %3972 = vmatmul.mubr.bf16.gmra.mrb[0].mxu0 %v3901
        %v3973 = vpop.f32.mrb[0].mxu0
        %v3974 = vadd.f32 %v3876, %v3973
        %v3975 = vpop.f32.mrb[0].mxu0
        %v3976 = vpop.f32.mrb[0].mxu0
        %v3977 = vadd.f32 %v3876, %v3976
        %v3978 = vpop.f32.mrb[0].mxu0
        %3979 = vmatprep.mubr.bf16.mxu0 0
        %3980 = vmatmul.mubr.bf16.gmra.mrb[0].mxu0 %v3904
        %v3981 = vpop.f32.mrb[0].mxu0
        %v3982 = vadd.f32 %v3876, %v3981
        %v3983 = vpop.f32.mrb[0].mxu0
        %v3984 = vpop.f32.mrb[0].mxu0
        %v3985 = vadd.f32 %v3876, %v3984
        %v3986 = vpop.f32.mrb[0].mxu0
        %3987 = vmatprep.mubr.bf16.mxu0 0
        %3988 = vmatmul.mubr.bf16.gmra.mrb[0].mxu0 %v3907
        %v3989 = vpop.f32.mrb[0].mxu0
        %v3990 = vadd.f32 %v3876, %v3989
        %v3991 = vpop.f32.mrb[0].mxu0
        %v3992 = vpop.f32.mrb[0].mxu0
        %v3993 = vadd.f32 %v3876, %v3992
        %v3994 = vpop.f32.mrb[0].mxu0
        %3995 = vmatprep.mubr.bf16.mxu0 0
        %3996 = vmatmul.mubr.bf16.gmra.mrb[0].mxu0 %v3910
        %v3997 = vpop.f32.mrb[0].mxu0
        %v3998 = vadd.f32 %v3876, %v3997
        %v3999 = vpop.f32.mrb[0].mxu0
        %v4000 = vpop.f32.mrb[0].mxu0
        %v4001 = vadd.f32 %v3876, %v4000
        %v4002 = vpop.f32.mrb[0].mxu0
        %4003 = vmatprep.mubr.bf16.mxu0 0
        %4004 = vmatmul.mubr.bf16.gmra.mrb[0].mxu0 %v3913
        %v4005 = vpop.f32.mrb[0].mxu0
        %v4006 = vadd.f32 %v3876, %v4005
        %v4007 = vpop.f32.mrb[0].mxu0
        %v4008 = vpop.f32.mrb[0].mxu0
        %v4009 = vadd.f32 %v3876, %v4008
        %v4010 = vpop.f32.mrb[0].mxu0
        %4011 = vdwg.mxu0
        %v4012 = vmax.f32 %v3950, 0.0
        %v4013 = vmax.f32 %v3953, 0.0
        %v4014 = vmax.f32 %v3958, 0.0
        %v4015 = vmax.f32 %v3961, 0.0
        %v4016 = vmax.f32 %v3966, 0.0
        %v4017 = vmax.f32 %v3969, 0.0
        %v4018 = vmax.f32 %v3974, 0.0
        %v4019 = vmax.f32 %v3977, 0.0
        %v4020 = vmax.f32 %v3982, 0.0
        %v4021 = vmax.f32 %v3985, 0.0
        %v4022 = vmax.f32 %v3990, 0.0
        %v4023 = vmax.f32 %v3993, 0.0
        %v4024 = vmax.f32 %v3998, 0.0
        %v4025 = vmax.f32 %v4001, 0.0
        %v4026 = vmax.f32 %v4006, 0.0
        %v4027 = vmax.f32 %v4009, 0.0
        %v4028 = vpack.c.bf16 %v4013, %v4012
        %v4029 = vpack.c.bf16 %v4015, %v4014
        %v4030 = vpack.c.bf16 %v4017, %v4016
        %v4031 = vpack.c.bf16 %v4019, %v4018
        %v4032 = vpack.c.bf16 %v4021, %v4020
        %v4033 = vpack.c.bf16 %v4023, %v4022
        %v4034 = vpack.c.bf16 %v4025, %v4024
        %v4035 = vpack.c.bf16 %v4027, %v4026
        %v4036 = vld [vmem:[#allocation14] sm:$0xf]
        %v4037 = vld [vmem:[#allocation14 + $0x4] sm:$0xf]
        %v4038 = vld [vmem:[#allocation14 + $0x8] sm:$0xf]
        %v4039 = vld [vmem:[#allocation14 + $0xc] sm:$0xf]
        %v4040 = vld [vmem:[#allocation14 + $0x10] sm:$0xf]
        %v4041 = vld [vmem:[#allocation14 + $0x14] sm:$0xf]
        %v4042 = vld [vmem:[#allocation14 + $0x18] sm:$0xf]
        %v4043 = vld [vmem:[#allocation14 + $0x1c] sm:$0xf]
        %s4044 = sld [smem:[#allocation18 + $0x2]]
        %v4045 = vstv %s4044
        %v4054 = vunpack.c.l.b16 %v4036
        %v4055 = vunpack.c.l.b16 %v4037
        %v4056 = vunpack.c.l.b16 %v4038
        %v4057 = vunpack.c.l.b16 %v4039
        %v4058 = vunpack.c.l.b16 %v4040
        %v4059 = vunpack.c.l.b16 %v4041
        %v4060 = vunpack.c.l.b16 %v4042
        %v4061 = vunpack.c.l.b16 %v4043
        %v4062 = vpack.c.b16 %v4055, %v4054
        %v4063 = vpack.c.b16 %v4057, %v4056
        %v4064 = vpack.c.b16 %v4059, %v4058
        %v4065 = vpack.c.b16 %v4061, %v4060
        %4070 = vmatprep.subr.bf16.mxu0 0
        %4071 = vmatpush1.bf16.xpose.msra.mxu0 %v4028
        %4072 = vmatprep.subr.bf16.mxu0 0
        %4073 = vmatpush1.bf16.xpose.msra.mxu0 %v4029
        %4074 = vmatprep.subr.bf16.mxu0 0
        %4075 = vmatpush1.bf16.xpose.msra.mxu0 %v4030
        %4076 = vmatprep.subr.bf16.mxu0 0
        %4077 = vmatpush1.bf16.xpose.msra.mxu0 %v4031
        %4078 = vmatprep.subr.bf16.mxu0 0
        %4079 = vmatpush1.bf16.xpose.msra.mxu0 %v4032
        %4080 = vmatprep.subr.bf16.mxu0 0
        %4081 = vmatpush1.bf16.xpose.msra.mxu0 %v4033
        %4082 = vmatprep.subr.bf16.mxu0 0
        %4083 = vmatpush1.bf16.xpose.msra.mxu0 %v4034
        %4084 = vmatprep.subr.bf16.mxu0 0
        %4085 = vmatpush1.bf16.xpose.msra.mxu0 %v4035
        %4086 = vmatprep.subr.bf16.mxu0 0
        %4087 = vmatpush1.bf16.xpose.msra.mxu0 0
        %4088 = vmatprep.subr.bf16.mxu0 0
        %4089 = vmatpush1.bf16.xpose.msra.mxu0 0
        %4090 = vmatprep.subr.bf16.mxu0 0
        %4091 = vmatpush1.bf16.xpose.msra.mxu0 0
        %4092 = vmatprep.subr.bf16.mxu0 0
        %4093 = vmatpush1.bf16.xpose.msra.mxu0 0
        %4094 = vmatprep.subr.bf16.mxu0 0
        %4095 = vmatpush1.bf16.xpose.msra.mxu0 0
        %4096 = vmatprep.subr.bf16.mxu0 0
        %4097 = vmatpush1.bf16.xpose.msra.mxu0 0
        %4098 = vmatprep.subr.bf16.mxu0 0
        %4099 = vmatpush1.bf16.xpose.msra.mxu0 0
        %4100 = vmatprep.subr.bf16.mxu0 0
        %4101 = vmatpush1.bf16.xpose.msra.mxu0 0
        %4102 = vmatprep.mubr.bf16.mxu0 0
        %4103 = vmatmul.mubr.bf16.gmra.mrb[0].mxu0 %v4062
        %v4104 = vpop.f32.mrb[0].mxu0
        %v4105 = vadd.f32 %v4045, %v4104
        %v4106 = vpop.f32.mrb[0].mxu0
        %v4107 = vpop.f32.mrb[0].mxu0
        %v4108 = vadd.f32 %v4045, %v4107
        %v4109 = vpop.f32.mrb[0].mxu0
        %4110 = vmatprep.mubr.bf16.mxu0 0
        %4111 = vmatmul.mubr.bf16.gmra.mrb[0].mxu0 %v4063
        %v4112 = vpop.f32.mrb[0].mxu0
        %v4113 = vadd.f32 %v4045, %v4112
        %v4114 = vpop.f32.mrb[0].mxu0
        %v4115 = vpop.f32.mrb[0].mxu0
        %v4116 = vadd.f32 %v4045, %v4115
        %v4117 = vpop.f32.mrb[0].mxu0
        %4118 = vmatprep.mubr.bf16.mxu0 0
        %4119 = vmatmul.mubr.bf16.gmra.mrb[0].mxu0 %v4064
        %v4120 = vpop.f32.mrb[0].mxu0
        %v4121 = vadd.f32 %v4045, %v4120
        %v4122 = vpop.f32.mrb[0].mxu0
        %v4123 = vpop.f32.mrb[0].mxu0
        %v4124 = vadd.f32 %v4045, %v4123
        %v4125 = vpop.f32.mrb[0].mxu0
        %4126 = vmatprep.mubr.bf16.mxu0 0
        %4127 = vmatmul.mubr.bf16.gmra.mrb[0].mxu0 %v4065
        %v4128 = vpop.f32.mrb[0].mxu0
        %v4129 = vadd.f32 %v4045, %v4128
        %v4130 = vpop.f32.mrb[0].mxu0
        %v4131 = vpop.f32.mrb[0].mxu0
        %v4132 = vadd.f32 %v4045, %v4131
        %v4133 = vpop.f32.mrb[0].mxu0
        %4134 = vdwg.mxu0
        %v4135 = vmax.f32 %v4105, 0.0
        %v4136 = vmax.f32 %v4108, 0.0
        %v4137 = vmax.f32 %v4113, 0.0
        %v4138 = vmax.f32 %v4116, 0.0
        %v4139 = vmax.f32 %v4121, 0.0
        %v4140 = vmax.f32 %v4124, 0.0
        %v4141 = vmax.f32 %v4129, 0.0
        %v4142 = vmax.f32 %v4132, 0.0
        %v4143 = vpack.c.bf16 %v4136, %v4135
        %v4144 = vpack.c.bf16 %v4138, %v4137
        %v4145 = vpack.c.bf16 %v4140, %v4139
        %v4146 = vpack.c.bf16 %v4142, %v4141
        %v4147 = vld [vmem:[%s18] sm:$0xf]
        %v4148 = vld [vmem:[%s18 + $0x4] sm:$0xf]
        %v4149 = vld [vmem:[%s18 + $0x8] sm:$0xf]
        %v4150 = vld [vmem:[%s18 + $0xc] sm:$0xf]
        %s4151 = sld [smem:[#allocation18 + $0x3]]
        %v4152 = vstv %s4151
        %v4157 = vunpack.c.l.b16 %v4147
        %v4158 = vunpack.c.l.b16 %v4148
        %v4159 = vunpack.c.l.b16 %v4149
        %v4160 = vunpack.c.l.b16 %v4150
        %v4161 = vpack.c.b16 %v4158, %v4157
        %v4162 = vpack.c.b16 %v4160, %v4159
        %v4164 = vsel %vm3238, %v4161, 0
        %v4167 = vsel %vm3238, %v4162, 0
        %4169 = vmatprep.subr.bf16.mxu0 0
        %4170 = vmatpush1.bf16.msra.mxu0 %v4143
        %4171 = vmatprep.subr.bf16.mxu0 0
        %4172 = vmatpush1.bf16.msra.mxu0 %v4144
        %4173 = vmatprep.subr.bf16.mxu0 0
        %4174 = vmatpush1.bf16.msra.mxu0 %v4145
        %4175 = vmatprep.subr.bf16.mxu0 0
        %4176 = vmatpush1.bf16.msra.mxu0 %v4146
        %4177 = vmatprep.subr.bf16.mxu0 0
        %4178 = vmatpush1.bf16.msra.mxu0 0
        %4179 = vmatprep.subr.bf16.mxu0 0
        %4180 = vmatpush1.bf16.msra.mxu0 0
        %4181 = vmatprep.subr.bf16.mxu0 0
        %4182 = vmatpush1.bf16.msra.mxu0 0
        %4183 = vmatprep.subr.bf16.mxu0 0
        %4184 = vmatpush1.bf16.msra.mxu0 0
        %4185 = vmatprep.subr.bf16.mxu0 0
        %4186 = vmatpush1.bf16.msra.mxu0 0
        %4187 = vmatprep.subr.bf16.mxu0 0
        %4188 = vmatpush1.bf16.msra.mxu0 0
        %4189 = vmatprep.subr.bf16.mxu0 0
        %4190 = vmatpush1.bf16.msra.mxu0 0
        %4191 = vmatprep.subr.bf16.mxu0 0
        %4192 = vmatpush1.bf16.msra.mxu0 0
        %4193 = vmatprep.subr.bf16.mxu0 0
        %4194 = vmatpush1.bf16.msra.mxu0 0
        %4195 = vmatprep.subr.bf16.mxu0 0
        %4196 = vmatpush1.bf16.msra.mxu0 0
        %4197 = vmatprep.subr.bf16.mxu0 0
        %4198 = vmatpush1.bf16.msra.mxu0 0
        %4199 = vmatprep.subr.bf16.mxu0 0
        %4200 = vmatpush1.bf16.msra.mxu0 0
        %4201 = vmatprep.mubr.bf16.mxu0 0
        %4202 = vmatmul.mubr.bf16.gmra.mrb[0].mxu0 %v4164
        %v4203 = vpop.f32.mrb[0].mxu0
        %v4204 = vadd.f32 %v4152, %v4203
        %v4205 = vpop.f32.mrb[0].mxu0
        %v4206 = vpop.f32.mrb[0].mxu0
        %v4207 = vadd.f32 %v4152, %v4206
        %v4208 = vpop.f32.mrb[0].mxu0
        %4209 = vmatprep.mubr.bf16.mxu0 0
        %4210 = vmatmul.mubr.bf16.gmra.mrb[0].mxu0 %v4167
        %v4211 = vpop.f32.mrb[0].mxu0
        %v4212 = vadd.f32 %v4152, %v4211
        %v4213 = vpop.f32.mrb[0].mxu0
        %v4214 = vpop.f32.mrb[0].mxu0
        %v4215 = vadd.f32 %v4152, %v4214
        %v4216 = vpop.f32.mrb[0].mxu0
        %4217 = vdwg.mxu0
        %v4218 = vmax.f32 %v4204, 0.0
        %v4219 = vmax.f32 %v4207, 0.0
        %v4220 = vmax.f32 %v4212, 0.0
        %v4221 = vmax.f32 %v4215, 0.0
        %v4222 = vpack.c.bf16 %v4219, %v4218
        %v4223 = vpack.c.bf16 %v4221, %v4220
        %v4224 = vld [vmem:[#allocation15] sm:$0xf]
        %v4225 = vld [vmem:[#allocation15 + $0x4] sm:$0xf]
        %s4226 = sld [smem:[#allocation18 + $0x4]]
        %v4227 = vstv %s4226
        %v4230 = vunpack.c.l.b16 %v4224
        %v4231 = vunpack.c.l.b16 %v4225
        %v4232 = vpack.c.b16 %v4231, %v4230
        %v4234 = vsel %vm3890, %v4232, 0
        %4236 = vmatprep.subr.bf16.mxu0 0
        %4237 = vmatpush1.bf16.msra.mxu0 %v4222
        %4238 = vmatprep.subr.bf16.mxu0 0
        %4239 = vmatpush1.bf16.msra.mxu0 %v4223
        %4240 = vmatprep.subr.bf16.mxu0 0
        %4241 = vmatpush1.bf16.msra.mxu0 0
        %4242 = vmatprep.subr.bf16.mxu0 0
        %4243 = vmatpush1.bf16.msra.mxu0 0
        %4244 = vmatprep.subr.bf16.mxu0 0
        %4245 = vmatpush1.bf16.msra.mxu0 0
        %4246 = vmatprep.subr.bf16.mxu0 0
        %4247 = vmatpush1.bf16.msra.mxu0 0
        %4248 = vmatprep.subr.bf16.mxu0 0
        %4249 = vmatpush1.bf16.msra.mxu0 0
        %4250 = vmatprep.subr.bf16.mxu0 0
        %4251 = vmatpush1.bf16.msra.mxu0 0
        %4252 = vmatprep.subr.bf16.mxu0 0
        %4253 = vmatpush1.bf16.msra.mxu0 0
        %4254 = vmatprep.subr.bf16.mxu0 0
        %4255 = vmatpush1.bf16.msra.mxu0 0
        %4256 = vmatprep.subr.bf16.mxu0 0
        %4257 = vmatpush1.bf16.msra.mxu0 0
        %4258 = vmatprep.subr.bf16.mxu0 0
        %4259 = vmatpush1.bf16.msra.mxu0 0
        %4260 = vmatprep.subr.bf16.mxu0 0
        %4261 = vmatpush1.bf16.msra.mxu0 0
        %4262 = vmatprep.subr.bf16.mxu0 0
        %4263 = vmatpush1.bf16.msra.mxu0 0
        %4264 = vmatprep.subr.bf16.mxu0 0
        %4265 = vmatpush1.bf16.msra.mxu0 0
        %4266 = vmatprep.subr.bf16.mxu0 0
        %4267 = vmatpush1.bf16.msra.mxu0 0
        %4268 = vmatprep.mubr.bf16.mxu0 0
        %4269 = vmatmul.mubr.bf16.gmra.mrb[0].mxu0 %v4234
        %v4270 = vpop.f32.mrb[0].mxu0
        %v4271 = vadd.f32 %v4227, %v4270
        %v4272 = vpop.f32.mrb[0].mxu0
        %v4273 = vpop.f32.mrb[0].mxu0
        %v4274 = vadd.f32 %v4227, %v4273
        %v4275 = vpop.f32.mrb[0].mxu0
        %4276 = vdwg.mxu0
        %v4277 = vmax.f32 %v4271, 0.0
        %v4278 = vmax.f32 %v4274, 0.0
        %v4279 = vpack.c.bf16 %v4278, %v4277
        %v4280 = vld [vmem:[#allocation17] sm:$0x1]
        %s4281 = sld [smem:[#allocation18 + $0x5]]
        %v4282 = vstv %s4281
        %vm4283 = vcmask 130048
        %v4285 = vsel %vm4283, %v4280, 0
        %4287 = vmatprep.subr.bf16.mxu0 0
        %4288 = vmatpush1.bf16.msra.mxu0 %v4279
        %4289 = vmatprep.subr.bf16.mxu0 0
        %4290 = vmatpush1.bf16.msra.mxu0 0
        %4291 = vmatprep.subr.bf16.mxu0 0
        %4292 = vmatpush1.bf16.msra.mxu0 0
        %4293 = vmatprep.subr.bf16.mxu0 0
        %4294 = vmatpush1.bf16.msra.mxu0 0
        %4295 = vmatprep.subr.bf16.mxu0 0
        %4296 = vmatpush1.bf16.msra.mxu0 0
        %4297 = vmatprep.subr.bf16.mxu0 0
        %4298 = vmatpush1.bf16.msra.mxu0 0
        %4299 = vmatprep.subr.bf16.mxu0 0
        %4300 = vmatpush1.bf16.msra.mxu0 0
        %4301 = vmatprep.subr.bf16.mxu0 0
        %4302 = vmatpush1.bf16.msra.mxu0 0
        %4303 = vmatprep.subr.bf16.mxu0 0
        %4304 = vmatpush1.bf16.msra.mxu0 0
        %4305 = vmatprep.subr.bf16.mxu0 0
        %4306 = vmatpush1.bf16.msra.mxu0 0
        %4307 = vmatprep.subr.bf16.mxu0 0
        %4308 = vmatpush1.bf16.msra.mxu0 0
        %4309 = vmatprep.subr.bf16.mxu0 0
        %4310 = vmatpush1.bf16.msra.mxu0 0
        %4311 = vmatprep.subr.bf16.mxu0 0
        %4312 = vmatpush1.bf16.msra.mxu0 0
        %4313 = vmatprep.subr.bf16.mxu0 0
        %4314 = vmatpush1.bf16.msra.mxu0 0
        %4315 = vmatprep.subr.bf16.mxu0 0
        %4316 = vmatpush1.bf16.msra.mxu0 0
        %4317 = vmatprep.subr.bf16.mxu0 0
        %4318 = vmatpush1.bf16.msra.mxu0 0
        %4319 = vmatprep.mubr.bf16.mxu0 0
        %4320 = vmatmul.mubr.bf16.gmra.mrb[0].mxu0 %v4285
        %v4321 = vpop.f32.mrb[0].mxu0
        %v4322 = vadd.f32 %v4282, %v4321
        %v4323 = vpop.f32.mrb[0].mxu0
        %v4324 = vpop.f32.mrb[0].mxu0
        %v4325 = vpop.f32.mrb[0].mxu0
        %4326 = vdwg.mxu0
        %4327 = vst [vmem:[%s811] sm:$0x1] %v4322
        %s4328 = sand.u32 %s517, 1
        %s4329 = scalar_lea.sflag [#allocation4], %s4328
        %s4330 = sand.u32 %s517, 1
        %s4331 = scalar_lea.vmem [#allocation19], %s4330
        // Predicated region
        $region149: #{tpu_custom_call.1} parent=107 // pred_check
          %p4332 = pneg %p527
        $region150: #{tpu_custom_call.1} parent=107 // pred_check_branch
          %4334 = sbr.rel (%p4332) target = $region152
        $region151: #{tpu_custom_call.1} parent=107 // pred_region
          %s4336 = ssub.s32 16, 16
          %4337 = vsyncadd %s4329, %s4336
          %s4338 = smul.addr %s42, 16
          %s4339 = scalar_lea.hbm %s22, %s4338
          %s4341 = sshll.u32 %s4331, 4
          %s4342 = int_to_ptr.vmem [resolvable:$true] %s4341
          %4344 = dma.vmem_to_hbm [thread:$0]  %s4342, 16, %s4339, %s4329
        $region152: #{tpu_custom_call.1} parent=107 // pred_fallthru
          _
      $region108: #{tpu_custom_call.1} parent=5 // pred_fallthru
        _
      %p4345 = scmp.le.s32.totalorder 2, %s37
      // Predicated region
      $region153: #{tpu_custom_call.1} parent=5 // pred_check
        %p4346 = pneg %p4345
      $region154: #{tpu_custom_call.1} parent=5 // pred_check_branch
        %4348 = sbr.rel (%p4346) target = $region156
      $region155: #{tpu_custom_call.1} parent=5 // pred_region
        %s4349 = ssub.s32 %s37, 2
        // Predicated region
        $region157: #{tpu_custom_call.1} parent=155 // pred_check
          %p4350 = pneg %p533
        $region158: #{tpu_custom_call.1} parent=155 // pred_check_branch
          %4352 = sbr.rel (%p4350) target = $region160
        $region159: #{tpu_custom_call.1} parent=155 // pred_region
          %s4353 = sand.u32 %s518, 1
          %s4354 = scalar_lea.sflag [#allocation4], %s4353
          %s4355 = sand.u32 %s518, 1
          %s4356 = scalar_lea.vmem [#allocation19], %s4355
          %4357 = dma.done %s4354, 16
        $region160: #{tpu_custom_call.1} parent=155 // pred_fallthru
          _
      $region156: #{tpu_custom_call.1} parent=5 // pred_fallthru
        _
    $region6: #{tpu_custom_call.1} parent=1 // loop_footer
      %s41 = sadd.s32 1, %s37
    $region7: #{tpu_custom_call.1} parent=1 // loop_footer_branch
      %36 = sbr.rel target = $region3
    $region8: #{tpu_custom_call.1} parent=1 // loop_exit
      _
    %4358 = vsyncpa [#allocation3], 1
    %s4359 = scalar_lea.sflag [#allocation3], 1
    %4360 = vsyncpa %s4359, 1
    %4361 = vsyncpa [#allocation7], 1
    %4362 = vsyncpa [#allocation10], 1
    %4363 = vsyncpa [#allocation13], 1
    %4364 = vsyncpa [#allocation16], 1
    %4365 = vsyncpa [#allocation4], 1
    %s4366 = scalar_lea.sflag [#allocation4], 1
    %4367 = vsyncpa %s4366, 1
    %4368 = vsyncpa [#allocation5], 1
    %s4369 = scalar_lea.sflag [#allocation5], 1
    %4370 = vsyncpa %s4369, 1

</llo_original>
